<compile_context>
chip_gen: v5e
topology: v5e:2x2
jax: 0.10.0
libtpu: 0.0.40
codegen_flags: <defaults>
</compile_context>

<pallas_src>
import jax
import jax.numpy as jnp
import numpy as np
from jax.experimental import pallas as pl
from jax.experimental.pallas import tpu as pltpu


# ------------------------------ config ---------------------------------------
class Config:
    n_layers = 2
    projection_dim = 32          # LSTM input_size == hidden_size


# ------------------------------ Pallas kernel --------------------------------
def bilstm_kernel(x_ref, wih_ref, whh_ref, b_ref, out_ref):
    """Runs every LSTM layer of the direction block assigned to this grid step.

    x_ref   : [D, B, S*P]     lane-dense input sequence(s)
    wih_ref : [D, L, P, 4H]   input->hidden weights (PyTorch W_ih, transposed)
    whh_ref : [D, L, H, 4H]   hidden->hidden weights (PyTorch W_hh, transposed)
    b_ref   : [D, L, 1, 4H]   b_ih + b_hh (f32)
    out_ref : [D, L, B, S*H]  lane-dense per-layer hidden states

    D == 2 on single-TC chips (both chains interleaved here); D == 1 on v7x
    (one direction per TensorCore via the 2-wide parallel grid).
    """
    D, B, SP = x_ref.shape
    L, P = wih_ref.shape[1], wih_ref.shape[2]
    H = whh_ref.shape[2]
    S = SP // P
    mm_dtype = wih_ref.dtype   # bf16 or f32 MXU operands; accumulation is f32

    # Per-direction, per-timestep [B, P] inputs of the current layer.
    caches = [[x_ref[d, :, t * P:(t + 1) * P].astype(jnp.float32)
               for t in range(S)] for d in range(D)]

    for l in range(L):                                       # static (L = 2)
        wih = [wih_ref[d, l] for d in range(D)]              # [P, 4H]
        whh = [whh_ref[d, l] for d in range(D)]              # [H, 4H]
        b = [b_ref[d, l].astype(jnp.float32) for d in range(D)]   # [1, 4H]

        # Input->hidden projections for every timestep.  These do not depend
        # on the recurrence, so the scheduler hoists them off the serial
        # critical path (everything here is one fully-unrolled basic block).
        xg = [[jnp.dot(caches[d][t].astype(mm_dtype), wih[d],
                       preferred_element_type=jnp.float32) + b[d]
               for t in range(S)] for d in range(D)]

        h = [jnp.zeros((B, H), jnp.float32) for _ in range(D)]
        c = [jnp.zeros((B, H), jnp.float32) for _ in range(D)]
        new_caches = [[None] * S for _ in range(D)]
        for t in range(S):                                   # static (S = 8)
            for d in range(D):      # interleave fwd / bwd recurrence chains
                gates = xg[d][t] + jnp.dot(
                    h[d].astype(mm_dtype), whh[d],
                    preferred_element_type=jnp.float32)      # [B, 4H]
                sg = jax.nn.sigmoid(gates)     # 1 full-128-lane EUP push
                tg = jnp.tanh(gates)           # 1 full-128-lane EUP push
                i_g = sg[:, 0 * H:1 * H]
                f_g = sg[:, 1 * H:2 * H]
                g_g = tg[:, 2 * H:3 * H]
                o_g = sg[:, 3 * H:4 * H]
                c[d] = f_g * c[d] + i_g * g_g
                h[d] = o_g * jnp.tanh(c[d])    # 3rd EUP push
                # Residual from layer 1 on, fused into the output write.
                out_t = h[d] if l == 0 else h[d] + caches[d][t]
                # Lane-dense accumulation straight into the VMEM output block.
                out_ref[d, l, :, t * H:(t + 1) * H] = out_t.astype(out_ref.dtype)
                new_caches[d][t] = out_t
        caches = new_caches


# ------------------------------ wrapper --------------------------------------
def _tensorcores_per_device():
    """Best effort: 2 TensorCores visible to one Pallas program on v7x, else 1."""
    try:
        kind = jax.devices()[0].device_kind.lower()
    except Exception:
        return 1
    if "v7" in kind or "7x" in kind:
        return 2
    return 1


def elmo_bilstm_pallas(x, params, cfg, matmul_dtype=jnp.bfloat16):
    """x: [B, S, P] float32 -> list of (n_layers + 1) arrays of [B, S, 2P]."""
    B, S, P = x.shape
    H, L = cfg.projection_dim, cfg.n_layers
    assert H == P, "ELMoBiLSTM uses input_size == hidden_size == projection_dim"

    x = x.astype(jnp.float32)
    x_rev = jnp.flip(x, axis=1)                            # torch: x.flip(1)
    xs = jnp.stack([x, x_rev], axis=0).reshape(2, B, S * P)   # lane-dense input

    # Consolidate all per-direction / per-layer parameters into 3 arrays
    # (one DMA each); weights pre-cast to the MXU operand dtype.
    wih, whh, bias = [], [], []
    for direction in ("forward", "backward"):
        for (w_ih, w_hh, b_ih, b_hh) in params[direction]:
            wih.append(jnp.asarray(w_ih).T.astype(matmul_dtype))     # [P, 4H]
            whh.append(jnp.asarray(w_hh).T.astype(matmul_dtype))     # [H, 4H]
            bias.append((jnp.asarray(b_ih) + jnp.asarray(b_hh))
                        .astype(jnp.float32).reshape(1, -1))         # [1, 4H]
    wih_all = jnp.stack(wih, axis=0).reshape(2, L, P, 4 * H)
    whh_all = jnp.stack(whh, axis=0).reshape(2, L, H, 4 * H)
    b_all = jnp.stack(bias, axis=0).reshape(2, L, 1, 4 * H)

    # v7x: one direction per TensorCore (grid=(2,), "parallel").
    # v5e/v6e (single TC): both directions in one grid step, interleaved
    # inside the kernel -> no extra grid-step overhead, latency hiding.
    n_steps = _tensorcores_per_device()
    d_blk = 2 // n_steps

    out = pl.pallas_call(
        bilstm_kernel,
        out_shape=jax.ShapeDtypeStruct((2, L, B, S * H), jnp.float32),
        grid=(n_steps,),
        in_specs=[
            pl.BlockSpec((d_blk, B, S * P), lambda d: (d, 0, 0)),
            pl.BlockSpec((d_blk, L, P, 4 * H), lambda d: (d, 0, 0, 0)),
            pl.BlockSpec((d_blk, L, H, 4 * H), lambda d: (d, 0, 0, 0)),
            pl.BlockSpec((d_blk, L, 1, 4 * H), lambda d: (d, 0, 0, 0)),
        ],
        out_specs=pl.BlockSpec((d_blk, L, B, S * H), lambda d: (d, 0, 0, 0)),
        compiler_params=pltpu.CompilerParams(
            dimension_semantics=("parallel",)),
    )(xs, wih_all, whh_all, b_all)

    out = out.reshape(2, L, B, S, H)                  # wrapper-side reshape
    outputs = [jnp.concatenate([x, x_rev], axis=-1)]  # torch.cat glue
    for l in range(L):
        outputs.append(jnp.concatenate([out[0, l], out[1, l]], axis=-1))
    return outputs


# ------------------------------ pure-JAX reference ----------------------------
def lstm_ref(x, w_ih, w_hh, b_ih, b_hh):
    B, S, P = x.shape
    H = w_hh.shape[1]
    h = jnp.zeros((B, H), jnp.float32)
    c = jnp.zeros((B, H), jnp.float32)
    outs = []
    for t in range(S):
        g = x[:, t] @ w_ih.T + b_ih + h @ w_hh.T + b_hh
        i = jax.nn.sigmoid(g[:, :H])
        f = jax.nn.sigmoid(g[:, H:2 * H])
        gg = jnp.tanh(g[:, 2 * H:3 * H])
        o = jax.nn.sigmoid(g[:, 3 * H:])
        c = f * c + i * gg
        h = o * jnp.tanh(c)
        outs.append(h)
    return jnp.stack(outs, axis=1)


def elmo_bilstm_ref(x, params, cfg):
    fwd, bwd = x, jnp.flip(x, axis=1)
    outputs = [jnp.concatenate([fwd, bwd], axis=-1)]
    for l in range(cfg.n_layers):
        f = lstm_ref(fwd, *params["forward"][l])
        b = lstm_ref(bwd, *params["backward"][l])
        if l != 0:
            f = f + fwd
            b = b + bwd
        outputs.append(jnp.concatenate([f, b], axis=-1))
        fwd, bwd = f, b
    return outputs


# ------------------------------ params / main ---------------------------------
def init_params(cfg, key):
    L, H = cfg.n_layers, cfg.projection_dim
    keys = jax.random.split(key, 2 * L * 4)
    ki = iter(keys)
    params = {"forward": [], "backward": []}
    for direction in ("forward", "backward"):
        for _ in range(L):
            w_ih = 0.1 * jax.random.normal(next(ki), (4 * H, H), jnp.float32)
            w_hh = 0.1 * jax.random.normal(next(ki), (4 * H, H), jnp.float32)
            b_ih = 0.1 * jax.random.normal(next(ki), (4 * H,), jnp.float32)
            b_hh = 0.1 * jax.random.normal(next(ki), (4 * H,), jnp.float32)
            params[direction].append((w_ih, w_hh, b_ih, b_hh))
    return params


if __name__ == "__main__":
    cfg = Config()
    B, S, P = 2, 8, cfg.projection_dim     # S*P = S*H = 256 (lane-dense)

    key = jax.random.PRNGKey(0)
    k_x, k_p = jax.random.split(key)
    x = jax.random.normal(k_x, (B, S, P), jnp.float32)
    params = init_params(cfg, k_p)

    refs = elmo_bilstm_ref(x, params, cfg)

    # f32 MXU operands: must match the pure-JAX reference tightly.
    outs = jax.block_until_ready(
        elmo_bilstm_pallas(x, params, cfg, matmul_dtype=jnp.float32))
    assert len(outs) == cfg.n_layers + 1
    for o, r in zip(outs, refs):
        assert o.shape == (B, S, 2 * cfg.projection_dim)
        np.testing.assert_allclose(np.asarray(o), np.asarray(r),
                                   rtol=1e-4, atol=1e-4)

    # bf16 MXU operands (v6e/v7x fast path, f32 accumulation): tolerance
    # reflects bf16 operand rounding (~2^-8 relative) compounded over the
    # S=8 recurrence and 2 layers, per the perf review's correctness note.
    outs_bf16 = jax.block_until_ready(
        elmo_bilstm_pallas(x, params, cfg, matmul_dtype=jnp.bfloat16))
    for o, r in zip(outs_bf16, refs):
        np.testing.assert_allclose(np.asarray(o), np.asarray(r),
                                   rtol=5e-2, atol=5e-2)

    print("KERNEL_OK")
</pallas_src>

<mosaic_0001>
module attributes {stable_mosaic.version = 11 : i64} {
  func.func @bilstm_kernel(%arg0: i32, %arg1: memref<2x2x256xf32, #tpu.memory_space<vmem>>, %arg2: memref<2x2x32x128xf32, #tpu.memory_space<vmem>>, %arg3: memref<2x2x32x128xf32, #tpu.memory_space<vmem>>, %arg4: memref<2x2x1x128xf32, #tpu.memory_space<vmem>>, %arg5: memref<2x2x2x256xf32, #tpu.memory_space<vmem>>) attributes {dimension_semantics = [#tpu.dimension_semantics<parallel>], iteration_bounds = array<i64: 1>, scalar_prefetch = 0 : i64, scratch_operands = 0 : i64, tpu.core_type = #tpu.core_type<tc>, window_params = [{transform_indices = @transform_0, window_bounds = array<i64: 2, 2, 256>}, {transform_indices = @transform_1, window_bounds = array<i64: 2, 2, 32, 128>}, {transform_indices = @transform_2, window_bounds = array<i64: 2, 2, 32, 128>}, {transform_indices = @transform_3, window_bounds = array<i64: 2, 2, 1, 128>}, {transform_indices = @transform_4, window_bounds = array<i64: 2, 2, 2, 256>}]} {
    %c0 = arith.constant 0 : index
    %c0_0 = arith.constant 0 : index
    %c0_1 = arith.constant 0 : index
    %0 = vector.load %arg1[%c0, %c0_0, %c0_1] : memref<2x2x256xf32, #tpu.memory_space<vmem>>, vector<1x2x32xf32>
    %1 = vector.shape_cast %0 : vector<1x2x32xf32> to vector<2x32xf32>
    %c0_2 = arith.constant 0 : index
    %c0_3 = arith.constant 0 : index
    %c32 = arith.constant 32 : index
    %2 = vector.load %arg1[%c0_2, %c0_3, %c32] : memref<2x2x256xf32, #tpu.memory_space<vmem>>, vector<1x2x32xf32>
    %3 = vector.shape_cast %2 : vector<1x2x32xf32> to vector<2x32xf32>
    %c0_4 = arith.constant 0 : index
    %c0_5 = arith.constant 0 : index
    %c64 = arith.constant 64 : index
    %4 = vector.load %arg1[%c0_4, %c0_5, %c64] : memref<2x2x256xf32, #tpu.memory_space<vmem>>, vector<1x2x32xf32>
    %5 = vector.shape_cast %4 : vector<1x2x32xf32> to vector<2x32xf32>
    %c0_6 = arith.constant 0 : index
    %c0_7 = arith.constant 0 : index
    %c96 = arith.constant 96 : index
    %6 = vector.load %arg1[%c0_6, %c0_7, %c96] : memref<2x2x256xf32, #tpu.memory_space<vmem>>, vector<1x2x32xf32>
    %7 = vector.shape_cast %6 : vector<1x2x32xf32> to vector<2x32xf32>
    %c0_8 = arith.constant 0 : index
    %c0_9 = arith.constant 0 : index
    %c128 = arith.constant 128 : index
    %8 = vector.load %arg1[%c0_8, %c0_9, %c128] : memref<2x2x256xf32, #tpu.memory_space<vmem>>, vector<1x2x32xf32>
    %9 = vector.shape_cast %8 : vector<1x2x32xf32> to vector<2x32xf32>
    %c0_10 = arith.constant 0 : index
    %c0_11 = arith.constant 0 : index
    %c160 = arith.constant 160 : index
    %10 = vector.load %arg1[%c0_10, %c0_11, %c160] : memref<2x2x256xf32, #tpu.memory_space<vmem>>, vector<1x2x32xf32>
    %11 = vector.shape_cast %10 : vector<1x2x32xf32> to vector<2x32xf32>
    %c0_12 = arith.constant 0 : index
    %c0_13 = arith.constant 0 : index
    %c192 = arith.constant 192 : index
    %12 = vector.load %arg1[%c0_12, %c0_13, %c192] : memref<2x2x256xf32, #tpu.memory_space<vmem>>, vector<1x2x32xf32>
    %13 = vector.shape_cast %12 : vector<1x2x32xf32> to vector<2x32xf32>
    %c0_14 = arith.constant 0 : index
    %c0_15 = arith.constant 0 : index
    %c224 = arith.constant 224 : index
    %14 = vector.load %arg1[%c0_14, %c0_15, %c224] : memref<2x2x256xf32, #tpu.memory_space<vmem>>, vector<1x2x32xf32>
    %15 = vector.shape_cast %14 : vector<1x2x32xf32> to vector<2x32xf32>
    %c1 = arith.constant 1 : index
    %c0_16 = arith.constant 0 : index
    %c0_17 = arith.constant 0 : index
    %16 = vector.load %arg1[%c1, %c0_16, %c0_17] : memref<2x2x256xf32, #tpu.memory_space<vmem>>, vector<1x2x32xf32>
    %17 = vector.shape_cast %16 : vector<1x2x32xf32> to vector<2x32xf32>
    %c1_18 = arith.constant 1 : index
    %c0_19 = arith.constant 0 : index
    %c32_20 = arith.constant 32 : index
    %18 = vector.load %arg1[%c1_18, %c0_19, %c32_20] : memref<2x2x256xf32, #tpu.memory_space<vmem>>, vector<1x2x32xf32>
    %19 = vector.shape_cast %18 : vector<1x2x32xf32> to vector<2x32xf32>
    %c1_21 = arith.constant 1 : index
    %c0_22 = arith.constant 0 : index
    %c64_23 = arith.constant 64 : index
    %20 = vector.load %arg1[%c1_21, %c0_22, %c64_23] : memref<2x2x256xf32, #tpu.memory_space<vmem>>, vector<1x2x32xf32>
    %21 = vector.shape_cast %20 : vector<1x2x32xf32> to vector<2x32xf32>
    %c1_24 = arith.constant 1 : index
    %c0_25 = arith.constant 0 : index
    %c96_26 = arith.constant 96 : index
    %22 = vector.load %arg1[%c1_24, %c0_25, %c96_26] : memref<2x2x256xf32, #tpu.memory_space<vmem>>, vector<1x2x32xf32>
    %23 = vector.shape_cast %22 : vector<1x2x32xf32> to vector<2x32xf32>
    %c1_27 = arith.constant 1 : index
    %c0_28 = arith.constant 0 : index
    %c128_29 = arith.constant 128 : index
    %24 = vector.load %arg1[%c1_27, %c0_28, %c128_29] : memref<2x2x256xf32, #tpu.memory_space<vmem>>, vector<1x2x32xf32>
    %25 = vector.shape_cast %24 : vector<1x2x32xf32> to vector<2x32xf32>
    %c1_30 = arith.constant 1 : index
    %c0_31 = arith.constant 0 : index
    %c160_32 = arith.constant 160 : index
    %26 = vector.load %arg1[%c1_30, %c0_31, %c160_32] : memref<2x2x256xf32, #tpu.memory_space<vmem>>, vector<1x2x32xf32>
    %27 = vector.shape_cast %26 : vector<1x2x32xf32> to vector<2x32xf32>
    %c1_33 = arith.constant 1 : index
    %c0_34 = arith.constant 0 : index
    %c192_35 = arith.constant 192 : index
    %28 = vector.load %arg1[%c1_33, %c0_34, %c192_35] : memref<2x2x256xf32, #tpu.memory_space<vmem>>, vector<1x2x32xf32>
    %29 = vector.shape_cast %28 : vector<1x2x32xf32> to vector<2x32xf32>
    %c1_36 = arith.constant 1 : index
    %c0_37 = arith.constant 0 : index
    %c224_38 = arith.constant 224 : index
    %30 = vector.load %arg1[%c1_36, %c0_37, %c224_38] : memref<2x2x256xf32, #tpu.memory_space<vmem>>, vector<1x2x32xf32>
    %31 = vector.shape_cast %30 : vector<1x2x32xf32> to vector<2x32xf32>
    %c0_39 = arith.constant 0 : index
    %c0_40 = arith.constant 0 : index
    %c0_41 = arith.constant 0 : index
    %c0_42 = arith.constant 0 : index
    %32 = vector.load %arg2[%c0_39, %c0_40, %c0_41, %c0_42] : memref<2x2x32x128xf32, #tpu.memory_space<vmem>>, vector<1x1x32x128xf32>
    %33 = vector.shape_cast %32 : vector<1x1x32x128xf32> to vector<32x128xf32>
    %c1_43 = arith.constant 1 : index
    %c0_44 = arith.constant 0 : index
    %c0_45 = arith.constant 0 : index
    %c0_46 = arith.constant 0 : index
    %34 = vector.load %arg2[%c1_43, %c0_44, %c0_45, %c0_46] : memref<2x2x32x128xf32, #tpu.memory_space<vmem>>, vector<1x1x32x128xf32>
    %35 = vector.shape_cast %34 : vector<1x1x32x128xf32> to vector<32x128xf32>
    %c0_47 = arith.constant 0 : index
    %c0_48 = arith.constant 0 : index
    %c0_49 = arith.constant 0 : index
    %c0_50 = arith.constant 0 : index
    %36 = vector.load %arg3[%c0_47, %c0_48, %c0_49, %c0_50] : memref<2x2x32x128xf32, #tpu.memory_space<vmem>>, vector<1x1x32x128xf32>
    %37 = vector.shape_cast %36 : vector<1x1x32x128xf32> to vector<32x128xf32>
    %c1_51 = arith.constant 1 : index
    %c0_52 = arith.constant 0 : index
    %c0_53 = arith.constant 0 : index
    %c0_54 = arith.constant 0 : index
    %38 = vector.load %arg3[%c1_51, %c0_52, %c0_53, %c0_54] : memref<2x2x32x128xf32, #tpu.memory_space<vmem>>, vector<1x1x32x128xf32>
    %39 = vector.shape_cast %38 : vector<1x1x32x128xf32> to vector<32x128xf32>
    %c0_55 = arith.constant 0 : index
    %c0_56 = arith.constant 0 : index
    %c0_57 = arith.constant 0 : index
    %c0_58 = arith.constant 0 : index
    %40 = vector.load %arg4[%c0_55, %c0_56, %c0_57, %c0_58] : memref<2x2x1x128xf32, #tpu.memory_space<vmem>>, vector<1x1x1x128xf32>
    %41 = vector.shape_cast %40 : vector<1x1x1x128xf32> to vector<1x128xf32>
    %c1_59 = arith.constant 1 : index
    %c0_60 = arith.constant 0 : index
    %c0_61 = arith.constant 0 : index
    %c0_62 = arith.constant 0 : index
    %42 = vector.load %arg4[%c1_59, %c0_60, %c0_61, %c0_62] : memref<2x2x1x128xf32, #tpu.memory_space<vmem>>, vector<1x1x1x128xf32>
    %43 = vector.shape_cast %42 : vector<1x1x1x128xf32> to vector<1x128xf32>
    %cst = arith.constant dense<0.000000e+00> : vector<2x128xf32>
    %44 = tpu.matmul %1, %33, %cst {dimension_numbers = #tpu.dot_dimension_numbers<[1], [0], [0], [1], [0, 0, 1, 1], [], []>} : vector<2x32xf32>, vector<32x128xf32>, vector<2x128xf32> -> vector<2x128xf32>
    %45 = vector.broadcast %41 : vector<1x128xf32> to vector<2x128xf32>
    %46 = arith.addf %44, %45 : vector<2x128xf32>
    %cst_63 = arith.constant dense<0.000000e+00> : vector<2x128xf32>
    %47 = tpu.matmul %3, %33, %cst_63 {dimension_numbers = #tpu.dot_dimension_numbers<[1], [0], [0], [1], [0, 0, 1, 1], [], []>} : vector<2x32xf32>, vector<32x128xf32>, vector<2x128xf32> -> vector<2x128xf32>
    %48 = vector.broadcast %41 : vector<1x128xf32> to vector<2x128xf32>
    %49 = arith.addf %47, %48 : vector<2x128xf32>
    %cst_64 = arith.constant dense<0.000000e+00> : vector<2x128xf32>
    %50 = tpu.matmul %5, %33, %cst_64 {dimension_numbers = #tpu.dot_dimension_numbers<[1], [0], [0], [1], [0, 0, 1, 1], [], []>} : vector<2x32xf32>, vector<32x128xf32>, vector<2x128xf32> -> vector<2x128xf32>
    %51 = vector.broadcast %41 : vector<1x128xf32> to vector<2x128xf32>
    %52 = arith.addf %50, %51 : vector<2x128xf32>
    %cst_65 = arith.constant dense<0.000000e+00> : vector<2x128xf32>
    %53 = tpu.matmul %7, %33, %cst_65 {dimension_numbers = #tpu.dot_dimension_numbers<[1], [0], [0], [1], [0, 0, 1, 1], [], []>} : vector<2x32xf32>, vector<32x128xf32>, vector<2x128xf32> -> vector<2x128xf32>
    %54 = vector.broadcast %41 : vector<1x128xf32> to vector<2x128xf32>
    %55 = arith.addf %53, %54 : vector<2x128xf32>
    %cst_66 = arith.constant dense<0.000000e+00> : vector<2x128xf32>
    %56 = tpu.matmul %9, %33, %cst_66 {dimension_numbers = #tpu.dot_dimension_numbers<[1], [0], [0], [1], [0, 0, 1, 1], [], []>} : vector<2x32xf32>, vector<32x128xf32>, vector<2x128xf32> -> vector<2x128xf32>
    %57 = vector.broadcast %41 : vector<1x128xf32> to vector<2x128xf32>
    %58 = arith.addf %56, %57 : vector<2x128xf32>
    %cst_67 = arith.constant dense<0.000000e+00> : vector<2x128xf32>
    %59 = tpu.matmul %11, %33, %cst_67 {dimension_numbers = #tpu.dot_dimension_numbers<[1], [0], [0], [1], [0, 0, 1, 1], [], []>} : vector<2x32xf32>, vector<32x128xf32>, vector<2x128xf32> -> vector<2x128xf32>
    %60 = vector.broadcast %41 : vector<1x128xf32> to vector<2x128xf32>
    %61 = arith.addf %59, %60 : vector<2x128xf32>
    %cst_68 = arith.constant dense<0.000000e+00> : vector<2x128xf32>
    %62 = tpu.matmul %13, %33, %cst_68 {dimension_numbers = #tpu.dot_dimension_numbers<[1], [0], [0], [1], [0, 0, 1, 1], [], []>} : vector<2x32xf32>, vector<32x128xf32>, vector<2x128xf32> -> vector<2x128xf32>
    %63 = vector.broadcast %41 : vector<1x128xf32> to vector<2x128xf32>
    %64 = arith.addf %62, %63 : vector<2x128xf32>
    %cst_69 = arith.constant dense<0.000000e+00> : vector<2x128xf32>
    %65 = tpu.matmul %15, %33, %cst_69 {dimension_numbers = #tpu.dot_dimension_numbers<[1], [0], [0], [1], [0, 0, 1, 1], [], []>} : vector<2x32xf32>, vector<32x128xf32>, vector<2x128xf32> -> vector<2x128xf32>
    %66 = vector.broadcast %41 : vector<1x128xf32> to vector<2x128xf32>
    %67 = arith.addf %65, %66 : vector<2x128xf32>
    %cst_70 = arith.constant dense<0.000000e+00> : vector<2x128xf32>
    %68 = tpu.matmul %17, %35, %cst_70 {dimension_numbers = #tpu.dot_dimension_numbers<[1], [0], [0], [1], [0, 0, 1, 1], [], []>} : vector<2x32xf32>, vector<32x128xf32>, vector<2x128xf32> -> vector<2x128xf32>
    %69 = vector.broadcast %43 : vector<1x128xf32> to vector<2x128xf32>
    %70 = arith.addf %68, %69 : vector<2x128xf32>
    %cst_71 = arith.constant dense<0.000000e+00> : vector<2x128xf32>
    %71 = tpu.matmul %19, %35, %cst_71 {dimension_numbers = #tpu.dot_dimension_numbers<[1], [0], [0], [1], [0, 0, 1, 1], [], []>} : vector<2x32xf32>, vector<32x128xf32>, vector<2x128xf32> -> vector<2x128xf32>
    %72 = vector.broadcast %43 : vector<1x128xf32> to vector<2x128xf32>
    %73 = arith.addf %71, %72 : vector<2x128xf32>
    %cst_72 = arith.constant dense<0.000000e+00> : vector<2x128xf32>
    %74 = tpu.matmul %21, %35, %cst_72 {dimension_numbers = #tpu.dot_dimension_numbers<[1], [0], [0], [1], [0, 0, 1, 1], [], []>} : vector<2x32xf32>, vector<32x128xf32>, vector<2x128xf32> -> vector<2x128xf32>
    %75 = vector.broadcast %43 : vector<1x128xf32> to vector<2x128xf32>
    %76 = arith.addf %74, %75 : vector<2x128xf32>
    %cst_73 = arith.constant dense<0.000000e+00> : vector<2x128xf32>
    %77 = tpu.matmul %23, %35, %cst_73 {dimension_numbers = #tpu.dot_dimension_numbers<[1], [0], [0], [1], [0, 0, 1, 1], [], []>} : vector<2x32xf32>, vector<32x128xf32>, vector<2x128xf32> -> vector<2x128xf32>
    %78 = vector.broadcast %43 : vector<1x128xf32> to vector<2x128xf32>
    %79 = arith.addf %77, %78 : vector<2x128xf32>
    %cst_74 = arith.constant dense<0.000000e+00> : vector<2x128xf32>
    %80 = tpu.matmul %25, %35, %cst_74 {dimension_numbers = #tpu.dot_dimension_numbers<[1], [0], [0], [1], [0, 0, 1, 1], [], []>} : vector<2x32xf32>, vector<32x128xf32>, vector<2x128xf32> -> vector<2x128xf32>
    %81 = vector.broadcast %43 : vector<1x128xf32> to vector<2x128xf32>
    %82 = arith.addf %80, %81 : vector<2x128xf32>
    %cst_75 = arith.constant dense<0.000000e+00> : vector<2x128xf32>
    %83 = tpu.matmul %27, %35, %cst_75 {dimension_numbers = #tpu.dot_dimension_numbers<[1], [0], [0], [1], [0, 0, 1, 1], [], []>} : vector<2x32xf32>, vector<32x128xf32>, vector<2x128xf32> -> vector<2x128xf32>
    %84 = vector.broadcast %43 : vector<1x128xf32> to vector<2x128xf32>
    %85 = arith.addf %83, %84 : vector<2x128xf32>
    %cst_76 = arith.constant dense<0.000000e+00> : vector<2x128xf32>
    %86 = tpu.matmul %29, %35, %cst_76 {dimension_numbers = #tpu.dot_dimension_numbers<[1], [0], [0], [1], [0, 0, 1, 1], [], []>} : vector<2x32xf32>, vector<32x128xf32>, vector<2x128xf32> -> vector<2x128xf32>
    %87 = vector.broadcast %43 : vector<1x128xf32> to vector<2x128xf32>
    %88 = arith.addf %86, %87 : vector<2x128xf32>
    %cst_77 = arith.constant dense<0.000000e+00> : vector<2x128xf32>
    %89 = tpu.matmul %31, %35, %cst_77 {dimension_numbers = #tpu.dot_dimension_numbers<[1], [0], [0], [1], [0, 0, 1, 1], [], []>} : vector<2x32xf32>, vector<32x128xf32>, vector<2x128xf32> -> vector<2x128xf32>
    %90 = vector.broadcast %43 : vector<1x128xf32> to vector<2x128xf32>
    %91 = arith.addf %89, %90 : vector<2x128xf32>
    %cst_78 = arith.constant 0.000000e+00 : f32
    %92 = vector.broadcast %cst_78 : f32 to vector<2x32xf32>
    %cst_79 = arith.constant 0.000000e+00 : f32
    %93 = vector.broadcast %cst_79 : f32 to vector<2x32xf32>
    %cst_80 = arith.constant 0.000000e+00 : f32
    %94 = vector.broadcast %cst_80 : f32 to vector<2x32xf32>
    %cst_81 = arith.constant 0.000000e+00 : f32
    %95 = vector.broadcast %cst_81 : f32 to vector<2x32xf32>
    %cst_82 = arith.constant dense<0.000000e+00> : vector<2x128xf32>
    %96 = tpu.matmul %92, %37, %cst_82 {dimension_numbers = #tpu.dot_dimension_numbers<[1], [0], [0], [1], [0, 0, 1, 1], [], []>} : vector<2x32xf32>, vector<32x128xf32>, vector<2x128xf32> -> vector<2x128xf32>
    %97 = arith.addf %46, %96 : vector<2x128xf32>
    %98 = arith.negf %97 : vector<2x128xf32>
    %99 = math.exp %98 : vector<2x128xf32>
    %cst_83 = arith.constant 1.000000e+00 : f32
    %100 = vector.broadcast %cst_83 : f32 to vector<2x128xf32>
    %101 = arith.addf %100, %99 : vector<2x128xf32>
    %102 = arith.divf %100, %101 : vector<2x128xf32>
    %103 = math.tanh %97 : vector<2x128xf32>
    %104 = vector.extract_strided_slice %102 {offsets = [0, 0], sizes = [2, 32], strides = [1, 1]} : vector<2x128xf32> to vector<2x32xf32>
    %105 = vector.extract_strided_slice %102 {offsets = [0, 32], sizes = [2, 32], strides = [1, 1]} : vector<2x128xf32> to vector<2x32xf32>
    %106 = vector.extract_strided_slice %103 {offsets = [0, 64], sizes = [2, 32], strides = [1, 1]} : vector<2x128xf32> to vector<2x32xf32>
    %107 = vector.extract_strided_slice %102 {offsets = [0, 96], sizes = [2, 32], strides = [1, 1]} : vector<2x128xf32> to vector<2x32xf32>
    %108 = arith.mulf %105, %94 : vector<2x32xf32>
    %109 = arith.mulf %104, %106 : vector<2x32xf32>
    %110 = arith.addf %108, %109 : vector<2x32xf32>
    %111 = math.tanh %110 : vector<2x32xf32>
    %112 = arith.mulf %107, %111 : vector<2x32xf32>
    %c0_84 = arith.constant 0 : index
    %c0_85 = arith.constant 0 : index
    %c0_86 = arith.constant 0 : index
    %c0_87 = arith.constant 0 : index
    %113 = vector.load %arg5[%c0_84, %c0_85, %c0_86, %c0_87] : memref<2x2x2x256xf32, #tpu.memory_space<vmem>>, vector<1x1x2x32xf32>
    %114 = vector.shape_cast %113 : vector<1x1x2x32xf32> to vector<2x32xf32>
    %115 = vector.shape_cast %112 : vector<2x32xf32> to vector<1x1x2x32xf32>
    tpu.vector_store %arg5[%c0_84, %c0_85, %c0_86, %c0_87], %115 {strides = array<i32>} : memref<2x2x2x256xf32, #tpu.memory_space<vmem>>, vector<1x1x2x32xf32>,
    %cst_88 = arith.constant dense<0.000000e+00> : vector<2x128xf32>
    %116 = tpu.matmul %93, %39, %cst_88 {dimension_numbers = #tpu.dot_dimension_numbers<[1], [0], [0], [1], [0, 0, 1, 1], [], []>} : vector<2x32xf32>, vector<32x128xf32>, vector<2x128xf32> -> vector<2x128xf32>
    %117 = arith.addf %70, %116 : vector<2x128xf32>
    %118 = arith.negf %117 : vector<2x128xf32>
    %119 = math.exp %118 : vector<2x128xf32>
    %cst_89 = arith.constant 1.000000e+00 : f32
    %120 = vector.broadcast %cst_89 : f32 to vector<2x128xf32>
    %121 = arith.addf %120, %119 : vector<2x128xf32>
    %122 = arith.divf %120, %121 : vector<2x128xf32>
    %123 = math.tanh %117 : vector<2x128xf32>
    %124 = vector.extract_strided_slice %122 {offsets = [0, 0], sizes = [2, 32], strides = [1, 1]} : vector<2x128xf32> to vector<2x32xf32>
    %125 = vector.extract_strided_slice %122 {offsets = [0, 32], sizes = [2, 32], strides = [1, 1]} : vector<2x128xf32> to vector<2x32xf32>
    %126 = vector.extract_strided_slice %123 {offsets = [0, 64], sizes = [2, 32], strides = [1, 1]} : vector<2x128xf32> to vector<2x32xf32>
    %127 = vector.extract_strided_slice %122 {offsets = [0, 96], sizes = [2, 32], strides = [1, 1]} : vector<2x128xf32> to vector<2x32xf32>
    %128 = arith.mulf %125, %95 : vector<2x32xf32>
    %129 = arith.mulf %124, %126 : vector<2x32xf32>
    %130 = arith.addf %128, %129 : vector<2x32xf32>
    %131 = math.tanh %130 : vector<2x32xf32>
    %132 = arith.mulf %127, %131 : vector<2x32xf32>
    %c1_90 = arith.constant 1 : index
    %c0_91 = arith.constant 0 : index
    %c0_92 = arith.constant 0 : index
    %c0_93 = arith.constant 0 : index
    %133 = vector.load %arg5[%c1_90, %c0_91, %c0_92, %c0_93] : memref<2x2x2x256xf32, #tpu.memory_space<vmem>>, vector<1x1x2x32xf32>
    %134 = vector.shape_cast %133 : vector<1x1x2x32xf32> to vector<2x32xf32>
    %135 = vector.shape_cast %132 : vector<2x32xf32> to vector<1x1x2x32xf32>
    tpu.vector_store %arg5[%c1_90, %c0_91, %c0_92, %c0_93], %135 {strides = array<i32>} : memref<2x2x2x256xf32, #tpu.memory_space<vmem>>, vector<1x1x2x32xf32>,
    %cst_94 = arith.constant dense<0.000000e+00> : vector<2x128xf32>
    %136 = tpu.matmul %112, %37, %cst_94 {dimension_numbers = #tpu.dot_dimension_numbers<[1], [0], [0], [1], [0, 0, 1, 1], [], []>} : vector<2x32xf32>, vector<32x128xf32>, vector<2x128xf32> -> vector<2x128xf32>
    %137 = arith.addf %49, %136 : vector<2x128xf32>
    %138 = arith.negf %137 : vector<2x128xf32>
    %139 = math.exp %138 : vector<2x128xf32>
    %cst_95 = arith.constant 1.000000e+00 : f32
    %140 = vector.broadcast %cst_95 : f32 to vector<2x128xf32>
    %141 = arith.addf %140, %139 : vector<2x128xf32>
    %142 = arith.divf %140, %141 : vector<2x128xf32>
    %143 = math.tanh %137 : vector<2x128xf32>
    %144 = vector.extract_strided_slice %142 {offsets = [0, 0], sizes = [2, 32], strides = [1, 1]} : vector<2x128xf32> to vector<2x32xf32>
    %145 = vector.extract_strided_slice %142 {offsets = [0, 32], sizes = [2, 32], strides = [1, 1]} : vector<2x128xf32> to vector<2x32xf32>
    %146 = vector.extract_strided_slice %143 {offsets = [0, 64], sizes = [2, 32], strides = [1, 1]} : vector<2x128xf32> to vector<2x32xf32>
    %147 = vector.extract_strided_slice %142 {offsets = [0, 96], sizes = [2, 32], strides = [1, 1]} : vector<2x128xf32> to vector<2x32xf32>
    %148 = arith.mulf %145, %110 : vector<2x32xf32>
    %149 = arith.mulf %144, %146 : vector<2x32xf32>
    %150 = arith.addf %148, %149 : vector<2x32xf32>
    %151 = math.tanh %150 : vector<2x32xf32>
    %152 = arith.mulf %147, %151 : vector<2x32xf32>
    %c0_96 = arith.constant 0 : index
    %c0_97 = arith.constant 0 : index
    %c0_98 = arith.constant 0 : index
    %c32_99 = arith.constant 32 : index
    %153 = vector.load %arg5[%c0_96, %c0_97, %c0_98, %c32_99] : memref<2x2x2x256xf32, #tpu.memory_space<vmem>>, vector<1x1x2x32xf32>
    %154 = vector.shape_cast %153 : vector<1x1x2x32xf32> to vector<2x32xf32>
    %155 = vector.shape_cast %152 : vector<2x32xf32> to vector<1x1x2x32xf32>
    tpu.vector_store %arg5[%c0_96, %c0_97, %c0_98, %c32_99], %155 {strides = array<i32>} : memref<2x2x2x256xf32, #tpu.memory_space<vmem>>, vector<1x1x2x32xf32>,
    %cst_100 = arith.constant dense<0.000000e+00> : vector<2x128xf32>
    %156 = tpu.matmul %132, %39, %cst_100 {dimension_numbers = #tpu.dot_dimension_numbers<[1], [0], [0], [1], [0, 0, 1, 1], [], []>} : vector<2x32xf32>, vector<32x128xf32>, vector<2x128xf32> -> vector<2x128xf32>
    %157 = arith.addf %73, %156 : vector<2x128xf32>
    %158 = arith.negf %157 : vector<2x128xf32>
    %159 = math.exp %158 : vector<2x128xf32>
    %cst_101 = arith.constant 1.000000e+00 : f32
    %160 = vector.broadcast %cst_101 : f32 to vector<2x128xf32>
    %161 = arith.addf %160, %159 : vector<2x128xf32>
    %162 = arith.divf %160, %161 : vector<2x128xf32>
    %163 = math.tanh %157 : vector<2x128xf32>
    %164 = vector.extract_strided_slice %162 {offsets = [0, 0], sizes = [2, 32], strides = [1, 1]} : vector<2x128xf32> to vector<2x32xf32>
    %165 = vector.extract_strided_slice %162 {offsets = [0, 32], sizes = [2, 32], strides = [1, 1]} : vector<2x128xf32> to vector<2x32xf32>
    %166 = vector.extract_strided_slice %163 {offsets = [0, 64], sizes = [2, 32], strides = [1, 1]} : vector<2x128xf32> to vector<2x32xf32>
    %167 = vector.extract_strided_slice %162 {offsets = [0, 96], sizes = [2, 32], strides = [1, 1]} : vector<2x128xf32> to vector<2x32xf32>
    %168 = arith.mulf %165, %130 : vector<2x32xf32>
    %169 = arith.mulf %164, %166 : vector<2x32xf32>
    %170 = arith.addf %168, %169 : vector<2x32xf32>
    %171 = math.tanh %170 : vector<2x32xf32>
    %172 = arith.mulf %167, %171 : vector<2x32xf32>
    %c1_102 = arith.constant 1 : index
    %c0_103 = arith.constant 0 : index
    %c0_104 = arith.constant 0 : index
    %c32_105 = arith.constant 32 : index
    %173 = vector.load %arg5[%c1_102, %c0_103, %c0_104, %c32_105] : memref<2x2x2x256xf32, #tpu.memory_space<vmem>>, vector<1x1x2x32xf32>
    %174 = vector.shape_cast %173 : vector<1x1x2x32xf32> to vector<2x32xf32>
    %175 = vector.shape_cast %172 : vector<2x32xf32> to vector<1x1x2x32xf32>
    tpu.vector_store %arg5[%c1_102, %c0_103, %c0_104, %c32_105], %175 {strides = array<i32>} : memref<2x2x2x256xf32, #tpu.memory_space<vmem>>, vector<1x1x2x32xf32>,
    %cst_106 = arith.constant dense<0.000000e+00> : vector<2x128xf32>
    %176 = tpu.matmul %152, %37, %cst_106 {dimension_numbers = #tpu.dot_dimension_numbers<[1], [0], [0], [1], [0, 0, 1, 1], [], []>} : vector<2x32xf32>, vector<32x128xf32>, vector<2x128xf32> -> vector<2x128xf32>
    %177 = arith.addf %52, %176 : vector<2x128xf32>
    %178 = arith.negf %177 : vector<2x128xf32>
    %179 = math.exp %178 : vector<2x128xf32>
    %cst_107 = arith.constant 1.000000e+00 : f32
    %180 = vector.broadcast %cst_107 : f32 to vector<2x128xf32>
    %181 = arith.addf %180, %179 : vector<2x128xf32>
    %182 = arith.divf %180, %181 : vector<2x128xf32>
    %183 = math.tanh %177 : vector<2x128xf32>
    %184 = vector.extract_strided_slice %182 {offsets = [0, 0], sizes = [2, 32], strides = [1, 1]} : vector<2x128xf32> to vector<2x32xf32>
    %185 = vector.extract_strided_slice %182 {offsets = [0, 32], sizes = [2, 32], strides = [1, 1]} : vector<2x128xf32> to vector<2x32xf32>
    %186 = vector.extract_strided_slice %183 {offsets = [0, 64], sizes = [2, 32], strides = [1, 1]} : vector<2x128xf32> to vector<2x32xf32>
    %187 = vector.extract_strided_slice %182 {offsets = [0, 96], sizes = [2, 32], strides = [1, 1]} : vector<2x128xf32> to vector<2x32xf32>
    %188 = arith.mulf %185, %150 : vector<2x32xf32>
    %189 = arith.mulf %184, %186 : vector<2x32xf32>
    %190 = arith.addf %188, %189 : vector<2x32xf32>
    %191 = math.tanh %190 : vector<2x32xf32>
    %192 = arith.mulf %187, %191 : vector<2x32xf32>
    %c0_108 = arith.constant 0 : index
    %c0_109 = arith.constant 0 : index
    %c0_110 = arith.constant 0 : index
    %c64_111 = arith.constant 64 : index
    %193 = vector.load %arg5[%c0_108, %c0_109, %c0_110, %c64_111] : memref<2x2x2x256xf32, #tpu.memory_space<vmem>>, vector<1x1x2x32xf32>
    %194 = vector.shape_cast %193 : vector<1x1x2x32xf32> to vector<2x32xf32>
    %195 = vector.shape_cast %192 : vector<2x32xf32> to vector<1x1x2x32xf32>
    tpu.vector_store %arg5[%c0_108, %c0_109, %c0_110, %c64_111], %195 {strides = array<i32>} : memref<2x2x2x256xf32, #tpu.memory_space<vmem>>, vector<1x1x2x32xf32>,
    %cst_112 = arith.constant dense<0.000000e+00> : vector<2x128xf32>
    %196 = tpu.matmul %172, %39, %cst_112 {dimension_numbers = #tpu.dot_dimension_numbers<[1], [0], [0], [1], [0, 0, 1, 1], [], []>} : vector<2x32xf32>, vector<32x128xf32>, vector<2x128xf32> -> vector<2x128xf32>
    %197 = arith.addf %76, %196 : vector<2x128xf32>
    %198 = arith.negf %197 : vector<2x128xf32>
    %199 = math.exp %198 : vector<2x128xf32>
    %cst_113 = arith.constant 1.000000e+00 : f32
    %200 = vector.broadcast %cst_113 : f32 to vector<2x128xf32>
    %201 = arith.addf %200, %199 : vector<2x128xf32>
    %202 = arith.divf %200, %201 : vector<2x128xf32>
    %203 = math.tanh %197 : vector<2x128xf32>
    %204 = vector.extract_strided_slice %202 {offsets = [0, 0], sizes = [2, 32], strides = [1, 1]} : vector<2x128xf32> to vector<2x32xf32>
    %205 = vector.extract_strided_slice %202 {offsets = [0, 32], sizes = [2, 32], strides = [1, 1]} : vector<2x128xf32> to vector<2x32xf32>
    %206 = vector.extract_strided_slice %203 {offsets = [0, 64], sizes = [2, 32], strides = [1, 1]} : vector<2x128xf32> to vector<2x32xf32>
    %207 = vector.extract_strided_slice %202 {offsets = [0, 96], sizes = [2, 32], strides = [1, 1]} : vector<2x128xf32> to vector<2x32xf32>
    %208 = arith.mulf %205, %170 : vector<2x32xf32>
    %209 = arith.mulf %204, %206 : vector<2x32xf32>
    %210 = arith.addf %208, %209 : vector<2x32xf32>
    %211 = math.tanh %210 : vector<2x32xf32>
    %212 = arith.mulf %207, %211 : vector<2x32xf32>
    %c1_114 = arith.constant 1 : index
    %c0_115 = arith.constant 0 : index
    %c0_116 = arith.constant 0 : index
    %c64_117 = arith.constant 64 : index
    %213 = vector.load %arg5[%c1_114, %c0_115, %c0_116, %c64_117] : memref<2x2x2x256xf32, #tpu.memory_space<vmem>>, vector<1x1x2x32xf32>
    %214 = vector.shape_cast %213 : vector<1x1x2x32xf32> to vector<2x32xf32>
    %215 = vector.shape_cast %212 : vector<2x32xf32> to vector<1x1x2x32xf32>
    tpu.vector_store %arg5[%c1_114, %c0_115, %c0_116, %c64_117], %215 {strides = array<i32>} : memref<2x2x2x256xf32, #tpu.memory_space<vmem>>, vector<1x1x2x32xf32>,
    %cst_118 = arith.constant dense<0.000000e+00> : vector<2x128xf32>
    %216 = tpu.matmul %192, %37, %cst_118 {dimension_numbers = #tpu.dot_dimension_numbers<[1], [0], [0], [1], [0, 0, 1, 1], [], []>} : vector<2x32xf32>, vector<32x128xf32>, vector<2x128xf32> -> vector<2x128xf32>
    %217 = arith.addf %55, %216 : vector<2x128xf32>
    %218 = arith.negf %217 : vector<2x128xf32>
    %219 = math.exp %218 : vector<2x128xf32>
    %cst_119 = arith.constant 1.000000e+00 : f32
    %220 = vector.broadcast %cst_119 : f32 to vector<2x128xf32>
    %221 = arith.addf %220, %219 : vector<2x128xf32>
    %222 = arith.divf %220, %221 : vector<2x128xf32>
    %223 = math.tanh %217 : vector<2x128xf32>
    %224 = vector.extract_strided_slice %222 {offsets = [0, 0], sizes = [2, 32], strides = [1, 1]} : vector<2x128xf32> to vector<2x32xf32>
    %225 = vector.extract_strided_slice %222 {offsets = [0, 32], sizes = [2, 32], strides = [1, 1]} : vector<2x128xf32> to vector<2x32xf32>
    %226 = vector.extract_strided_slice %223 {offsets = [0, 64], sizes = [2, 32], strides = [1, 1]} : vector<2x128xf32> to vector<2x32xf32>
    %227 = vector.extract_strided_slice %222 {offsets = [0, 96], sizes = [2, 32], strides = [1, 1]} : vector<2x128xf32> to vector<2x32xf32>
    %228 = arith.mulf %225, %190 : vector<2x32xf32>
    %229 = arith.mulf %224, %226 : vector<2x32xf32>
    %230 = arith.addf %228, %229 : vector<2x32xf32>
    %231 = math.tanh %230 : vector<2x32xf32>
    %232 = arith.mulf %227, %231 : vector<2x32xf32>
    %c0_120 = arith.constant 0 : index
    %c0_121 = arith.constant 0 : index
    %c0_122 = arith.constant 0 : index
    %c96_123 = arith.constant 96 : index
    %233 = vector.load %arg5[%c0_120, %c0_121, %c0_122, %c96_123] : memref<2x2x2x256xf32, #tpu.memory_space<vmem>>, vector<1x1x2x32xf32>
    %234 = vector.shape_cast %233 : vector<1x1x2x32xf32> to vector<2x32xf32>
    %235 = vector.shape_cast %232 : vector<2x32xf32> to vector<1x1x2x32xf32>
    tpu.vector_store %arg5[%c0_120, %c0_121, %c0_122, %c96_123], %235 {strides = array<i32>} : memref<2x2x2x256xf32, #tpu.memory_space<vmem>>, vector<1x1x2x32xf32>,
    %cst_124 = arith.constant dense<0.000000e+00> : vector<2x128xf32>
    %236 = tpu.matmul %212, %39, %cst_124 {dimension_numbers = #tpu.dot_dimension_numbers<[1], [0], [0], [1], [0, 0, 1, 1], [], []>} : vector<2x32xf32>, vector<32x128xf32>, vector<2x128xf32> -> vector<2x128xf32>
    %237 = arith.addf %79, %236 : vector<2x128xf32>
    %238 = arith.negf %237 : vector<2x128xf32>
    %239 = math.exp %238 : vector<2x128xf32>
    %cst_125 = arith.constant 1.000000e+00 : f32
    %240 = vector.broadcast %cst_125 : f32 to vector<2x128xf32>
    %241 = arith.addf %240, %239 : vector<2x128xf32>
    %242 = arith.divf %240, %241 : vector<2x128xf32>
    %243 = math.tanh %237 : vector<2x128xf32>
    %244 = vector.extract_strided_slice %242 {offsets = [0, 0], sizes = [2, 32], strides = [1, 1]} : vector<2x128xf32> to vector<2x32xf32>
    %245 = vector.extract_strided_slice %242 {offsets = [0, 32], sizes = [2, 32], strides = [1, 1]} : vector<2x128xf32> to vector<2x32xf32>
    %246 = vector.extract_strided_slice %243 {offsets = [0, 64], sizes = [2, 32], strides = [1, 1]} : vector<2x128xf32> to vector<2x32xf32>
    %247 = vector.extract_strided_slice %242 {offsets = [0, 96], sizes = [2, 32], strides = [1, 1]} : vector<2x128xf32> to vector<2x32xf32>
    %248 = arith.mulf %245, %210 : vector<2x32xf32>
    %249 = arith.mulf %244, %246 : vector<2x32xf32>
    %250 = arith.addf %248, %249 : vector<2x32xf32>
    %251 = math.tanh %250 : vector<2x32xf32>
    %252 = arith.mulf %247, %251 : vector<2x32xf32>
    %c1_126 = arith.constant 1 : index
    %c0_127 = arith.constant 0 : index
    %c0_128 = arith.constant 0 : index
    %c96_129 = arith.constant 96 : index
    %253 = vector.load %arg5[%c1_126, %c0_127, %c0_128, %c96_129] : memref<2x2x2x256xf32, #tpu.memory_space<vmem>>, vector<1x1x2x32xf32>
    %254 = vector.shape_cast %253 : vector<1x1x2x32xf32> to vector<2x32xf32>
    %255 = vector.shape_cast %252 : vector<2x32xf32> to vector<1x1x2x32xf32>
    tpu.vector_store %arg5[%c1_126, %c0_127, %c0_128, %c96_129], %255 {strides = array<i32>} : memref<2x2x2x256xf32, #tpu.memory_space<vmem>>, vector<1x1x2x32xf32>,
    %cst_130 = arith.constant dense<0.000000e+00> : vector<2x128xf32>
    %256 = tpu.matmul %232, %37, %cst_130 {dimension_numbers = #tpu.dot_dimension_numbers<[1], [0], [0], [1], [0, 0, 1, 1], [], []>} : vector<2x32xf32>, vector<32x128xf32>, vector<2x128xf32> -> vector<2x128xf32>
    %257 = arith.addf %58, %256 : vector<2x128xf32>
    %258 = arith.negf %257 : vector<2x128xf32>
    %259 = math.exp %258 : vector<2x128xf32>
    %cst_131 = arith.constant 1.000000e+00 : f32
    %260 = vector.broadcast %cst_131 : f32 to vector<2x128xf32>
    %261 = arith.addf %260, %259 : vector<2x128xf32>
    %262 = arith.divf %260, %261 : vector<2x128xf32>
    %263 = math.tanh %257 : vector<2x128xf32>
    %264 = vector.extract_strided_slice %262 {offsets = [0, 0], sizes = [2, 32], strides = [1, 1]} : vector<2x128xf32> to vector<2x32xf32>
    %265 = vector.extract_strided_slice %262 {offsets = [0, 32], sizes = [2, 32], strides = [1, 1]} : vector<2x128xf32> to vector<2x32xf32>
    %266 = vector.extract_strided_slice %263 {offsets = [0, 64], sizes = [2, 32], strides = [1, 1]} : vector<2x128xf32> to vector<2x32xf32>
    %267 = vector.extract_strided_slice %262 {offsets = [0, 96], sizes = [2, 32], strides = [1, 1]} : vector<2x128xf32> to vector<2x32xf32>
    %268 = arith.mulf %265, %230 : vector<2x32xf32>
    %269 = arith.mulf %264, %266 : vector<2x32xf32>
    %270 = arith.addf %268, %269 : vector<2x32xf32>
    %271 = math.tanh %270 : vector<2x32xf32>
    %272 = arith.mulf %267, %271 : vector<2x32xf32>
    %c0_132 = arith.constant 0 : index
    %c0_133 = arith.constant 0 : index
    %c0_134 = arith.constant 0 : index
    %c128_135 = arith.constant 128 : index
    %273 = vector.load %arg5[%c0_132, %c0_133, %c0_134, %c128_135] : memref<2x2x2x256xf32, #tpu.memory_space<vmem>>, vector<1x1x2x32xf32>
    %274 = vector.shape_cast %273 : vector<1x1x2x32xf32> to vector<2x32xf32>
    %275 = vector.shape_cast %272 : vector<2x32xf32> to vector<1x1x2x32xf32>
    tpu.vector_store %arg5[%c0_132, %c0_133, %c0_134, %c128_135], %275 {strides = array<i32>} : memref<2x2x2x256xf32, #tpu.memory_space<vmem>>, vector<1x1x2x32xf32>,
    %cst_136 = arith.constant dense<0.000000e+00> : vector<2x128xf32>
    %276 = tpu.matmul %252, %39, %cst_136 {dimension_numbers = #tpu.dot_dimension_numbers<[1], [0], [0], [1], [0, 0, 1, 1], [], []>} : vector<2x32xf32>, vector<32x128xf32>, vector<2x128xf32> -> vector<2x128xf32>
    %277 = arith.addf %82, %276 : vector<2x128xf32>
    %278 = arith.negf %277 : vector<2x128xf32>
    %279 = math.exp %278 : vector<2x128xf32>
    %cst_137 = arith.constant 1.000000e+00 : f32
    %280 = vector.broadcast %cst_137 : f32 to vector<2x128xf32>
    %281 = arith.addf %280, %279 : vector<2x128xf32>
    %282 = arith.divf %280, %281 : vector<2x128xf32>
    %283 = math.tanh %277 : vector<2x128xf32>
    %284 = vector.extract_strided_slice %282 {offsets = [0, 0], sizes = [2, 32], strides = [1, 1]} : vector<2x128xf32> to vector<2x32xf32>
    %285 = vector.extract_strided_slice %282 {offsets = [0, 32], sizes = [2, 32], strides = [1, 1]} : vector<2x128xf32> to vector<2x32xf32>
    %286 = vector.extract_strided_slice %283 {offsets = [0, 64], sizes = [2, 32], strides = [1, 1]} : vector<2x128xf32> to vector<2x32xf32>
    %287 = vector.extract_strided_slice %282 {offsets = [0, 96], sizes = [2, 32], strides = [1, 1]} : vector<2x128xf32> to vector<2x32xf32>
    %288 = arith.mulf %285, %250 : vector<2x32xf32>
    %289 = arith.mulf %284, %286 : vector<2x32xf32>
    %290 = arith.addf %288, %289 : vector<2x32xf32>
    %291 = math.tanh %290 : vector<2x32xf32>
    %292 = arith.mulf %287, %291 : vector<2x32xf32>
    %c1_138 = arith.constant 1 : index
    %c0_139 = arith.constant 0 : index
    %c0_140 = arith.constant 0 : index
    %c128_141 = arith.constant 128 : index
    %293 = vector.load %arg5[%c1_138, %c0_139, %c0_140, %c128_141] : memref<2x2x2x256xf32, #tpu.memory_space<vmem>>, vector<1x1x2x32xf32>
    %294 = vector.shape_cast %293 : vector<1x1x2x32xf32> to vector<2x32xf32>
    %295 = vector.shape_cast %292 : vector<2x32xf32> to vector<1x1x2x32xf32>
    tpu.vector_store %arg5[%c1_138, %c0_139, %c0_140, %c128_141], %295 {strides = array<i32>} : memref<2x2x2x256xf32, #tpu.memory_space<vmem>>, vector<1x1x2x32xf32>,
    %cst_142 = arith.constant dense<0.000000e+00> : vector<2x128xf32>
    %296 = tpu.matmul %272, %37, %cst_142 {dimension_numbers = #tpu.dot_dimension_numbers<[1], [0], [0], [1], [0, 0, 1, 1], [], []>} : vector<2x32xf32>, vector<32x128xf32>, vector<2x128xf32> -> vector<2x128xf32>
    %297 = arith.addf %61, %296 : vector<2x128xf32>
    %298 = arith.negf %297 : vector<2x128xf32>
    %299 = math.exp %298 : vector<2x128xf32>
    %cst_143 = arith.constant 1.000000e+00 : f32
    %300 = vector.broadcast %cst_143 : f32 to vector<2x128xf32>
    %301 = arith.addf %300, %299 : vector<2x128xf32>
    %302 = arith.divf %300, %301 : vector<2x128xf32>
    %303 = math.tanh %297 : vector<2x128xf32>
    %304 = vector.extract_strided_slice %302 {offsets = [0, 0], sizes = [2, 32], strides = [1, 1]} : vector<2x128xf32> to vector<2x32xf32>
    %305 = vector.extract_strided_slice %302 {offsets = [0, 32], sizes = [2, 32], strides = [1, 1]} : vector<2x128xf32> to vector<2x32xf32>
    %306 = vector.extract_strided_slice %303 {offsets = [0, 64], sizes = [2, 32], strides = [1, 1]} : vector<2x128xf32> to vector<2x32xf32>
    %307 = vector.extract_strided_slice %302 {offsets = [0, 96], sizes = [2, 32], strides = [1, 1]} : vector<2x128xf32> to vector<2x32xf32>
    %308 = arith.mulf %305, %270 : vector<2x32xf32>
    %309 = arith.mulf %304, %306 : vector<2x32xf32>
    %310 = arith.addf %308, %309 : vector<2x32xf32>
    %311 = math.tanh %310 : vector<2x32xf32>
    %312 = arith.mulf %307, %311 : vector<2x32xf32>
    %c0_144 = arith.constant 0 : index
    %c0_145 = arith.constant 0 : index
    %c0_146 = arith.constant 0 : index
    %c160_147 = arith.constant 160 : index
    %313 = vector.load %arg5[%c0_144, %c0_145, %c0_146, %c160_147] : memref<2x2x2x256xf32, #tpu.memory_space<vmem>>, vector<1x1x2x32xf32>
    %314 = vector.shape_cast %313 : vector<1x1x2x32xf32> to vector<2x32xf32>
    %315 = vector.shape_cast %312 : vector<2x32xf32> to vector<1x1x2x32xf32>
    tpu.vector_store %arg5[%c0_144, %c0_145, %c0_146, %c160_147], %315 {strides = array<i32>} : memref<2x2x2x256xf32, #tpu.memory_space<vmem>>, vector<1x1x2x32xf32>,
    %cst_148 = arith.constant dense<0.000000e+00> : vector<2x128xf32>
    %316 = tpu.matmul %292, %39, %cst_148 {dimension_numbers = #tpu.dot_dimension_numbers<[1], [0], [0], [1], [0, 0, 1, 1], [], []>} : vector<2x32xf32>, vector<32x128xf32>, vector<2x128xf32> -> vector<2x128xf32>
    %317 = arith.addf %85, %316 : vector<2x128xf32>
    %318 = arith.negf %317 : vector<2x128xf32>
    %319 = math.exp %318 : vector<2x128xf32>
    %cst_149 = arith.constant 1.000000e+00 : f32
    %320 = vector.broadcast %cst_149 : f32 to vector<2x128xf32>
    %321 = arith.addf %320, %319 : vector<2x128xf32>
    %322 = arith.divf %320, %321 : vector<2x128xf32>
    %323 = math.tanh %317 : vector<2x128xf32>
    %324 = vector.extract_strided_slice %322 {offsets = [0, 0], sizes = [2, 32], strides = [1, 1]} : vector<2x128xf32> to vector<2x32xf32>
    %325 = vector.extract_strided_slice %322 {offsets = [0, 32], sizes = [2, 32], strides = [1, 1]} : vector<2x128xf32> to vector<2x32xf32>
    %326 = vector.extract_strided_slice %323 {offsets = [0, 64], sizes = [2, 32], strides = [1, 1]} : vector<2x128xf32> to vector<2x32xf32>
    %327 = vector.extract_strided_slice %322 {offsets = [0, 96], sizes = [2, 32], strides = [1, 1]} : vector<2x128xf32> to vector<2x32xf32>
    %328 = arith.mulf %325, %290 : vector<2x32xf32>
    %329 = arith.mulf %324, %326 : vector<2x32xf32>
    %330 = arith.addf %328, %329 : vector<2x32xf32>
    %331 = math.tanh %330 : vector<2x32xf32>
    %332 = arith.mulf %327, %331 : vector<2x32xf32>
    %c1_150 = arith.constant 1 : index
    %c0_151 = arith.constant 0 : index
    %c0_152 = arith.constant 0 : index
    %c160_153 = arith.constant 160 : index
    %333 = vector.load %arg5[%c1_150, %c0_151, %c0_152, %c160_153] : memref<2x2x2x256xf32, #tpu.memory_space<vmem>>, vector<1x1x2x32xf32>
    %334 = vector.shape_cast %333 : vector<1x1x2x32xf32> to vector<2x32xf32>
    %335 = vector.shape_cast %332 : vector<2x32xf32> to vector<1x1x2x32xf32>
    tpu.vector_store %arg5[%c1_150, %c0_151, %c0_152, %c160_153], %335 {strides = array<i32>} : memref<2x2x2x256xf32, #tpu.memory_space<vmem>>, vector<1x1x2x32xf32>,
    %cst_154 = arith.constant dense<0.000000e+00> : vector<2x128xf32>
    %336 = tpu.matmul %312, %37, %cst_154 {dimension_numbers = #tpu.dot_dimension_numbers<[1], [0], [0], [1], [0, 0, 1, 1], [], []>} : vector<2x32xf32>, vector<32x128xf32>, vector<2x128xf32> -> vector<2x128xf32>
    %337 = arith.addf %64, %336 : vector<2x128xf32>
    %338 = arith.negf %337 : vector<2x128xf32>
    %339 = math.exp %338 : vector<2x128xf32>
    %cst_155 = arith.constant 1.000000e+00 : f32
    %340 = vector.broadcast %cst_155 : f32 to vector<2x128xf32>
    %341 = arith.addf %340, %339 : vector<2x128xf32>
    %342 = arith.divf %340, %341 : vector<2x128xf32>
    %343 = math.tanh %337 : vector<2x128xf32>
    %344 = vector.extract_strided_slice %342 {offsets = [0, 0], sizes = [2, 32], strides = [1, 1]} : vector<2x128xf32> to vector<2x32xf32>
    %345 = vector.extract_strided_slice %342 {offsets = [0, 32], sizes = [2, 32], strides = [1, 1]} : vector<2x128xf32> to vector<2x32xf32>
    %346 = vector.extract_strided_slice %343 {offsets = [0, 64], sizes = [2, 32], strides = [1, 1]} : vector<2x128xf32> to vector<2x32xf32>
    %347 = vector.extract_strided_slice %342 {offsets = [0, 96], sizes = [2, 32], strides = [1, 1]} : vector<2x128xf32> to vector<2x32xf32>
    %348 = arith.mulf %345, %310 : vector<2x32xf32>
    %349 = arith.mulf %344, %346 : vector<2x32xf32>
    %350 = arith.addf %348, %349 : vector<2x32xf32>
    %351 = math.tanh %350 : vector<2x32xf32>
    %352 = arith.mulf %347, %351 : vector<2x32xf32>
    %c0_156 = arith.constant 0 : index
    %c0_157 = arith.constant 0 : index
    %c0_158 = arith.constant 0 : index
    %c192_159 = arith.constant 192 : index
    %353 = vector.load %arg5[%c0_156, %c0_157, %c0_158, %c192_159] : memref<2x2x2x256xf32, #tpu.memory_space<vmem>>, vector<1x1x2x32xf32>
    %354 = vector.shape_cast %353 : vector<1x1x2x32xf32> to vector<2x32xf32>
    %355 = vector.shape_cast %352 : vector<2x32xf32> to vector<1x1x2x32xf32>
    tpu.vector_store %arg5[%c0_156, %c0_157, %c0_158, %c192_159], %355 {strides = array<i32>} : memref<2x2x2x256xf32, #tpu.memory_space<vmem>>, vector<1x1x2x32xf32>,
    %cst_160 = arith.constant dense<0.000000e+00> : vector<2x128xf32>
    %356 = tpu.matmul %332, %39, %cst_160 {dimension_numbers = #tpu.dot_dimension_numbers<[1], [0], [0], [1], [0, 0, 1, 1], [], []>} : vector<2x32xf32>, vector<32x128xf32>, vector<2x128xf32> -> vector<2x128xf32>
    %357 = arith.addf %88, %356 : vector<2x128xf32>
    %358 = arith.negf %357 : vector<2x128xf32>
    %359 = math.exp %358 : vector<2x128xf32>
    %cst_161 = arith.constant 1.000000e+00 : f32
    %360 = vector.broadcast %cst_161 : f32 to vector<2x128xf32>
    %361 = arith.addf %360, %359 : vector<2x128xf32>
    %362 = arith.divf %360, %361 : vector<2x128xf32>
    %363 = math.tanh %357 : vector<2x128xf32>
    %364 = vector.extract_strided_slice %362 {offsets = [0, 0], sizes = [2, 32], strides = [1, 1]} : vector<2x128xf32> to vector<2x32xf32>
    %365 = vector.extract_strided_slice %362 {offsets = [0, 32], sizes = [2, 32], strides = [1, 1]} : vector<2x128xf32> to vector<2x32xf32>
    %366 = vector.extract_strided_slice %363 {offsets = [0, 64], sizes = [2, 32], strides = [1, 1]} : vector<2x128xf32> to vector<2x32xf32>
    %367 = vector.extract_strided_slice %362 {offsets = [0, 96], sizes = [2, 32], strides = [1, 1]} : vector<2x128xf32> to vector<2x32xf32>
    %368 = arith.mulf %365, %330 : vector<2x32xf32>
    %369 = arith.mulf %364, %366 : vector<2x32xf32>
    %370 = arith.addf %368, %369 : vector<2x32xf32>
    %371 = math.tanh %370 : vector<2x32xf32>
    %372 = arith.mulf %367, %371 : vector<2x32xf32>
    %c1_162 = arith.constant 1 : index
    %c0_163 = arith.constant 0 : index
    %c0_164 = arith.constant 0 : index
    %c192_165 = arith.constant 192 : index
    %373 = vector.load %arg5[%c1_162, %c0_163, %c0_164, %c192_165] : memref<2x2x2x256xf32, #tpu.memory_space<vmem>>, vector<1x1x2x32xf32>
    %374 = vector.shape_cast %373 : vector<1x1x2x32xf32> to vector<2x32xf32>
    %375 = vector.shape_cast %372 : vector<2x32xf32> to vector<1x1x2x32xf32>
    tpu.vector_store %arg5[%c1_162, %c0_163, %c0_164, %c192_165], %375 {strides = array<i32>} : memref<2x2x2x256xf32, #tpu.memory_space<vmem>>, vector<1x1x2x32xf32>,
    %cst_166 = arith.constant dense<0.000000e+00> : vector<2x128xf32>
    %376 = tpu.matmul %352, %37, %cst_166 {dimension_numbers = #tpu.dot_dimension_numbers<[1], [0], [0], [1], [0, 0, 1, 1], [], []>} : vector<2x32xf32>, vector<32x128xf32>, vector<2x128xf32> -> vector<2x128xf32>
    %377 = arith.addf %67, %376 : vector<2x128xf32>
    %378 = arith.negf %377 : vector<2x128xf32>
    %379 = math.exp %378 : vector<2x128xf32>
    %cst_167 = arith.constant 1.000000e+00 : f32
    %380 = vector.broadcast %cst_167 : f32 to vector<2x128xf32>
    %381 = arith.addf %380, %379 : vector<2x128xf32>
    %382 = arith.divf %380, %381 : vector<2x128xf32>
    %383 = math.tanh %377 : vector<2x128xf32>
    %384 = vector.extract_strided_slice %382 {offsets = [0, 0], sizes = [2, 32], strides = [1, 1]} : vector<2x128xf32> to vector<2x32xf32>
    %385 = vector.extract_strided_slice %382 {offsets = [0, 32], sizes = [2, 32], strides = [1, 1]} : vector<2x128xf32> to vector<2x32xf32>
    %386 = vector.extract_strided_slice %383 {offsets = [0, 64], sizes = [2, 32], strides = [1, 1]} : vector<2x128xf32> to vector<2x32xf32>
    %387 = vector.extract_strided_slice %382 {offsets = [0, 96], sizes = [2, 32], strides = [1, 1]} : vector<2x128xf32> to vector<2x32xf32>
    %388 = arith.mulf %385, %350 : vector<2x32xf32>
    %389 = arith.mulf %384, %386 : vector<2x32xf32>
    %390 = arith.addf %388, %389 : vector<2x32xf32>
    %391 = math.tanh %390 : vector<2x32xf32>
    %392 = arith.mulf %387, %391 : vector<2x32xf32>
    %c0_168 = arith.constant 0 : index
    %c0_169 = arith.constant 0 : index
    %c0_170 = arith.constant 0 : index
    %c224_171 = arith.constant 224 : index
    %393 = vector.load %arg5[%c0_168, %c0_169, %c0_170, %c224_171] : memref<2x2x2x256xf32, #tpu.memory_space<vmem>>, vector<1x1x2x32xf32>
    %394 = vector.shape_cast %393 : vector<1x1x2x32xf32> to vector<2x32xf32>
    %395 = vector.shape_cast %392 : vector<2x32xf32> to vector<1x1x2x32xf32>
    tpu.vector_store %arg5[%c0_168, %c0_169, %c0_170, %c224_171], %395 {strides = array<i32>} : memref<2x2x2x256xf32, #tpu.memory_space<vmem>>, vector<1x1x2x32xf32>,
    %cst_172 = arith.constant dense<0.000000e+00> : vector<2x128xf32>
    %396 = tpu.matmul %372, %39, %cst_172 {dimension_numbers = #tpu.dot_dimension_numbers<[1], [0], [0], [1], [0, 0, 1, 1], [], []>} : vector<2x32xf32>, vector<32x128xf32>, vector<2x128xf32> -> vector<2x128xf32>
    %397 = arith.addf %91, %396 : vector<2x128xf32>
    %398 = arith.negf %397 : vector<2x128xf32>
    %399 = math.exp %398 : vector<2x128xf32>
    %cst_173 = arith.constant 1.000000e+00 : f32
    %400 = vector.broadcast %cst_173 : f32 to vector<2x128xf32>
    %401 = arith.addf %400, %399 : vector<2x128xf32>
    %402 = arith.divf %400, %401 : vector<2x128xf32>
    %403 = math.tanh %397 : vector<2x128xf32>
    %404 = vector.extract_strided_slice %402 {offsets = [0, 0], sizes = [2, 32], strides = [1, 1]} : vector<2x128xf32> to vector<2x32xf32>
    %405 = vector.extract_strided_slice %402 {offsets = [0, 32], sizes = [2, 32], strides = [1, 1]} : vector<2x128xf32> to vector<2x32xf32>
    %406 = vector.extract_strided_slice %403 {offsets = [0, 64], sizes = [2, 32], strides = [1, 1]} : vector<2x128xf32> to vector<2x32xf32>
    %407 = vector.extract_strided_slice %402 {offsets = [0, 96], sizes = [2, 32], strides = [1, 1]} : vector<2x128xf32> to vector<2x32xf32>
    %408 = arith.mulf %405, %370 : vector<2x32xf32>
    %409 = arith.mulf %404, %406 : vector<2x32xf32>
    %410 = arith.addf %408, %409 : vector<2x32xf32>
    %411 = math.tanh %410 : vector<2x32xf32>
    %412 = arith.mulf %407, %411 : vector<2x32xf32>
    %c1_174 = arith.constant 1 : index
    %c0_175 = arith.constant 0 : index
    %c0_176 = arith.constant 0 : index
    %c224_177 = arith.constant 224 : index
    %413 = vector.load %arg5[%c1_174, %c0_175, %c0_176, %c224_177] : memref<2x2x2x256xf32, #tpu.memory_space<vmem>>, vector<1x1x2x32xf32>
    %414 = vector.shape_cast %413 : vector<1x1x2x32xf32> to vector<2x32xf32>
    %415 = vector.shape_cast %412 : vector<2x32xf32> to vector<1x1x2x32xf32>
    tpu.vector_store %arg5[%c1_174, %c0_175, %c0_176, %c224_177], %415 {strides = array<i32>} : memref<2x2x2x256xf32, #tpu.memory_space<vmem>>, vector<1x1x2x32xf32>,
    %c0_178 = arith.constant 0 : index
    %c1_179 = arith.constant 1 : index
    %c0_180 = arith.constant 0 : index
    %c0_181 = arith.constant 0 : index
    %416 = vector.load %arg2[%c0_178, %c1_179, %c0_180, %c0_181] : memref<2x2x32x128xf32, #tpu.memory_space<vmem>>, vector<1x1x32x128xf32>
    %417 = vector.shape_cast %416 : vector<1x1x32x128xf32> to vector<32x128xf32>
    %c1_182 = arith.constant 1 : index
    %c1_183 = arith.constant 1 : index
    %c0_184 = arith.constant 0 : index
    %c0_185 = arith.constant 0 : index
    %418 = vector.load %arg2[%c1_182, %c1_183, %c0_184, %c0_185] : memref<2x2x32x128xf32, #tpu.memory_space<vmem>>, vector<1x1x32x128xf32>
    %419 = vector.shape_cast %418 : vector<1x1x32x128xf32> to vector<32x128xf32>
    %c0_186 = arith.constant 0 : index
    %c1_187 = arith.constant 1 : index
    %c0_188 = arith.constant 0 : index
    %c0_189 = arith.constant 0 : index
    %420 = vector.load %arg3[%c0_186, %c1_187, %c0_188, %c0_189] : memref<2x2x32x128xf32, #tpu.memory_space<vmem>>, vector<1x1x32x128xf32>
    %421 = vector.shape_cast %420 : vector<1x1x32x128xf32> to vector<32x128xf32>
    %c1_190 = arith.constant 1 : index
    %c1_191 = arith.constant 1 : index
    %c0_192 = arith.constant 0 : index
    %c0_193 = arith.constant 0 : index
    %422 = vector.load %arg3[%c1_190, %c1_191, %c0_192, %c0_193] : memref<2x2x32x128xf32, #tpu.memory_space<vmem>>, vector<1x1x32x128xf32>
    %423 = vector.shape_cast %422 : vector<1x1x32x128xf32> to vector<32x128xf32>
    %c0_194 = arith.constant 0 : index
    %c1_195 = arith.constant 1 : index
    %c0_196 = arith.constant 0 : index
    %c0_197 = arith.constant 0 : index
    %424 = vector.load %arg4[%c0_194, %c1_195, %c0_196, %c0_197] : memref<2x2x1x128xf32, #tpu.memory_space<vmem>>, vector<1x1x1x128xf32>
    %425 = vector.shape_cast %424 : vector<1x1x1x128xf32> to vector<1x128xf32>
    %c1_198 = arith.constant 1 : index
    %c1_199 = arith.constant 1 : index
    %c0_200 = arith.constant 0 : index
    %c0_201 = arith.constant 0 : index
    %426 = vector.load %arg4[%c1_198, %c1_199, %c0_200, %c0_201] : memref<2x2x1x128xf32, #tpu.memory_space<vmem>>, vector<1x1x1x128xf32>
    %427 = vector.shape_cast %426 : vector<1x1x1x128xf32> to vector<1x128xf32>
    %cst_202 = arith.constant dense<0.000000e+00> : vector<2x128xf32>
    %428 = tpu.matmul %112, %417, %cst_202 {dimension_numbers = #tpu.dot_dimension_numbers<[1], [0], [0], [1], [0, 0, 1, 1], [], []>} : vector<2x32xf32>, vector<32x128xf32>, vector<2x128xf32> -> vector<2x128xf32>
    %429 = vector.broadcast %425 : vector<1x128xf32> to vector<2x128xf32>
    %430 = arith.addf %428, %429 : vector<2x128xf32>
    %cst_203 = arith.constant dense<0.000000e+00> : vector<2x128xf32>
    %431 = tpu.matmul %152, %417, %cst_203 {dimension_numbers = #tpu.dot_dimension_numbers<[1], [0], [0], [1], [0, 0, 1, 1], [], []>} : vector<2x32xf32>, vector<32x128xf32>, vector<2x128xf32> -> vector<2x128xf32>
    %432 = vector.broadcast %425 : vector<1x128xf32> to vector<2x128xf32>
    %433 = arith.addf %431, %432 : vector<2x128xf32>
    %cst_204 = arith.constant dense<0.000000e+00> : vector<2x128xf32>
    %434 = tpu.matmul %192, %417, %cst_204 {dimension_numbers = #tpu.dot_dimension_numbers<[1], [0], [0], [1], [0, 0, 1, 1], [], []>} : vector<2x32xf32>, vector<32x128xf32>, vector<2x128xf32> -> vector<2x128xf32>
    %435 = vector.broadcast %425 : vector<1x128xf32> to vector<2x128xf32>
    %436 = arith.addf %434, %435 : vector<2x128xf32>
    %cst_205 = arith.constant dense<0.000000e+00> : vector<2x128xf32>
    %437 = tpu.matmul %232, %417, %cst_205 {dimension_numbers = #tpu.dot_dimension_numbers<[1], [0], [0], [1], [0, 0, 1, 1], [], []>} : vector<2x32xf32>, vector<32x128xf32>, vector<2x128xf32> -> vector<2x128xf32>
    %438 = vector.broadcast %425 : vector<1x128xf32> to vector<2x128xf32>
    %439 = arith.addf %437, %438 : vector<2x128xf32>
    %cst_206 = arith.constant dense<0.000000e+00> : vector<2x128xf32>
    %440 = tpu.matmul %272, %417, %cst_206 {dimension_numbers = #tpu.dot_dimension_numbers<[1], [0], [0], [1], [0, 0, 1, 1], [], []>} : vector<2x32xf32>, vector<32x128xf32>, vector<2x128xf32> -> vector<2x128xf32>
    %441 = vector.broadcast %425 : vector<1x128xf32> to vector<2x128xf32>
    %442 = arith.addf %440, %441 : vector<2x128xf32>
    %cst_207 = arith.constant dense<0.000000e+00> : vector<2x128xf32>
    %443 = tpu.matmul %312, %417, %cst_207 {dimension_numbers = #tpu.dot_dimension_numbers<[1], [0], [0], [1], [0, 0, 1, 1], [], []>} : vector<2x32xf32>, vector<32x128xf32>, vector<2x128xf32> -> vector<2x128xf32>
    %444 = vector.broadcast %425 : vector<1x128xf32> to vector<2x128xf32>
    %445 = arith.addf %443, %444 : vector<2x128xf32>
    %cst_208 = arith.constant dense<0.000000e+00> : vector<2x128xf32>
    %446 = tpu.matmul %352, %417, %cst_208 {dimension_numbers = #tpu.dot_dimension_numbers<[1], [0], [0], [1], [0, 0, 1, 1], [], []>} : vector<2x32xf32>, vector<32x128xf32>, vector<2x128xf32> -> vector<2x128xf32>
    %447 = vector.broadcast %425 : vector<1x128xf32> to vector<2x128xf32>
    %448 = arith.addf %446, %447 : vector<2x128xf32>
    %cst_209 = arith.constant dense<0.000000e+00> : vector<2x128xf32>
    %449 = tpu.matmul %392, %417, %cst_209 {dimension_numbers = #tpu.dot_dimension_numbers<[1], [0], [0], [1], [0, 0, 1, 1], [], []>} : vector<2x32xf32>, vector<32x128xf32>, vector<2x128xf32> -> vector<2x128xf32>
    %450 = vector.broadcast %425 : vector<1x128xf32> to vector<2x128xf32>
    %451 = arith.addf %449, %450 : vector<2x128xf32>
    %cst_210 = arith.constant dense<0.000000e+00> : vector<2x128xf32>
    %452 = tpu.matmul %132, %419, %cst_210 {dimension_numbers = #tpu.dot_dimension_numbers<[1], [0], [0], [1], [0, 0, 1, 1], [], []>} : vector<2x32xf32>, vector<32x128xf32>, vector<2x128xf32> -> vector<2x128xf32>
    %453 = vector.broadcast %427 : vector<1x128xf32> to vector<2x128xf32>
    %454 = arith.addf %452, %453 : vector<2x128xf32>
    %cst_211 = arith.constant dense<0.000000e+00> : vector<2x128xf32>
    %455 = tpu.matmul %172, %419, %cst_211 {dimension_numbers = #tpu.dot_dimension_numbers<[1], [0], [0], [1], [0, 0, 1, 1], [], []>} : vector<2x32xf32>, vector<32x128xf32>, vector<2x128xf32> -> vector<2x128xf32>
    %456 = vector.broadcast %427 : vector<1x128xf32> to vector<2x128xf32>
    %457 = arith.addf %455, %456 : vector<2x128xf32>
    %cst_212 = arith.constant dense<0.000000e+00> : vector<2x128xf32>
    %458 = tpu.matmul %212, %419, %cst_212 {dimension_numbers = #tpu.dot_dimension_numbers<[1], [0], [0], [1], [0, 0, 1, 1], [], []>} : vector<2x32xf32>, vector<32x128xf32>, vector<2x128xf32> -> vector<2x128xf32>
    %459 = vector.broadcast %427 : vector<1x128xf32> to vector<2x128xf32>
    %460 = arith.addf %458, %459 : vector<2x128xf32>
    %cst_213 = arith.constant dense<0.000000e+00> : vector<2x128xf32>
    %461 = tpu.matmul %252, %419, %cst_213 {dimension_numbers = #tpu.dot_dimension_numbers<[1], [0], [0], [1], [0, 0, 1, 1], [], []>} : vector<2x32xf32>, vector<32x128xf32>, vector<2x128xf32> -> vector<2x128xf32>
    %462 = vector.broadcast %427 : vector<1x128xf32> to vector<2x128xf32>
    %463 = arith.addf %461, %462 : vector<2x128xf32>
    %cst_214 = arith.constant dense<0.000000e+00> : vector<2x128xf32>
    %464 = tpu.matmul %292, %419, %cst_214 {dimension_numbers = #tpu.dot_dimension_numbers<[1], [0], [0], [1], [0, 0, 1, 1], [], []>} : vector<2x32xf32>, vector<32x128xf32>, vector<2x128xf32> -> vector<2x128xf32>
    %465 = vector.broadcast %427 : vector<1x128xf32> to vector<2x128xf32>
    %466 = arith.addf %464, %465 : vector<2x128xf32>
    %cst_215 = arith.constant dense<0.000000e+00> : vector<2x128xf32>
    %467 = tpu.matmul %332, %419, %cst_215 {dimension_numbers = #tpu.dot_dimension_numbers<[1], [0], [0], [1], [0, 0, 1, 1], [], []>} : vector<2x32xf32>, vector<32x128xf32>, vector<2x128xf32> -> vector<2x128xf32>
    %468 = vector.broadcast %427 : vector<1x128xf32> to vector<2x128xf32>
    %469 = arith.addf %467, %468 : vector<2x128xf32>
    %cst_216 = arith.constant dense<0.000000e+00> : vector<2x128xf32>
    %470 = tpu.matmul %372, %419, %cst_216 {dimension_numbers = #tpu.dot_dimension_numbers<[1], [0], [0], [1], [0, 0, 1, 1], [], []>} : vector<2x32xf32>, vector<32x128xf32>, vector<2x128xf32> -> vector<2x128xf32>
    %471 = vector.broadcast %427 : vector<1x128xf32> to vector<2x128xf32>
    %472 = arith.addf %470, %471 : vector<2x128xf32>
    %cst_217 = arith.constant dense<0.000000e+00> : vector<2x128xf32>
    %473 = tpu.matmul %412, %419, %cst_217 {dimension_numbers = #tpu.dot_dimension_numbers<[1], [0], [0], [1], [0, 0, 1, 1], [], []>} : vector<2x32xf32>, vector<32x128xf32>, vector<2x128xf32> -> vector<2x128xf32>
    %474 = vector.broadcast %427 : vector<1x128xf32> to vector<2x128xf32>
    %475 = arith.addf %473, %474 : vector<2x128xf32>
    %cst_218 = arith.constant 0.000000e+00 : f32
    %476 = vector.broadcast %cst_218 : f32 to vector<2x32xf32>
    %cst_219 = arith.constant 0.000000e+00 : f32
    %477 = vector.broadcast %cst_219 : f32 to vector<2x32xf32>
    %cst_220 = arith.constant 0.000000e+00 : f32
    %478 = vector.broadcast %cst_220 : f32 to vector<2x32xf32>
    %cst_221 = arith.constant 0.000000e+00 : f32
    %479 = vector.broadcast %cst_221 : f32 to vector<2x32xf32>
    %cst_222 = arith.constant dense<0.000000e+00> : vector<2x128xf32>
    %480 = tpu.matmul %476, %421, %cst_222 {dimension_numbers = #tpu.dot_dimension_numbers<[1], [0], [0], [1], [0, 0, 1, 1], [], []>} : vector<2x32xf32>, vector<32x128xf32>, vector<2x128xf32> -> vector<2x128xf32>
    %481 = arith.addf %430, %480 : vector<2x128xf32>
    %482 = arith.negf %481 : vector<2x128xf32>
    %483 = math.exp %482 : vector<2x128xf32>
    %cst_223 = arith.constant 1.000000e+00 : f32
    %484 = vector.broadcast %cst_223 : f32 to vector<2x128xf32>
    %485 = arith.addf %484, %483 : vector<2x128xf32>
    %486 = arith.divf %484, %485 : vector<2x128xf32>
    %487 = math.tanh %481 : vector<2x128xf32>
    %488 = vector.extract_strided_slice %486 {offsets = [0, 0], sizes = [2, 32], strides = [1, 1]} : vector<2x128xf32> to vector<2x32xf32>
    %489 = vector.extract_strided_slice %486 {offsets = [0, 32], sizes = [2, 32], strides = [1, 1]} : vector<2x128xf32> to vector<2x32xf32>
    %490 = vector.extract_strided_slice %487 {offsets = [0, 64], sizes = [2, 32], strides = [1, 1]} : vector<2x128xf32> to vector<2x32xf32>
    %491 = vector.extract_strided_slice %486 {offsets = [0, 96], sizes = [2, 32], strides = [1, 1]} : vector<2x128xf32> to vector<2x32xf32>
    %492 = arith.mulf %489, %478 : vector<2x32xf32>
    %493 = arith.mulf %488, %490 : vector<2x32xf32>
    %494 = arith.addf %492, %493 : vector<2x32xf32>
    %495 = math.tanh %494 : vector<2x32xf32>
    %496 = arith.mulf %491, %495 : vector<2x32xf32>
    %497 = arith.addf %496, %112 : vector<2x32xf32>
    %c0_224 = arith.constant 0 : index
    %c1_225 = arith.constant 1 : index
    %c0_226 = arith.constant 0 : index
    %c0_227 = arith.constant 0 : index
    %498 = vector.load %arg5[%c0_224, %c1_225, %c0_226, %c0_227] : memref<2x2x2x256xf32, #tpu.memory_space<vmem>>, vector<1x1x2x32xf32>
    %499 = vector.shape_cast %498 : vector<1x1x2x32xf32> to vector<2x32xf32>
    %500 = vector.shape_cast %497 : vector<2x32xf32> to vector<1x1x2x32xf32>
    tpu.vector_store %arg5[%c0_224, %c1_225, %c0_226, %c0_227], %500 {strides = array<i32>} : memref<2x2x2x256xf32, #tpu.memory_space<vmem>>, vector<1x1x2x32xf32>,
    %cst_228 = arith.constant dense<0.000000e+00> : vector<2x128xf32>
    %501 = tpu.matmul %477, %423, %cst_228 {dimension_numbers = #tpu.dot_dimension_numbers<[1], [0], [0], [1], [0, 0, 1, 1], [], []>} : vector<2x32xf32>, vector<32x128xf32>, vector<2x128xf32> -> vector<2x128xf32>
    %502 = arith.addf %454, %501 : vector<2x128xf32>
    %503 = arith.negf %502 : vector<2x128xf32>
    %504 = math.exp %503 : vector<2x128xf32>
    %cst_229 = arith.constant 1.000000e+00 : f32
    %505 = vector.broadcast %cst_229 : f32 to vector<2x128xf32>
    %506 = arith.addf %505, %504 : vector<2x128xf32>
    %507 = arith.divf %505, %506 : vector<2x128xf32>
    %508 = math.tanh %502 : vector<2x128xf32>
    %509 = vector.extract_strided_slice %507 {offsets = [0, 0], sizes = [2, 32], strides = [1, 1]} : vector<2x128xf32> to vector<2x32xf32>
    %510 = vector.extract_strided_slice %507 {offsets = [0, 32], sizes = [2, 32], strides = [1, 1]} : vector<2x128xf32> to vector<2x32xf32>
    %511 = vector.extract_strided_slice %508 {offsets = [0, 64], sizes = [2, 32], strides = [1, 1]} : vector<2x128xf32> to vector<2x32xf32>
    %512 = vector.extract_strided_slice %507 {offsets = [0, 96], sizes = [2, 32], strides = [1, 1]} : vector<2x128xf32> to vector<2x32xf32>
    %513 = arith.mulf %510, %479 : vector<2x32xf32>
    %514 = arith.mulf %509, %511 : vector<2x32xf32>
    %515 = arith.addf %513, %514 : vector<2x32xf32>
    %516 = math.tanh %515 : vector<2x32xf32>
    %517 = arith.mulf %512, %516 : vector<2x32xf32>
    %518 = arith.addf %517, %132 : vector<2x32xf32>
    %c1_230 = arith.constant 1 : index
    %c1_231 = arith.constant 1 : index
    %c0_232 = arith.constant 0 : index
    %c0_233 = arith.constant 0 : index
    %519 = vector.load %arg5[%c1_230, %c1_231, %c0_232, %c0_233] : memref<2x2x2x256xf32, #tpu.memory_space<vmem>>, vector<1x1x2x32xf32>
    %520 = vector.shape_cast %519 : vector<1x1x2x32xf32> to vector<2x32xf32>
    %521 = vector.shape_cast %518 : vector<2x32xf32> to vector<1x1x2x32xf32>
    tpu.vector_store %arg5[%c1_230, %c1_231, %c0_232, %c0_233], %521 {strides = array<i32>} : memref<2x2x2x256xf32, #tpu.memory_space<vmem>>, vector<1x1x2x32xf32>,
    %cst_234 = arith.constant dense<0.000000e+00> : vector<2x128xf32>
    %522 = tpu.matmul %496, %421, %cst_234 {dimension_numbers = #tpu.dot_dimension_numbers<[1], [0], [0], [1], [0, 0, 1, 1], [], []>} : vector<2x32xf32>, vector<32x128xf32>, vector<2x128xf32> -> vector<2x128xf32>
    %523 = arith.addf %433, %522 : vector<2x128xf32>
    %524 = arith.negf %523 : vector<2x128xf32>
    %525 = math.exp %524 : vector<2x128xf32>
    %cst_235 = arith.constant 1.000000e+00 : f32
    %526 = vector.broadcast %cst_235 : f32 to vector<2x128xf32>
    %527 = arith.addf %526, %525 : vector<2x128xf32>
    %528 = arith.divf %526, %527 : vector<2x128xf32>
    %529 = math.tanh %523 : vector<2x128xf32>
    %530 = vector.extract_strided_slice %528 {offsets = [0, 0], sizes = [2, 32], strides = [1, 1]} : vector<2x128xf32> to vector<2x32xf32>
    %531 = vector.extract_strided_slice %528 {offsets = [0, 32], sizes = [2, 32], strides = [1, 1]} : vector<2x128xf32> to vector<2x32xf32>
    %532 = vector.extract_strided_slice %529 {offsets = [0, 64], sizes = [2, 32], strides = [1, 1]} : vector<2x128xf32> to vector<2x32xf32>
    %533 = vector.extract_strided_slice %528 {offsets = [0, 96], sizes = [2, 32], strides = [1, 1]} : vector<2x128xf32> to vector<2x32xf32>
    %534 = arith.mulf %531, %494 : vector<2x32xf32>
    %535 = arith.mulf %530, %532 : vector<2x32xf32>
    %536 = arith.addf %534, %535 : vector<2x32xf32>
    %537 = math.tanh %536 : vector<2x32xf32>
    %538 = arith.mulf %533, %537 : vector<2x32xf32>
    %539 = arith.addf %538, %152 : vector<2x32xf32>
    %c0_236 = arith.constant 0 : index
    %c1_237 = arith.constant 1 : index
    %c0_238 = arith.constant 0 : index
    %c32_239 = arith.constant 32 : index
    %540 = vector.load %arg5[%c0_236, %c1_237, %c0_238, %c32_239] : memref<2x2x2x256xf32, #tpu.memory_space<vmem>>, vector<1x1x2x32xf32>
    %541 = vector.shape_cast %540 : vector<1x1x2x32xf32> to vector<2x32xf32>
    %542 = vector.shape_cast %539 : vector<2x32xf32> to vector<1x1x2x32xf32>
    tpu.vector_store %arg5[%c0_236, %c1_237, %c0_238, %c32_239], %542 {strides = array<i32>} : memref<2x2x2x256xf32, #tpu.memory_space<vmem>>, vector<1x1x2x32xf32>,
    %cst_240 = arith.constant dense<0.000000e+00> : vector<2x128xf32>
    %543 = tpu.matmul %517, %423, %cst_240 {dimension_numbers = #tpu.dot_dimension_numbers<[1], [0], [0], [1], [0, 0, 1, 1], [], []>} : vector<2x32xf32>, vector<32x128xf32>, vector<2x128xf32> -> vector<2x128xf32>
    %544 = arith.addf %457, %543 : vector<2x128xf32>
    %545 = arith.negf %544 : vector<2x128xf32>
    %546 = math.exp %545 : vector<2x128xf32>
    %cst_241 = arith.constant 1.000000e+00 : f32
    %547 = vector.broadcast %cst_241 : f32 to vector<2x128xf32>
    %548 = arith.addf %547, %546 : vector<2x128xf32>
    %549 = arith.divf %547, %548 : vector<2x128xf32>
    %550 = math.tanh %544 : vector<2x128xf32>
    %551 = vector.extract_strided_slice %549 {offsets = [0, 0], sizes = [2, 32], strides = [1, 1]} : vector<2x128xf32> to vector<2x32xf32>
    %552 = vector.extract_strided_slice %549 {offsets = [0, 32], sizes = [2, 32], strides = [1, 1]} : vector<2x128xf32> to vector<2x32xf32>
    %553 = vector.extract_strided_slice %550 {offsets = [0, 64], sizes = [2, 32], strides = [1, 1]} : vector<2x128xf32> to vector<2x32xf32>
    %554 = vector.extract_strided_slice %549 {offsets = [0, 96], sizes = [2, 32], strides = [1, 1]} : vector<2x128xf32> to vector<2x32xf32>
    %555 = arith.mulf %552, %515 : vector<2x32xf32>
    %556 = arith.mulf %551, %553 : vector<2x32xf32>
    %557 = arith.addf %555, %556 : vector<2x32xf32>
    %558 = math.tanh %557 : vector<2x32xf32>
    %559 = arith.mulf %554, %558 : vector<2x32xf32>
    %560 = arith.addf %559, %172 : vector<2x32xf32>
    %c1_242 = arith.constant 1 : index
    %c1_243 = arith.constant 1 : index
    %c0_244 = arith.constant 0 : index
    %c32_245 = arith.constant 32 : index
    %561 = vector.load %arg5[%c1_242, %c1_243, %c0_244, %c32_245] : memref<2x2x2x256xf32, #tpu.memory_space<vmem>>, vector<1x1x2x32xf32>
    %562 = vector.shape_cast %561 : vector<1x1x2x32xf32> to vector<2x32xf32>
    %563 = vector.shape_cast %560 : vector<2x32xf32> to vector<1x1x2x32xf32>
    tpu.vector_store %arg5[%c1_242, %c1_243, %c0_244, %c32_245], %563 {strides = array<i32>} : memref<2x2x2x256xf32, #tpu.memory_space<vmem>>, vector<1x1x2x32xf32>,
    %cst_246 = arith.constant dense<0.000000e+00> : vector<2x128xf32>
    %564 = tpu.matmul %538, %421, %cst_246 {dimension_numbers = #tpu.dot_dimension_numbers<[1], [0], [0], [1], [0, 0, 1, 1], [], []>} : vector<2x32xf32>, vector<32x128xf32>, vector<2x128xf32> -> vector<2x128xf32>
    %565 = arith.addf %436, %564 : vector<2x128xf32>
    %566 = arith.negf %565 : vector<2x128xf32>
    %567 = math.exp %566 : vector<2x128xf32>
    %cst_247 = arith.constant 1.000000e+00 : f32
    %568 = vector.broadcast %cst_247 : f32 to vector<2x128xf32>
    %569 = arith.addf %568, %567 : vector<2x128xf32>
    %570 = arith.divf %568, %569 : vector<2x128xf32>
    %571 = math.tanh %565 : vector<2x128xf32>
    %572 = vector.extract_strided_slice %570 {offsets = [0, 0], sizes = [2, 32], strides = [1, 1]} : vector<2x128xf32> to vector<2x32xf32>
    %573 = vector.extract_strided_slice %570 {offsets = [0, 32], sizes = [2, 32], strides = [1, 1]} : vector<2x128xf32> to vector<2x32xf32>
    %574 = vector.extract_strided_slice %571 {offsets = [0, 64], sizes = [2, 32], strides = [1, 1]} : vector<2x128xf32> to vector<2x32xf32>
    %575 = vector.extract_strided_slice %570 {offsets = [0, 96], sizes = [2, 32], strides = [1, 1]} : vector<2x128xf32> to vector<2x32xf32>
    %576 = arith.mulf %573, %536 : vector<2x32xf32>
    %577 = arith.mulf %572, %574 : vector<2x32xf32>
    %578 = arith.addf %576, %577 : vector<2x32xf32>
    %579 = math.tanh %578 : vector<2x32xf32>
    %580 = arith.mulf %575, %579 : vector<2x32xf32>
    %581 = arith.addf %580, %192 : vector<2x32xf32>
    %c0_248 = arith.constant 0 : index
    %c1_249 = arith.constant 1 : index
    %c0_250 = arith.constant 0 : index
    %c64_251 = arith.constant 64 : index
    %582 = vector.load %arg5[%c0_248, %c1_249, %c0_250, %c64_251] : memref<2x2x2x256xf32, #tpu.memory_space<vmem>>, vector<1x1x2x32xf32>
    %583 = vector.shape_cast %582 : vector<1x1x2x32xf32> to vector<2x32xf32>
    %584 = vector.shape_cast %581 : vector<2x32xf32> to vector<1x1x2x32xf32>
    tpu.vector_store %arg5[%c0_248, %c1_249, %c0_250, %c64_251], %584 {strides = array<i32>} : memref<2x2x2x256xf32, #tpu.memory_space<vmem>>, vector<1x1x2x32xf32>,
    %cst_252 = arith.constant dense<0.000000e+00> : vector<2x128xf32>
    %585 = tpu.matmul %559, %423, %cst_252 {dimension_numbers = #tpu.dot_dimension_numbers<[1], [0], [0], [1], [0, 0, 1, 1], [], []>} : vector<2x32xf32>, vector<32x128xf32>, vector<2x128xf32> -> vector<2x128xf32>
    %586 = arith.addf %460, %585 : vector<2x128xf32>
    %587 = arith.negf %586 : vector<2x128xf32>
    %588 = math.exp %587 : vector<2x128xf32>
    %cst_253 = arith.constant 1.000000e+00 : f32
    %589 = vector.broadcast %cst_253 : f32 to vector<2x128xf32>
    %590 = arith.addf %589, %588 : vector<2x128xf32>
    %591 = arith.divf %589, %590 : vector<2x128xf32>
    %592 = math.tanh %586 : vector<2x128xf32>
    %593 = vector.extract_strided_slice %591 {offsets = [0, 0], sizes = [2, 32], strides = [1, 1]} : vector<2x128xf32> to vector<2x32xf32>
    %594 = vector.extract_strided_slice %591 {offsets = [0, 32], sizes = [2, 32], strides = [1, 1]} : vector<2x128xf32> to vector<2x32xf32>
    %595 = vector.extract_strided_slice %592 {offsets = [0, 64], sizes = [2, 32], strides = [1, 1]} : vector<2x128xf32> to vector<2x32xf32>
    %596 = vector.extract_strided_slice %591 {offsets = [0, 96], sizes = [2, 32], strides = [1, 1]} : vector<2x128xf32> to vector<2x32xf32>
    %597 = arith.mulf %594, %557 : vector<2x32xf32>
    %598 = arith.mulf %593, %595 : vector<2x32xf32>
    %599 = arith.addf %597, %598 : vector<2x32xf32>
    %600 = math.tanh %599 : vector<2x32xf32>
    %601 = arith.mulf %596, %600 : vector<2x32xf32>
    %602 = arith.addf %601, %212 : vector<2x32xf32>
    %c1_254 = arith.constant 1 : index
    %c1_255 = arith.constant 1 : index
    %c0_256 = arith.constant 0 : index
    %c64_257 = arith.constant 64 : index
    %603 = vector.load %arg5[%c1_254, %c1_255, %c0_256, %c64_257] : memref<2x2x2x256xf32, #tpu.memory_space<vmem>>, vector<1x1x2x32xf32>
    %604 = vector.shape_cast %603 : vector<1x1x2x32xf32> to vector<2x32xf32>
    %605 = vector.shape_cast %602 : vector<2x32xf32> to vector<1x1x2x32xf32>
    tpu.vector_store %arg5[%c1_254, %c1_255, %c0_256, %c64_257], %605 {strides = array<i32>} : memref<2x2x2x256xf32, #tpu.memory_space<vmem>>, vector<1x1x2x32xf32>,
    %cst_258 = arith.constant dense<0.000000e+00> : vector<2x128xf32>
    %606 = tpu.matmul %580, %421, %cst_258 {dimension_numbers = #tpu.dot_dimension_numbers<[1], [0], [0], [1], [0, 0, 1, 1], [], []>} : vector<2x32xf32>, vector<32x128xf32>, vector<2x128xf32> -> vector<2x128xf32>
    %607 = arith.addf %439, %606 : vector<2x128xf32>
    %608 = arith.negf %607 : vector<2x128xf32>
    %609 = math.exp %608 : vector<2x128xf32>
    %cst_259 = arith.constant 1.000000e+00 : f32
    %610 = vector.broadcast %cst_259 : f32 to vector<2x128xf32>
    %611 = arith.addf %610, %609 : vector<2x128xf32>
    %612 = arith.divf %610, %611 : vector<2x128xf32>
    %613 = math.tanh %607 : vector<2x128xf32>
    %614 = vector.extract_strided_slice %612 {offsets = [0, 0], sizes = [2, 32], strides = [1, 1]} : vector<2x128xf32> to vector<2x32xf32>
    %615 = vector.extract_strided_slice %612 {offsets = [0, 32], sizes = [2, 32], strides = [1, 1]} : vector<2x128xf32> to vector<2x32xf32>
    %616 = vector.extract_strided_slice %613 {offsets = [0, 64], sizes = [2, 32], strides = [1, 1]} : vector<2x128xf32> to vector<2x32xf32>
    %617 = vector.extract_strided_slice %612 {offsets = [0, 96], sizes = [2, 32], strides = [1, 1]} : vector<2x128xf32> to vector<2x32xf32>
    %618 = arith.mulf %615, %578 : vector<2x32xf32>
    %619 = arith.mulf %614, %616 : vector<2x32xf32>
    %620 = arith.addf %618, %619 : vector<2x32xf32>
    %621 = math.tanh %620 : vector<2x32xf32>
    %622 = arith.mulf %617, %621 : vector<2x32xf32>
    %623 = arith.addf %622, %232 : vector<2x32xf32>
    %c0_260 = arith.constant 0 : index
    %c1_261 = arith.constant 1 : index
    %c0_262 = arith.constant 0 : index
    %c96_263 = arith.constant 96 : index
    %624 = vector.load %arg5[%c0_260, %c1_261, %c0_262, %c96_263] : memref<2x2x2x256xf32, #tpu.memory_space<vmem>>, vector<1x1x2x32xf32>
    %625 = vector.shape_cast %624 : vector<1x1x2x32xf32> to vector<2x32xf32>
    %626 = vector.shape_cast %623 : vector<2x32xf32> to vector<1x1x2x32xf32>
    tpu.vector_store %arg5[%c0_260, %c1_261, %c0_262, %c96_263], %626 {strides = array<i32>} : memref<2x2x2x256xf32, #tpu.memory_space<vmem>>, vector<1x1x2x32xf32>,
    %cst_264 = arith.constant dense<0.000000e+00> : vector<2x128xf32>
    %627 = tpu.matmul %601, %423, %cst_264 {dimension_numbers = #tpu.dot_dimension_numbers<[1], [0], [0], [1], [0, 0, 1, 1], [], []>} : vector<2x32xf32>, vector<32x128xf32>, vector<2x128xf32> -> vector<2x128xf32>
    %628 = arith.addf %463, %627 : vector<2x128xf32>
    %629 = arith.negf %628 : vector<2x128xf32>
    %630 = math.exp %629 : vector<2x128xf32>
    %cst_265 = arith.constant 1.000000e+00 : f32
    %631 = vector.broadcast %cst_265 : f32 to vector<2x128xf32>
    %632 = arith.addf %631, %630 : vector<2x128xf32>
    %633 = arith.divf %631, %632 : vector<2x128xf32>
    %634 = math.tanh %628 : vector<2x128xf32>
    %635 = vector.extract_strided_slice %633 {offsets = [0, 0], sizes = [2, 32], strides = [1, 1]} : vector<2x128xf32> to vector<2x32xf32>
    %636 = vector.extract_strided_slice %633 {offsets = [0, 32], sizes = [2, 32], strides = [1, 1]} : vector<2x128xf32> to vector<2x32xf32>
    %637 = vector.extract_strided_slice %634 {offsets = [0, 64], sizes = [2, 32], strides = [1, 1]} : vector<2x128xf32> to vector<2x32xf32>
    %638 = vector.extract_strided_slice %633 {offsets = [0, 96], sizes = [2, 32], strides = [1, 1]} : vector<2x128xf32> to vector<2x32xf32>
    %639 = arith.mulf %636, %599 : vector<2x32xf32>
    %640 = arith.mulf %635, %637 : vector<2x32xf32>
    %641 = arith.addf %639, %640 : vector<2x32xf32>
    %642 = math.tanh %641 : vector<2x32xf32>
    %643 = arith.mulf %638, %642 : vector<2x32xf32>
    %644 = arith.addf %643, %252 : vector<2x32xf32>
    %c1_266 = arith.constant 1 : index
    %c1_267 = arith.constant 1 : index
    %c0_268 = arith.constant 0 : index
    %c96_269 = arith.constant 96 : index
    %645 = vector.load %arg5[%c1_266, %c1_267, %c0_268, %c96_269] : memref<2x2x2x256xf32, #tpu.memory_space<vmem>>, vector<1x1x2x32xf32>
    %646 = vector.shape_cast %645 : vector<1x1x2x32xf32> to vector<2x32xf32>
    %647 = vector.shape_cast %644 : vector<2x32xf32> to vector<1x1x2x32xf32>
    tpu.vector_store %arg5[%c1_266, %c1_267, %c0_268, %c96_269], %647 {strides = array<i32>} : memref<2x2x2x256xf32, #tpu.memory_space<vmem>>, vector<1x1x2x32xf32>,
    %cst_270 = arith.constant dense<0.000000e+00> : vector<2x128xf32>
    %648 = tpu.matmul %622, %421, %cst_270 {dimension_numbers = #tpu.dot_dimension_numbers<[1], [0], [0], [1], [0, 0, 1, 1], [], []>} : vector<2x32xf32>, vector<32x128xf32>, vector<2x128xf32> -> vector<2x128xf32>
    %649 = arith.addf %442, %648 : vector<2x128xf32>
    %650 = arith.negf %649 : vector<2x128xf32>
    %651 = math.exp %650 : vector<2x128xf32>
    %cst_271 = arith.constant 1.000000e+00 : f32
    %652 = vector.broadcast %cst_271 : f32 to vector<2x128xf32>
    %653 = arith.addf %652, %651 : vector<2x128xf32>
    %654 = arith.divf %652, %653 : vector<2x128xf32>
    %655 = math.tanh %649 : vector<2x128xf32>
    %656 = vector.extract_strided_slice %654 {offsets = [0, 0], sizes = [2, 32], strides = [1, 1]} : vector<2x128xf32> to vector<2x32xf32>
    %657 = vector.extract_strided_slice %654 {offsets = [0, 32], sizes = [2, 32], strides = [1, 1]} : vector<2x128xf32> to vector<2x32xf32>
    %658 = vector.extract_strided_slice %655 {offsets = [0, 64], sizes = [2, 32], strides = [1, 1]} : vector<2x128xf32> to vector<2x32xf32>
    %659 = vector.extract_strided_slice %654 {offsets = [0, 96], sizes = [2, 32], strides = [1, 1]} : vector<2x128xf32> to vector<2x32xf32>
    %660 = arith.mulf %657, %620 : vector<2x32xf32>
    %661 = arith.mulf %656, %658 : vector<2x32xf32>
    %662 = arith.addf %660, %661 : vector<2x32xf32>
    %663 = math.tanh %662 : vector<2x32xf32>
    %664 = arith.mulf %659, %663 : vector<2x32xf32>
    %665 = arith.addf %664, %272 : vector<2x32xf32>
    %c0_272 = arith.constant 0 : index
    %c1_273 = arith.constant 1 : index
    %c0_274 = arith.constant 0 : index
    %c128_275 = arith.constant 128 : index
    %666 = vector.load %arg5[%c0_272, %c1_273, %c0_274, %c128_275] : memref<2x2x2x256xf32, #tpu.memory_space<vmem>>, vector<1x1x2x32xf32>
    %667 = vector.shape_cast %666 : vector<1x1x2x32xf32> to vector<2x32xf32>
    %668 = vector.shape_cast %665 : vector<2x32xf32> to vector<1x1x2x32xf32>
    tpu.vector_store %arg5[%c0_272, %c1_273, %c0_274, %c128_275], %668 {strides = array<i32>} : memref<2x2x2x256xf32, #tpu.memory_space<vmem>>, vector<1x1x2x32xf32>,
    %cst_276 = arith.constant dense<0.000000e+00> : vector<2x128xf32>
    %669 = tpu.matmul %643, %423, %cst_276 {dimension_numbers = #tpu.dot_dimension_numbers<[1], [0], [0], [1], [0, 0, 1, 1], [], []>} : vector<2x32xf32>, vector<32x128xf32>, vector<2x128xf32> -> vector<2x128xf32>
    %670 = arith.addf %466, %669 : vector<2x128xf32>
    %671 = arith.negf %670 : vector<2x128xf32>
    %672 = math.exp %671 : vector<2x128xf32>
    %cst_277 = arith.constant 1.000000e+00 : f32
    %673 = vector.broadcast %cst_277 : f32 to vector<2x128xf32>
    %674 = arith.addf %673, %672 : vector<2x128xf32>
    %675 = arith.divf %673, %674 : vector<2x128xf32>
    %676 = math.tanh %670 : vector<2x128xf32>
    %677 = vector.extract_strided_slice %675 {offsets = [0, 0], sizes = [2, 32], strides = [1, 1]} : vector<2x128xf32> to vector<2x32xf32>
    %678 = vector.extract_strided_slice %675 {offsets = [0, 32], sizes = [2, 32], strides = [1, 1]} : vector<2x128xf32> to vector<2x32xf32>
    %679 = vector.extract_strided_slice %676 {offsets = [0, 64], sizes = [2, 32], strides = [1, 1]} : vector<2x128xf32> to vector<2x32xf32>
    %680 = vector.extract_strided_slice %675 {offsets = [0, 96], sizes = [2, 32], strides = [1, 1]} : vector<2x128xf32> to vector<2x32xf32>
    %681 = arith.mulf %678, %641 : vector<2x32xf32>
    %682 = arith.mulf %677, %679 : vector<2x32xf32>
    %683 = arith.addf %681, %682 : vector<2x32xf32>
    %684 = math.tanh %683 : vector<2x32xf32>
    %685 = arith.mulf %680, %684 : vector<2x32xf32>
    %686 = arith.addf %685, %292 : vector<2x32xf32>
    %c1_278 = arith.constant 1 : index
    %c1_279 = arith.constant 1 : index
    %c0_280 = arith.constant 0 : index
    %c128_281 = arith.constant 128 : index
    %687 = vector.load %arg5[%c1_278, %c1_279, %c0_280, %c128_281] : memref<2x2x2x256xf32, #tpu.memory_space<vmem>>, vector<1x1x2x32xf32>
    %688 = vector.shape_cast %687 : vector<1x1x2x32xf32> to vector<2x32xf32>
    %689 = vector.shape_cast %686 : vector<2x32xf32> to vector<1x1x2x32xf32>
    tpu.vector_store %arg5[%c1_278, %c1_279, %c0_280, %c128_281], %689 {strides = array<i32>} : memref<2x2x2x256xf32, #tpu.memory_space<vmem>>, vector<1x1x2x32xf32>,
    %cst_282 = arith.constant dense<0.000000e+00> : vector<2x128xf32>
    %690 = tpu.matmul %664, %421, %cst_282 {dimension_numbers = #tpu.dot_dimension_numbers<[1], [0], [0], [1], [0, 0, 1, 1], [], []>} : vector<2x32xf32>, vector<32x128xf32>, vector<2x128xf32> -> vector<2x128xf32>
    %691 = arith.addf %445, %690 : vector<2x128xf32>
    %692 = arith.negf %691 : vector<2x128xf32>
    %693 = math.exp %692 : vector<2x128xf32>
    %cst_283 = arith.constant 1.000000e+00 : f32
    %694 = vector.broadcast %cst_283 : f32 to vector<2x128xf32>
    %695 = arith.addf %694, %693 : vector<2x128xf32>
    %696 = arith.divf %694, %695 : vector<2x128xf32>
    %697 = math.tanh %691 : vector<2x128xf32>
    %698 = vector.extract_strided_slice %696 {offsets = [0, 0], sizes = [2, 32], strides = [1, 1]} : vector<2x128xf32> to vector<2x32xf32>
    %699 = vector.extract_strided_slice %696 {offsets = [0, 32], sizes = [2, 32], strides = [1, 1]} : vector<2x128xf32> to vector<2x32xf32>
    %700 = vector.extract_strided_slice %697 {offsets = [0, 64], sizes = [2, 32], strides = [1, 1]} : vector<2x128xf32> to vector<2x32xf32>
    %701 = vector.extract_strided_slice %696 {offsets = [0, 96], sizes = [2, 32], strides = [1, 1]} : vector<2x128xf32> to vector<2x32xf32>
    %702 = arith.mulf %699, %662 : vector<2x32xf32>
    %703 = arith.mulf %698, %700 : vector<2x32xf32>
    %704 = arith.addf %702, %703 : vector<2x32xf32>
    %705 = math.tanh %704 : vector<2x32xf32>
    %706 = arith.mulf %701, %705 : vector<2x32xf32>
    %707 = arith.addf %706, %312 : vector<2x32xf32>
    %c0_284 = arith.constant 0 : index
    %c1_285 = arith.constant 1 : index
    %c0_286 = arith.constant 0 : index
    %c160_287 = arith.constant 160 : index
    %708 = vector.load %arg5[%c0_284, %c1_285, %c0_286, %c160_287] : memref<2x2x2x256xf32, #tpu.memory_space<vmem>>, vector<1x1x2x32xf32>
    %709 = vector.shape_cast %708 : vector<1x1x2x32xf32> to vector<2x32xf32>
    %710 = vector.shape_cast %707 : vector<2x32xf32> to vector<1x1x2x32xf32>
    tpu.vector_store %arg5[%c0_284, %c1_285, %c0_286, %c160_287], %710 {strides = array<i32>} : memref<2x2x2x256xf32, #tpu.memory_space<vmem>>, vector<1x1x2x32xf32>,
    %cst_288 = arith.constant dense<0.000000e+00> : vector<2x128xf32>
    %711 = tpu.matmul %685, %423, %cst_288 {dimension_numbers = #tpu.dot_dimension_numbers<[1], [0], [0], [1], [0, 0, 1, 1], [], []>} : vector<2x32xf32>, vector<32x128xf32>, vector<2x128xf32> -> vector<2x128xf32>
    %712 = arith.addf %469, %711 : vector<2x128xf32>
    %713 = arith.negf %712 : vector<2x128xf32>
    %714 = math.exp %713 : vector<2x128xf32>
    %cst_289 = arith.constant 1.000000e+00 : f32
    %715 = vector.broadcast %cst_289 : f32 to vector<2x128xf32>
    %716 = arith.addf %715, %714 : vector<2x128xf32>
    %717 = arith.divf %715, %716 : vector<2x128xf32>
    %718 = math.tanh %712 : vector<2x128xf32>
    %719 = vector.extract_strided_slice %717 {offsets = [0, 0], sizes = [2, 32], strides = [1, 1]} : vector<2x128xf32> to vector<2x32xf32>
    %720 = vector.extract_strided_slice %717 {offsets = [0, 32], sizes = [2, 32], strides = [1, 1]} : vector<2x128xf32> to vector<2x32xf32>
    %721 = vector.extract_strided_slice %718 {offsets = [0, 64], sizes = [2, 32], strides = [1, 1]} : vector<2x128xf32> to vector<2x32xf32>
    %722 = vector.extract_strided_slice %717 {offsets = [0, 96], sizes = [2, 32], strides = [1, 1]} : vector<2x128xf32> to vector<2x32xf32>
    %723 = arith.mulf %720, %683 : vector<2x32xf32>
    %724 = arith.mulf %719, %721 : vector<2x32xf32>
    %725 = arith.addf %723, %724 : vector<2x32xf32>
    %726 = math.tanh %725 : vector<2x32xf32>
    %727 = arith.mulf %722, %726 : vector<2x32xf32>
    %728 = arith.addf %727, %332 : vector<2x32xf32>
    %c1_290 = arith.constant 1 : index
    %c1_291 = arith.constant 1 : index
    %c0_292 = arith.constant 0 : index
    %c160_293 = arith.constant 160 : index
    %729 = vector.load %arg5[%c1_290, %c1_291, %c0_292, %c160_293] : memref<2x2x2x256xf32, #tpu.memory_space<vmem>>, vector<1x1x2x32xf32>
    %730 = vector.shape_cast %729 : vector<1x1x2x32xf32> to vector<2x32xf32>
    %731 = vector.shape_cast %728 : vector<2x32xf32> to vector<1x1x2x32xf32>
    tpu.vector_store %arg5[%c1_290, %c1_291, %c0_292, %c160_293], %731 {strides = array<i32>} : memref<2x2x2x256xf32, #tpu.memory_space<vmem>>, vector<1x1x2x32xf32>,
    %cst_294 = arith.constant dense<0.000000e+00> : vector<2x128xf32>
    %732 = tpu.matmul %706, %421, %cst_294 {dimension_numbers = #tpu.dot_dimension_numbers<[1], [0], [0], [1], [0, 0, 1, 1], [], []>} : vector<2x32xf32>, vector<32x128xf32>, vector<2x128xf32> -> vector<2x128xf32>
    %733 = arith.addf %448, %732 : vector<2x128xf32>
    %734 = arith.negf %733 : vector<2x128xf32>
    %735 = math.exp %734 : vector<2x128xf32>
    %cst_295 = arith.constant 1.000000e+00 : f32
    %736 = vector.broadcast %cst_295 : f32 to vector<2x128xf32>
    %737 = arith.addf %736, %735 : vector<2x128xf32>
    %738 = arith.divf %736, %737 : vector<2x128xf32>
    %739 = math.tanh %733 : vector<2x128xf32>
    %740 = vector.extract_strided_slice %738 {offsets = [0, 0], sizes = [2, 32], strides = [1, 1]} : vector<2x128xf32> to vector<2x32xf32>
    %741 = vector.extract_strided_slice %738 {offsets = [0, 32], sizes = [2, 32], strides = [1, 1]} : vector<2x128xf32> to vector<2x32xf32>
    %742 = vector.extract_strided_slice %739 {offsets = [0, 64], sizes = [2, 32], strides = [1, 1]} : vector<2x128xf32> to vector<2x32xf32>
    %743 = vector.extract_strided_slice %738 {offsets = [0, 96], sizes = [2, 32], strides = [1, 1]} : vector<2x128xf32> to vector<2x32xf32>
    %744 = arith.mulf %741, %704 : vector<2x32xf32>
    %745 = arith.mulf %740, %742 : vector<2x32xf32>
    %746 = arith.addf %744, %745 : vector<2x32xf32>
    %747 = math.tanh %746 : vector<2x32xf32>
    %748 = arith.mulf %743, %747 : vector<2x32xf32>
    %749 = arith.addf %748, %352 : vector<2x32xf32>
    %c0_296 = arith.constant 0 : index
    %c1_297 = arith.constant 1 : index
    %c0_298 = arith.constant 0 : index
    %c192_299 = arith.constant 192 : index
    %750 = vector.load %arg5[%c0_296, %c1_297, %c0_298, %c192_299] : memref<2x2x2x256xf32, #tpu.memory_space<vmem>>, vector<1x1x2x32xf32>
    %751 = vector.shape_cast %750 : vector<1x1x2x32xf32> to vector<2x32xf32>
    %752 = vector.shape_cast %749 : vector<2x32xf32> to vector<1x1x2x32xf32>
    tpu.vector_store %arg5[%c0_296, %c1_297, %c0_298, %c192_299], %752 {strides = array<i32>} : memref<2x2x2x256xf32, #tpu.memory_space<vmem>>, vector<1x1x2x32xf32>,
    %cst_300 = arith.constant dense<0.000000e+00> : vector<2x128xf32>
    %753 = tpu.matmul %727, %423, %cst_300 {dimension_numbers = #tpu.dot_dimension_numbers<[1], [0], [0], [1], [0, 0, 1, 1], [], []>} : vector<2x32xf32>, vector<32x128xf32>, vector<2x128xf32> -> vector<2x128xf32>
    %754 = arith.addf %472, %753 : vector<2x128xf32>
    %755 = arith.negf %754 : vector<2x128xf32>
    %756 = math.exp %755 : vector<2x128xf32>
    %cst_301 = arith.constant 1.000000e+00 : f32
    %757 = vector.broadcast %cst_301 : f32 to vector<2x128xf32>
    %758 = arith.addf %757, %756 : vector<2x128xf32>
    %759 = arith.divf %757, %758 : vector<2x128xf32>
    %760 = math.tanh %754 : vector<2x128xf32>
    %761 = vector.extract_strided_slice %759 {offsets = [0, 0], sizes = [2, 32], strides = [1, 1]} : vector<2x128xf32> to vector<2x32xf32>
    %762 = vector.extract_strided_slice %759 {offsets = [0, 32], sizes = [2, 32], strides = [1, 1]} : vector<2x128xf32> to vector<2x32xf32>
    %763 = vector.extract_strided_slice %760 {offsets = [0, 64], sizes = [2, 32], strides = [1, 1]} : vector<2x128xf32> to vector<2x32xf32>
    %764 = vector.extract_strided_slice %759 {offsets = [0, 96], sizes = [2, 32], strides = [1, 1]} : vector<2x128xf32> to vector<2x32xf32>
    %765 = arith.mulf %762, %725 : vector<2x32xf32>
    %766 = arith.mulf %761, %763 : vector<2x32xf32>
    %767 = arith.addf %765, %766 : vector<2x32xf32>
    %768 = math.tanh %767 : vector<2x32xf32>
    %769 = arith.mulf %764, %768 : vector<2x32xf32>
    %770 = arith.addf %769, %372 : vector<2x32xf32>
    %c1_302 = arith.constant 1 : index
    %c1_303 = arith.constant 1 : index
    %c0_304 = arith.constant 0 : index
    %c192_305 = arith.constant 192 : index
    %771 = vector.load %arg5[%c1_302, %c1_303, %c0_304, %c192_305] : memref<2x2x2x256xf32, #tpu.memory_space<vmem>>, vector<1x1x2x32xf32>
    %772 = vector.shape_cast %771 : vector<1x1x2x32xf32> to vector<2x32xf32>
    %773 = vector.shape_cast %770 : vector<2x32xf32> to vector<1x1x2x32xf32>
    tpu.vector_store %arg5[%c1_302, %c1_303, %c0_304, %c192_305], %773 {strides = array<i32>} : memref<2x2x2x256xf32, #tpu.memory_space<vmem>>, vector<1x1x2x32xf32>,
    %cst_306 = arith.constant dense<0.000000e+00> : vector<2x128xf32>
    %774 = tpu.matmul %748, %421, %cst_306 {dimension_numbers = #tpu.dot_dimension_numbers<[1], [0], [0], [1], [0, 0, 1, 1], [], []>} : vector<2x32xf32>, vector<32x128xf32>, vector<2x128xf32> -> vector<2x128xf32>
    %775 = arith.addf %451, %774 : vector<2x128xf32>
    %776 = arith.negf %775 : vector<2x128xf32>
    %777 = math.exp %776 : vector<2x128xf32>
    %cst_307 = arith.constant 1.000000e+00 : f32
    %778 = vector.broadcast %cst_307 : f32 to vector<2x128xf32>
    %779 = arith.addf %778, %777 : vector<2x128xf32>
    %780 = arith.divf %778, %779 : vector<2x128xf32>
    %781 = math.tanh %775 : vector<2x128xf32>
    %782 = vector.extract_strided_slice %780 {offsets = [0, 0], sizes = [2, 32], strides = [1, 1]} : vector<2x128xf32> to vector<2x32xf32>
    %783 = vector.extract_strided_slice %780 {offsets = [0, 32], sizes = [2, 32], strides = [1, 1]} : vector<2x128xf32> to vector<2x32xf32>
    %784 = vector.extract_strided_slice %781 {offsets = [0, 64], sizes = [2, 32], strides = [1, 1]} : vector<2x128xf32> to vector<2x32xf32>
    %785 = vector.extract_strided_slice %780 {offsets = [0, 96], sizes = [2, 32], strides = [1, 1]} : vector<2x128xf32> to vector<2x32xf32>
    %786 = arith.mulf %783, %746 : vector<2x32xf32>
    %787 = arith.mulf %782, %784 : vector<2x32xf32>
    %788 = arith.addf %786, %787 : vector<2x32xf32>
    %789 = math.tanh %788 : vector<2x32xf32>
    %790 = arith.mulf %785, %789 : vector<2x32xf32>
    %791 = arith.addf %790, %392 : vector<2x32xf32>
    %c0_308 = arith.constant 0 : index
    %c1_309 = arith.constant 1 : index
    %c0_310 = arith.constant 0 : index
    %c224_311 = arith.constant 224 : index
    %792 = vector.load %arg5[%c0_308, %c1_309, %c0_310, %c224_311] : memref<2x2x2x256xf32, #tpu.memory_space<vmem>>, vector<1x1x2x32xf32>
    %793 = vector.shape_cast %792 : vector<1x1x2x32xf32> to vector<2x32xf32>
    %794 = vector.shape_cast %791 : vector<2x32xf32> to vector<1x1x2x32xf32>
    tpu.vector_store %arg5[%c0_308, %c1_309, %c0_310, %c224_311], %794 {strides = array<i32>} : memref<2x2x2x256xf32, #tpu.memory_space<vmem>>, vector<1x1x2x32xf32>,
    %cst_312 = arith.constant dense<0.000000e+00> : vector<2x128xf32>
    %795 = tpu.matmul %769, %423, %cst_312 {dimension_numbers = #tpu.dot_dimension_numbers<[1], [0], [0], [1], [0, 0, 1, 1], [], []>} : vector<2x32xf32>, vector<32x128xf32>, vector<2x128xf32> -> vector<2x128xf32>
    %796 = arith.addf %475, %795 : vector<2x128xf32>
    %797 = arith.negf %796 : vector<2x128xf32>
    %798 = math.exp %797 : vector<2x128xf32>
    %cst_313 = arith.constant 1.000000e+00 : f32
    %799 = vector.broadcast %cst_313 : f32 to vector<2x128xf32>
    %800 = arith.addf %799, %798 : vector<2x128xf32>
    %801 = arith.divf %799, %800 : vector<2x128xf32>
    %802 = math.tanh %796 : vector<2x128xf32>
    %803 = vector.extract_strided_slice %801 {offsets = [0, 0], sizes = [2, 32], strides = [1, 1]} : vector<2x128xf32> to vector<2x32xf32>
    %804 = vector.extract_strided_slice %801 {offsets = [0, 32], sizes = [2, 32], strides = [1, 1]} : vector<2x128xf32> to vector<2x32xf32>
    %805 = vector.extract_strided_slice %802 {offsets = [0, 64], sizes = [2, 32], strides = [1, 1]} : vector<2x128xf32> to vector<2x32xf32>
    %806 = vector.extract_strided_slice %801 {offsets = [0, 96], sizes = [2, 32], strides = [1, 1]} : vector<2x128xf32> to vector<2x32xf32>
    %807 = arith.mulf %804, %767 : vector<2x32xf32>
    %808 = arith.mulf %803, %805 : vector<2x32xf32>
    %809 = arith.addf %807, %808 : vector<2x32xf32>
    %810 = math.tanh %809 : vector<2x32xf32>
    %811 = arith.mulf %806, %810 : vector<2x32xf32>
    %812 = arith.addf %811, %412 : vector<2x32xf32>
    %c1_314 = arith.constant 1 : index
    %c1_315 = arith.constant 1 : index
    %c0_316 = arith.constant 0 : index
    %c224_317 = arith.constant 224 : index
    %813 = vector.load %arg5[%c1_314, %c1_315, %c0_316, %c224_317] : memref<2x2x2x256xf32, #tpu.memory_space<vmem>>, vector<1x1x2x32xf32>
    %814 = vector.shape_cast %813 : vector<1x1x2x32xf32> to vector<2x32xf32>
    %815 = vector.shape_cast %812 : vector<2x32xf32> to vector<1x1x2x32xf32>
    tpu.vector_store %arg5[%c1_314, %c1_315, %c0_316, %c224_317], %815 {strides = array<i32>} : memref<2x2x2x256xf32, #tpu.memory_space<vmem>>, vector<1x1x2x32xf32>,
    return
  }
  func.func @transform_0(%arg0: i32) -> (i32, i32, i32) {
    %c0_i32 = arith.constant 0 : i32
    %c0_i32_0 = arith.constant 0 : i32
    %c0_i32_1 = arith.constant 0 : i32
    return %arg0, %c0_i32, %c0_i32_0 : i32, i32, i32
  }
  func.func @transform_1(%arg0: i32) -> (i32, i32, i32, i32) {
    %c0_i32 = arith.constant 0 : i32
    %c0_i32_0 = arith.constant 0 : i32
    %c0_i32_1 = arith.constant 0 : i32
    %c0_i32_2 = arith.constant 0 : i32
    return %arg0, %c0_i32, %c0_i32_0, %c0_i32_1 : i32, i32, i32, i32
  }
  func.func @transform_2(%arg0: i32) -> (i32, i32, i32, i32) {
    %c0_i32 = arith.constant 0 : i32
    %c0_i32_0 = arith.constant 0 : i32
    %c0_i32_1 = arith.constant 0 : i32
    %c0_i32_2 = arith.constant 0 : i32
    return %arg0, %c0_i32, %c0_i32_0, %c0_i32_1 : i32, i32, i32, i32
  }
  func.func @transform_3(%arg0: i32) -> (i32, i32, i32, i32) {
    %c0_i32 = arith.constant 0 : i32
    %c0_i32_0 = arith.constant 0 : i32
    %c0_i32_1 = arith.constant 0 : i32
    %c0_i32_2 = arith.constant 0 : i32
    return %arg0, %c0_i32, %c0_i32_0, %c0_i32_1 : i32, i32, i32, i32
  }
  func.func @transform_4(%arg0: i32) -> (i32, i32, i32, i32) {
    %c0_i32 = arith.constant 0 : i32
    %c0_i32_0 = arith.constant 0 : i32
    %c0_i32_1 = arith.constant 0 : i32
    %c0_i32_2 = arith.constant 0 : i32
    return %arg0, %c0_i32, %c0_i32_0, %c0_i32_1 : i32, i32, i32, i32
  }
}

</mosaic_0001>

<llo_original>
// kernel: tpu_custom_call.1
$region0: #{tpu_custom_call.1}
  #allocation0 [shape = 'u32[]', space=smem, size = 0x4, offset = 0x4, fixed_abs, tag = 'smem constant byte address 0x4 - core index']
  #allocation1 [shape = 'u32[72,128]{1,0:T(1,128)}', space=vmem, size = 0x9000, scoped, tag = 'internal scratch']
  %s0 = inlined_call_operand.hbm [shape: f32[2,2,256], index: 0, kind: input, shape index: {}]
  %s1 = inlined_call_operand.hbm [shape: f32[2,2,32,128], index: 1, kind: input, shape index: {}]
  %s2 = inlined_call_operand.hbm [shape: f32[2,2,32,128], index: 2, kind: input, shape index: {}]
  %s3 = inlined_call_operand.hbm [shape: f32[2,2,1,128], index: 3, kind: input, shape index: {}]
  %s4 = inlined_call_operand.hbm [shape: f32[2,2,2,256], index: 4, kind: output, shape index: {}]
  %s5 = sld [smem:[#allocation0]]
  $region42: #{tpu_custom_call.1} parent=0
    _
  %s7 = ssub.s32 1, %s5
  %s8 = scalar_select 0, %s7, %s5
  $region1: #{tpu_custom_call.1} parent=0
    #allocation2 [shape = 'u8[4096]{0}', space=vmem, size = 0x1000, scoped, tag = 'input window, operand 0, single buffered']
    #allocation3 [shape = 's32[1]{0}', space=sflag, size = 0x4, scoped, tag = 'scoped memory for tpu_custom_call.1']
    #allocation4 [shape = 's32[1]{0}', space=sflag, size = 0x4, scoped, tag = 'scoped memory for tpu_custom_call.1']
    #allocation5 [shape = 'u8[65536]{0}', space=vmem, size = 0x10000, scoped, tag = 'input window, operand 1, single buffered']
    #allocation6 [shape = 's32[1]{0}', space=sflag, size = 0x4, scoped, tag = 'scoped memory for tpu_custom_call.1']
    #allocation7 [shape = 'u8[65536]{0}', space=vmem, size = 0x10000, scoped, tag = 'input window, operand 2, single buffered']
    #allocation8 [shape = 'u8[2048]{0}', space=vmem, size = 0x800, scoped, tag = 'input window, operand 3, single buffered']
    #allocation9 [shape = 's32[1]{0}', space=sflag, size = 0x4, scoped, tag = 'scoped memory for tpu_custom_call.1']
    #allocation10 [shape = 'u8[8192]{0}', space=vmem, size = 0x2000, scoped, tag = 'output window, operand 0, single buffered']
    %9 = vsyncpa [#allocation3], 0
    %10 = vsyncpa [#allocation6], 0
    %11 = vsyncpa [#allocation9], 0
    %12 = vsyncpa [#allocation4], 0
    // Predicated region
    $region2: #{tpu_custom_call.1} parent=1 // pred_check
      _
    $region3: #{tpu_custom_call.1} parent=1 // pred_check_branch
      %14 = sbr.rel (0) target = $region5
    $region4: #{tpu_custom_call.1} parent=1 // pred_region
      %16 = vsyncadd [#allocation3], 0
      %s17 = sshll.u32 %s0, 4
      %s18 = int_to_ptr.hbm [resolvable:$true] %s17
      %s19 = sshll.u32 [#allocation2], 4
      %s20 = int_to_ptr.vmem [resolvable:$true] %s19
      %25 = dma.hbm_to_vmem [thread:$0]  %s18, 128, %s20, [#allocation3], 64, 64, 4
    $region5: #{tpu_custom_call.1} parent=1 // pred_fallthru
      _
    // Predicated region
    $region6: #{tpu_custom_call.1} parent=1 // pred_check
      _
    $region7: #{tpu_custom_call.1} parent=1 // pred_check_branch
      %27 = sbr.rel (0) target = $region9
    $region8: #{tpu_custom_call.1} parent=1 // pred_region
      %29 = vsyncadd [#allocation6], 0
      %s30 = sshll.u32 %s1, 4
      %s31 = int_to_ptr.hbm [resolvable:$true] %s30
      %s32 = sshll.u32 [#allocation5], 4
      %s33 = int_to_ptr.vmem [resolvable:$true] %s32
      %38 = dma.hbm_to_vmem [thread:$0]  %s31, 2048, %s33, [#allocation6], 128, 128, 8
    $region9: #{tpu_custom_call.1} parent=1 // pred_fallthru
      _
    // Predicated region
    $region10: #{tpu_custom_call.1} parent=1 // pred_check
      _
    $region11: #{tpu_custom_call.1} parent=1 // pred_check_branch
      %40 = sbr.rel (0) target = $region13
    $region12: #{tpu_custom_call.1} parent=1 // pred_region
      %42 = vsyncadd [#allocation6], 0
      %s43 = sshll.u32 %s2, 4
      %s44 = int_to_ptr.hbm [resolvable:$true] %s43
      %s45 = sshll.u32 [#allocation7], 4
      %s46 = int_to_ptr.vmem [resolvable:$true] %s45
      %51 = dma.hbm_to_vmem [thread:$0]  %s44, 2048, %s46, [#allocation6], 128, 128, 8
    $region13: #{tpu_custom_call.1} parent=1 // pred_fallthru
      _
    // Predicated region
    $region14: #{tpu_custom_call.1} parent=1 // pred_check
      _
    $region15: #{tpu_custom_call.1} parent=1 // pred_check_branch
      %53 = sbr.rel (0) target = $region17
    $region16: #{tpu_custom_call.1} parent=1 // pred_region
      %55 = vsyncadd [#allocation9], 0
      %s56 = sshll.u32 %s3, 4
      %s57 = int_to_ptr.hbm [resolvable:$true] %s56
      %s58 = sshll.u32 [#allocation8], 4
      %s59 = int_to_ptr.vmem [resolvable:$true] %s58
      %64 = dma.hbm_to_vmem [thread:$0]  %s57, 64, %s59, [#allocation9], 16, 16, 1
    $region17: #{tpu_custom_call.1} parent=1 // pred_fallthru
      _
    // Predicated region
    $region18: #{tpu_custom_call.1} parent=1 // pred_check
      _
    $region19: #{tpu_custom_call.1} parent=1 // pred_check_branch
      %66 = sbr.rel (0) target = $region21
    $region20: #{tpu_custom_call.1} parent=1 // pred_region
      %68 = dma.done [#allocation3], 128
    $region21: #{tpu_custom_call.1} parent=1 // pred_fallthru
      _
    // Predicated region
    $region22: #{tpu_custom_call.1} parent=1 // pred_check
      _
    $region23: #{tpu_custom_call.1} parent=1 // pred_check_branch
      %70 = sbr.rel (0) target = $region25
    $region24: #{tpu_custom_call.1} parent=1 // pred_region
      %72 = dma.done [#allocation6], 2048
    $region25: #{tpu_custom_call.1} parent=1 // pred_fallthru
      _
    // Predicated region
    $region26: #{tpu_custom_call.1} parent=1 // pred_check
      _
    $region27: #{tpu_custom_call.1} parent=1 // pred_check_branch
      %74 = sbr.rel (0) target = $region29
    $region28: #{tpu_custom_call.1} parent=1 // pred_region
      %76 = dma.done [#allocation6], 2048
    $region29: #{tpu_custom_call.1} parent=1 // pred_fallthru
      _
    // Predicated region
    $region30: #{tpu_custom_call.1} parent=1 // pred_check
      _
    $region31: #{tpu_custom_call.1} parent=1 // pred_check_branch
      %78 = sbr.rel (0) target = $region33
    $region32: #{tpu_custom_call.1} parent=1 // pred_region
      %80 = dma.done [#allocation9], 64
    $region33: #{tpu_custom_call.1} parent=1 // pred_fallthru
      _
    %v81 = vld [vmem:[#allocation2] sm:$0x3]
    %v82 = vld [vmem:[#allocation2 + $0x2] sm:$0x3]
    %s83 = scalar_lea.vmem [#allocation2], 4
    %v84 = vld [vmem:[%s83] sm:$0x3]
    %v85 = vld [vmem:[%s83 + $0x2] sm:$0x3]
    %v86 = vld [vmem:[#allocation5] sm:$0xff]
    %v87 = vld [vmem:[#allocation5 + $0x8] sm:$0xff]
    %v88 = vld [vmem:[#allocation5 + $0x10] sm:$0xff]
    %v89 = vld [vmem:[#allocation5 + $0x18] sm:$0xff]
    %s90 = scalar_lea.vmem [#allocation5], 64
    %v91 = vld [vmem:[%s90] sm:$0xff]
    %v92 = vld [vmem:[%s90 + $0x8] sm:$0xff]
    %v93 = vld [vmem:[%s90 + $0x10] sm:$0xff]
    %v94 = vld [vmem:[%s90 + $0x18] sm:$0xff]
    %v95 = vld [vmem:[#allocation7] sm:$0xff]
    %v96 = vld [vmem:[#allocation7 + $0x8] sm:$0xff]
    %v97 = vld [vmem:[#allocation7 + $0x10] sm:$0xff]
    %v98 = vld [vmem:[#allocation7 + $0x18] sm:$0xff]
    %s99 = scalar_lea.vmem [#allocation7], 64
    %v100 = vld [vmem:[%s99] sm:$0xff]
    %v101 = vld [vmem:[%s99 + $0x8] sm:$0xff]
    %v102 = vld [vmem:[%s99 + $0x10] sm:$0xff]
    %v103 = vld [vmem:[%s99 + $0x18] sm:$0xff]
    %v104 = vld [vmem:[#allocation8] sm:$0x1]
    %s105 = scalar_lea.vmem [#allocation8], 2
    %v106 = vld [vmem:[%s105] sm:$0x1]
    %v108 = vperm.slane %v104, 0
    %vm110 = vcmask 261120
    %v112 = vsel %vm110, %v81, 0
    %114 = vmatpush.msra.mxu0 0.0
    %115 = vmatpush.msra.mxu0 0.0
    %116 = vmatpush.msra.mxu0 0.0
    %117 = vmatpush.msra.mxu0 0.0
    %118 = vmatpush.msra.mxu0 0.0
    %119 = vmatpush.msra.mxu0 0.0
    %120 = vmatpush.msra.mxu0 0.0
    %121 = vmatpush.msra.mxu0 0.0
    %122 = vmatpush.msra.mxu0 0.0
    %123 = vmatpush.msra.mxu0 0.0
    %124 = vmatpush.msra.mxu0 0.0
    %125 = vmatpush.msra.mxu0 0.0
    %126 = vmatpush.msra.mxu0 %v89
    %127 = vmatpush.msra.mxu0 %v88
    %128 = vmatpush.msra.mxu0 %v87
    %129 = vmatpush.msra.mxu0 %v86
    %130 = vmatmul.f32.gmra.mxu0 %v112
    %v131 = vpop.f32.mrf.mxu0
    %v132 = vadd.f32 %v108, %v131
    %133 = vdwg.mxu0
    %134 = vst [vmem:[#allocation1] ss:$4 sm:$0xff] %v81
    %v135 = vld.sshfl [vmem:[#allocation1] sm:$0xff pattern:$0x73625140]
    %136 = vrot.lane.b32.xlu0 %v135, 96
    %v137 = vpop.permute.xlu0 %136
    %v138 = vsel %vm110, %v137, 0
    %140 = vmatpush.msra.mxu0 0.0
    %141 = vmatpush.msra.mxu0 0.0
    %142 = vmatpush.msra.mxu0 0.0
    %143 = vmatpush.msra.mxu0 0.0
    %144 = vmatpush.msra.mxu0 0.0
    %145 = vmatpush.msra.mxu0 0.0
    %146 = vmatpush.msra.mxu0 0.0
    %147 = vmatpush.msra.mxu0 0.0
    %148 = vmatpush.msra.mxu0 0.0
    %149 = vmatpush.msra.mxu0 0.0
    %150 = vmatpush.msra.mxu0 0.0
    %151 = vmatpush.msra.mxu0 0.0
    %152 = vmatpush.msra.mxu0 %v89
    %153 = vmatpush.msra.mxu0 %v88
    %154 = vmatpush.msra.mxu0 %v87
    %155 = vmatpush.msra.mxu0 %v86
    %156 = vmatmul.f32.gmra.mxu0 %v138
    %v157 = vpop.f32.mrf.mxu0
    %v158 = vadd.f32 %v108, %v157
    %159 = vdwg.mxu0
    %160 = vst [vmem:[#allocation1] ss:$4 sm:$0xff] %v81
    %v161 = vld.sshfl [vmem:[#allocation1] sm:$0xff pattern:$0x73625140]
    %162 = vrot.lane.b32.xlu0 %v161, 64
    %v163 = vpop.permute.xlu0 %162
    %v164 = vsel %vm110, %v163, 0
    %166 = vmatpush.msra.mxu0 0.0
    %167 = vmatpush.msra.mxu0 0.0
    %168 = vmatpush.msra.mxu0 0.0
    %169 = vmatpush.msra.mxu0 0.0
    %170 = vmatpush.msra.mxu0 0.0
    %171 = vmatpush.msra.mxu0 0.0
    %172 = vmatpush.msra.mxu0 0.0
    %173 = vmatpush.msra.mxu0 0.0
    %174 = vmatpush.msra.mxu0 0.0
    %175 = vmatpush.msra.mxu0 0.0
    %176 = vmatpush.msra.mxu0 0.0
    %177 = vmatpush.msra.mxu0 0.0
    %178 = vmatpush.msra.mxu0 %v89
    %179 = vmatpush.msra.mxu0 %v88
    %180 = vmatpush.msra.mxu0 %v87
    %181 = vmatpush.msra.mxu0 %v86
    %182 = vmatmul.f32.gmra.mxu0 %v164
    %v183 = vpop.f32.mrf.mxu0
    %v184 = vadd.f32 %v108, %v183
    %185 = vdwg.mxu0
    %186 = vst [vmem:[#allocation1] ss:$4 sm:$0xff] %v81
    %v187 = vld.sshfl [vmem:[#allocation1] sm:$0xff pattern:$0x73625140]
    %188 = vrot.lane.b32.xlu0 %v187, 32
    %v189 = vpop.permute.xlu0 %188
    %v190 = vsel %vm110, %v189, 0
    %192 = vmatpush.msra.mxu0 0.0
    %193 = vmatpush.msra.mxu0 0.0
    %194 = vmatpush.msra.mxu0 0.0
    %195 = vmatpush.msra.mxu0 0.0
    %196 = vmatpush.msra.mxu0 0.0
    %197 = vmatpush.msra.mxu0 0.0
    %198 = vmatpush.msra.mxu0 0.0
    %199 = vmatpush.msra.mxu0 0.0
    %200 = vmatpush.msra.mxu0 0.0
    %201 = vmatpush.msra.mxu0 0.0
    %202 = vmatpush.msra.mxu0 0.0
    %203 = vmatpush.msra.mxu0 0.0
    %204 = vmatpush.msra.mxu0 %v89
    %205 = vmatpush.msra.mxu0 %v88
    %206 = vmatpush.msra.mxu0 %v87
    %207 = vmatpush.msra.mxu0 %v86
    %208 = vmatmul.f32.gmra.mxu0 %v190
    %v209 = vpop.f32.mrf.mxu0
    %v210 = vadd.f32 %v108, %v209
    %211 = vdwg.mxu0
    %v213 = vsel %vm110, %v82, 0
    %215 = vmatpush.msra.mxu0 0.0
    %216 = vmatpush.msra.mxu0 0.0
    %217 = vmatpush.msra.mxu0 0.0
    %218 = vmatpush.msra.mxu0 0.0
    %219 = vmatpush.msra.mxu0 0.0
    %220 = vmatpush.msra.mxu0 0.0
    %221 = vmatpush.msra.mxu0 0.0
    %222 = vmatpush.msra.mxu0 0.0
    %223 = vmatpush.msra.mxu0 0.0
    %224 = vmatpush.msra.mxu0 0.0
    %225 = vmatpush.msra.mxu0 0.0
    %226 = vmatpush.msra.mxu0 0.0
    %227 = vmatpush.msra.mxu0 %v89
    %228 = vmatpush.msra.mxu0 %v88
    %229 = vmatpush.msra.mxu0 %v87
    %230 = vmatpush.msra.mxu0 %v86
    %231 = vmatmul.f32.gmra.mxu0 %v213
    %v232 = vpop.f32.mrf.mxu0
    %v233 = vadd.f32 %v108, %v232
    %234 = vdwg.mxu0
    %235 = vst [vmem:[#allocation1] ss:$4 sm:$0xff] %v82
    %v236 = vld.sshfl [vmem:[#allocation1] sm:$0xff pattern:$0x73625140]
    %237 = vrot.lane.b32.xlu0 %v236, 96
    %v238 = vpop.permute.xlu0 %237
    %v239 = vsel %vm110, %v238, 0
    %241 = vmatpush.msra.mxu0 0.0
    %242 = vmatpush.msra.mxu0 0.0
    %243 = vmatpush.msra.mxu0 0.0
    %244 = vmatpush.msra.mxu0 0.0
    %245 = vmatpush.msra.mxu0 0.0
    %246 = vmatpush.msra.mxu0 0.0
    %247 = vmatpush.msra.mxu0 0.0
    %248 = vmatpush.msra.mxu0 0.0
    %249 = vmatpush.msra.mxu0 0.0
    %250 = vmatpush.msra.mxu0 0.0
    %251 = vmatpush.msra.mxu0 0.0
    %252 = vmatpush.msra.mxu0 0.0
    %253 = vmatpush.msra.mxu0 %v89
    %254 = vmatpush.msra.mxu0 %v88
    %255 = vmatpush.msra.mxu0 %v87
    %256 = vmatpush.msra.mxu0 %v86
    %257 = vmatmul.f32.gmra.mxu0 %v239
    %v258 = vpop.f32.mrf.mxu0
    %v259 = vadd.f32 %v108, %v258
    %260 = vdwg.mxu0
    %261 = vst [vmem:[#allocation1] ss:$4 sm:$0xff] %v82
    %v262 = vld.sshfl [vmem:[#allocation1] sm:$0xff pattern:$0x73625140]
    %263 = vrot.lane.b32.xlu0 %v262, 64
    %v264 = vpop.permute.xlu0 %263
    %v265 = vsel %vm110, %v264, 0
    %267 = vmatpush.msra.mxu0 0.0
    %268 = vmatpush.msra.mxu0 0.0
    %269 = vmatpush.msra.mxu0 0.0
    %270 = vmatpush.msra.mxu0 0.0
    %271 = vmatpush.msra.mxu0 0.0
    %272 = vmatpush.msra.mxu0 0.0
    %273 = vmatpush.msra.mxu0 0.0
    %274 = vmatpush.msra.mxu0 0.0
    %275 = vmatpush.msra.mxu0 0.0
    %276 = vmatpush.msra.mxu0 0.0
    %277 = vmatpush.msra.mxu0 0.0
    %278 = vmatpush.msra.mxu0 0.0
    %279 = vmatpush.msra.mxu0 %v89
    %280 = vmatpush.msra.mxu0 %v88
    %281 = vmatpush.msra.mxu0 %v87
    %282 = vmatpush.msra.mxu0 %v86
    %283 = vmatmul.f32.gmra.mxu0 %v265
    %v284 = vpop.f32.mrf.mxu0
    %v285 = vadd.f32 %v108, %v284
    %286 = vdwg.mxu0
    %287 = vst [vmem:[#allocation1] ss:$4 sm:$0xff] %v82
    %v288 = vld.sshfl [vmem:[#allocation1] sm:$0xff pattern:$0x73625140]
    %289 = vrot.lane.b32.xlu0 %v288, 32
    %v290 = vpop.permute.xlu0 %289
    %v291 = vsel %vm110, %v290, 0
    %293 = vmatpush.msra.mxu0 0.0
    %294 = vmatpush.msra.mxu0 0.0
    %295 = vmatpush.msra.mxu0 0.0
    %296 = vmatpush.msra.mxu0 0.0
    %297 = vmatpush.msra.mxu0 0.0
    %298 = vmatpush.msra.mxu0 0.0
    %299 = vmatpush.msra.mxu0 0.0
    %300 = vmatpush.msra.mxu0 0.0
    %301 = vmatpush.msra.mxu0 0.0
    %302 = vmatpush.msra.mxu0 0.0
    %303 = vmatpush.msra.mxu0 0.0
    %304 = vmatpush.msra.mxu0 0.0
    %305 = vmatpush.msra.mxu0 %v89
    %306 = vmatpush.msra.mxu0 %v88
    %307 = vmatpush.msra.mxu0 %v87
    %308 = vmatpush.msra.mxu0 %v86
    %309 = vmatmul.f32.gmra.mxu0 %v291
    %v310 = vpop.f32.mrf.mxu0
    %v311 = vadd.f32 %v108, %v310
    %312 = vdwg.mxu0
    %v314 = vperm.slane %v106, 0
    %v317 = vsel %vm110, %v84, 0
    %319 = vmatpush.msra.mxu0 0.0
    %320 = vmatpush.msra.mxu0 0.0
    %321 = vmatpush.msra.mxu0 0.0
    %322 = vmatpush.msra.mxu0 0.0
    %323 = vmatpush.msra.mxu0 0.0
    %324 = vmatpush.msra.mxu0 0.0
    %325 = vmatpush.msra.mxu0 0.0
    %326 = vmatpush.msra.mxu0 0.0
    %327 = vmatpush.msra.mxu0 0.0
    %328 = vmatpush.msra.mxu0 0.0
    %329 = vmatpush.msra.mxu0 0.0
    %330 = vmatpush.msra.mxu0 0.0
    %331 = vmatpush.msra.mxu0 %v94
    %332 = vmatpush.msra.mxu0 %v93
    %333 = vmatpush.msra.mxu0 %v92
    %334 = vmatpush.msra.mxu0 %v91
    %335 = vmatmul.f32.gmra.mxu0 %v317
    %v336 = vpop.f32.mrf.mxu0
    %v337 = vadd.f32 %v314, %v336
    %338 = vdwg.mxu0
    %339 = vst [vmem:[#allocation1] ss:$4 sm:$0xff] %v84
    %v340 = vld.sshfl [vmem:[#allocation1] sm:$0xff pattern:$0x73625140]
    %341 = vrot.lane.b32.xlu0 %v340, 96
    %v342 = vpop.permute.xlu0 %341
    %v343 = vsel %vm110, %v342, 0
    %345 = vmatpush.msra.mxu0 0.0
    %346 = vmatpush.msra.mxu0 0.0
    %347 = vmatpush.msra.mxu0 0.0
    %348 = vmatpush.msra.mxu0 0.0
    %349 = vmatpush.msra.mxu0 0.0
    %350 = vmatpush.msra.mxu0 0.0
    %351 = vmatpush.msra.mxu0 0.0
    %352 = vmatpush.msra.mxu0 0.0
    %353 = vmatpush.msra.mxu0 0.0
    %354 = vmatpush.msra.mxu0 0.0
    %355 = vmatpush.msra.mxu0 0.0
    %356 = vmatpush.msra.mxu0 0.0
    %357 = vmatpush.msra.mxu0 %v94
    %358 = vmatpush.msra.mxu0 %v93
    %359 = vmatpush.msra.mxu0 %v92
    %360 = vmatpush.msra.mxu0 %v91
    %361 = vmatmul.f32.gmra.mxu0 %v343
    %v362 = vpop.f32.mrf.mxu0
    %v363 = vadd.f32 %v314, %v362
    %364 = vdwg.mxu0
    %365 = vst [vmem:[#allocation1] ss:$4 sm:$0xff] %v84
    %v366 = vld.sshfl [vmem:[#allocation1] sm:$0xff pattern:$0x73625140]
    %367 = vrot.lane.b32.xlu0 %v366, 64
    %v368 = vpop.permute.xlu0 %367
    %v369 = vsel %vm110, %v368, 0
    %371 = vmatpush.msra.mxu0 0.0
    %372 = vmatpush.msra.mxu0 0.0
    %373 = vmatpush.msra.mxu0 0.0
    %374 = vmatpush.msra.mxu0 0.0
    %375 = vmatpush.msra.mxu0 0.0
    %376 = vmatpush.msra.mxu0 0.0
    %377 = vmatpush.msra.mxu0 0.0
    %378 = vmatpush.msra.mxu0 0.0
    %379 = vmatpush.msra.mxu0 0.0
    %380 = vmatpush.msra.mxu0 0.0
    %381 = vmatpush.msra.mxu0 0.0
    %382 = vmatpush.msra.mxu0 0.0
    %383 = vmatpush.msra.mxu0 %v94
    %384 = vmatpush.msra.mxu0 %v93
    %385 = vmatpush.msra.mxu0 %v92
    %386 = vmatpush.msra.mxu0 %v91
    %387 = vmatmul.f32.gmra.mxu0 %v369
    %v388 = vpop.f32.mrf.mxu0
    %v389 = vadd.f32 %v314, %v388
    %390 = vdwg.mxu0
    %391 = vst [vmem:[#allocation1] ss:$4 sm:$0xff] %v84
    %v392 = vld.sshfl [vmem:[#allocation1] sm:$0xff pattern:$0x73625140]
    %393 = vrot.lane.b32.xlu0 %v392, 32
    %v394 = vpop.permute.xlu0 %393
    %v395 = vsel %vm110, %v394, 0
    %397 = vmatpush.msra.mxu0 0.0
    %398 = vmatpush.msra.mxu0 0.0
    %399 = vmatpush.msra.mxu0 0.0
    %400 = vmatpush.msra.mxu0 0.0
    %401 = vmatpush.msra.mxu0 0.0
    %402 = vmatpush.msra.mxu0 0.0
    %403 = vmatpush.msra.mxu0 0.0
    %404 = vmatpush.msra.mxu0 0.0
    %405 = vmatpush.msra.mxu0 0.0
    %406 = vmatpush.msra.mxu0 0.0
    %407 = vmatpush.msra.mxu0 0.0
    %408 = vmatpush.msra.mxu0 0.0
    %409 = vmatpush.msra.mxu0 %v94
    %410 = vmatpush.msra.mxu0 %v93
    %411 = vmatpush.msra.mxu0 %v92
    %412 = vmatpush.msra.mxu0 %v91
    %413 = vmatmul.f32.gmra.mxu0 %v395
    %v414 = vpop.f32.mrf.mxu0
    %v415 = vadd.f32 %v314, %v414
    %416 = vdwg.mxu0
    %v418 = vsel %vm110, %v85, 0
    %420 = vmatpush.msra.mxu0 0.0
    %421 = vmatpush.msra.mxu0 0.0
    %422 = vmatpush.msra.mxu0 0.0
    %423 = vmatpush.msra.mxu0 0.0
    %424 = vmatpush.msra.mxu0 0.0
    %425 = vmatpush.msra.mxu0 0.0
    %426 = vmatpush.msra.mxu0 0.0
    %427 = vmatpush.msra.mxu0 0.0
    %428 = vmatpush.msra.mxu0 0.0
    %429 = vmatpush.msra.mxu0 0.0
    %430 = vmatpush.msra.mxu0 0.0
    %431 = vmatpush.msra.mxu0 0.0
    %432 = vmatpush.msra.mxu0 %v94
    %433 = vmatpush.msra.mxu0 %v93
    %434 = vmatpush.msra.mxu0 %v92
    %435 = vmatpush.msra.mxu0 %v91
    %436 = vmatmul.f32.gmra.mxu0 %v418
    %v437 = vpop.f32.mrf.mxu0
    %v438 = vadd.f32 %v314, %v437
    %439 = vdwg.mxu0
    %440 = vst [vmem:[#allocation1] ss:$4 sm:$0xff] %v85
    %v441 = vld.sshfl [vmem:[#allocation1] sm:$0xff pattern:$0x73625140]
    %442 = vrot.lane.b32.xlu0 %v441, 96
    %v443 = vpop.permute.xlu0 %442
    %v444 = vsel %vm110, %v443, 0
    %446 = vmatpush.msra.mxu0 0.0
    %447 = vmatpush.msra.mxu0 0.0
    %448 = vmatpush.msra.mxu0 0.0
    %449 = vmatpush.msra.mxu0 0.0
    %450 = vmatpush.msra.mxu0 0.0
    %451 = vmatpush.msra.mxu0 0.0
    %452 = vmatpush.msra.mxu0 0.0
    %453 = vmatpush.msra.mxu0 0.0
    %454 = vmatpush.msra.mxu0 0.0
    %455 = vmatpush.msra.mxu0 0.0
    %456 = vmatpush.msra.mxu0 0.0
    %457 = vmatpush.msra.mxu0 0.0
    %458 = vmatpush.msra.mxu0 %v94
    %459 = vmatpush.msra.mxu0 %v93
    %460 = vmatpush.msra.mxu0 %v92
    %461 = vmatpush.msra.mxu0 %v91
    %462 = vmatmul.f32.gmra.mxu0 %v444
    %v463 = vpop.f32.mrf.mxu0
    %v464 = vadd.f32 %v314, %v463
    %465 = vdwg.mxu0
    %466 = vst [vmem:[#allocation1] ss:$4 sm:$0xff] %v85
    %v467 = vld.sshfl [vmem:[#allocation1] sm:$0xff pattern:$0x73625140]
    %468 = vrot.lane.b32.xlu0 %v467, 64
    %v469 = vpop.permute.xlu0 %468
    %v470 = vsel %vm110, %v469, 0
    %472 = vmatpush.msra.mxu0 0.0
    %473 = vmatpush.msra.mxu0 0.0
    %474 = vmatpush.msra.mxu0 0.0
    %475 = vmatpush.msra.mxu0 0.0
    %476 = vmatpush.msra.mxu0 0.0
    %477 = vmatpush.msra.mxu0 0.0
    %478 = vmatpush.msra.mxu0 0.0
    %479 = vmatpush.msra.mxu0 0.0
    %480 = vmatpush.msra.mxu0 0.0
    %481 = vmatpush.msra.mxu0 0.0
    %482 = vmatpush.msra.mxu0 0.0
    %483 = vmatpush.msra.mxu0 0.0
    %484 = vmatpush.msra.mxu0 %v94
    %485 = vmatpush.msra.mxu0 %v93
    %486 = vmatpush.msra.mxu0 %v92
    %487 = vmatpush.msra.mxu0 %v91
    %488 = vmatmul.f32.gmra.mxu0 %v470
    %v489 = vpop.f32.mrf.mxu0
    %v490 = vadd.f32 %v314, %v489
    %491 = vdwg.mxu0
    %492 = vst [vmem:[#allocation1] ss:$4 sm:$0xff] %v85
    %v493 = vld.sshfl [vmem:[#allocation1] sm:$0xff pattern:$0x73625140]
    %494 = vrot.lane.b32.xlu0 %v493, 32
    %v495 = vpop.permute.xlu0 %494
    %v496 = vsel %vm110, %v495, 0
    %498 = vmatpush.msra.mxu0 0.0
    %499 = vmatpush.msra.mxu0 0.0
    %500 = vmatpush.msra.mxu0 0.0
    %501 = vmatpush.msra.mxu0 0.0
    %502 = vmatpush.msra.mxu0 0.0
    %503 = vmatpush.msra.mxu0 0.0
    %504 = vmatpush.msra.mxu0 0.0
    %505 = vmatpush.msra.mxu0 0.0
    %506 = vmatpush.msra.mxu0 0.0
    %507 = vmatpush.msra.mxu0 0.0
    %508 = vmatpush.msra.mxu0 0.0
    %509 = vmatpush.msra.mxu0 0.0
    %510 = vmatpush.msra.mxu0 %v94
    %511 = vmatpush.msra.mxu0 %v93
    %512 = vmatpush.msra.mxu0 %v92
    %513 = vmatpush.msra.mxu0 %v91
    %514 = vmatmul.f32.gmra.mxu0 %v496
    %v515 = vpop.f32.mrf.mxu0
    %v516 = vadd.f32 %v314, %v515
    %517 = vdwg.mxu0
    %v519 = vsel %vm110, 0.0, 0
    %521 = vmatpush.msra.mxu0 0.0
    %522 = vmatpush.msra.mxu0 0.0
    %523 = vmatpush.msra.mxu0 0.0
    %524 = vmatpush.msra.mxu0 0.0
    %525 = vmatpush.msra.mxu0 0.0
    %526 = vmatpush.msra.mxu0 0.0
    %527 = vmatpush.msra.mxu0 0.0
    %528 = vmatpush.msra.mxu0 0.0
    %529 = vmatpush.msra.mxu0 0.0
    %530 = vmatpush.msra.mxu0 0.0
    %531 = vmatpush.msra.mxu0 0.0
    %532 = vmatpush.msra.mxu0 0.0
    %533 = vmatpush.msra.mxu0 %v98
    %534 = vmatpush.msra.mxu0 %v97
    %535 = vmatpush.msra.mxu0 %v96
    %536 = vmatpush.msra.mxu0 %v95
    %537 = vmatmul.f32.gmra.mxu0 %v519
    %v538 = vpop.f32.mrf.mxu0
    %v539 = vadd.f32 0.0, %v538
    %540 = vdwg.mxu0
    %v541 = vadd.f32 %v132, %v539
    %v542 = vxor.u32 %v541, 2147483648
    %v543 = vmul.f32 %v542, 1.442695
    %v544 = vpow.pop %v543
    %v545 = vadd.f32 %v544, 1.0
    %v546 = vrcp.pop %v545
    %v547 = vmul.f32 %v545, %v546
    %v548 = vsub.f32 1.0, %v547
    %v549 = vmul.f32 %v546, %v548
    %v550 = vadd.f32 %v546, %v549
    %vm551 = vweird.f32 %v545
    %vm552 = vweird.f32 %v546
    %vm553 = vmor %vm551, %vm552
    %v554 = vsel %vm553, %v546, %v550
    %v555 = vand.u32 2147483647, %v545
    %vm556 = vcmp.eq.f32.partialorder %v555, 8.507059e+37
    %v557 = vand.u32 %v545, 2147483648
    %v558 = vor.u32 1.1754944e-38, %v557
    %v559 = vsel %vm556, %v558, %v554
    %v560 = vmul.f32 1.0, %v559
    %v561 = vtanh.pop %v541
    %v562 = vmul.f32 %v560, 0.0
    %564 = vrot.lane.b32.xlu0 %v561, 64
    %v565 = vpop.permute.xlu0 %564
    %v567 = vmul.f32 %v560, %v565
    %569 = vrot.lane.b32.xlu0 %v567, 32
    %v570 = vpop.permute.xlu0 %569
    %v572 = vadd.f32 %v562, %v570
    %v573 = vtanh.pop %v572
    %575 = vrot.lane.b32.xlu0 %v573, 64
    %v576 = vpop.permute.xlu0 %575
    %v578 = vmul.f32 %v560, %v576
    %580 = vrot.lane.b32.xlu0 %v578, 32
    %v581 = vpop.permute.xlu0 %580
    %vm583 = vcmask 254976
    %584 = vst.msk [vmem:[#allocation10] sm:$0x3] %vm583, %v581
    %585 = vmatpush.msra.mxu0 0.0
    %586 = vmatpush.msra.mxu0 0.0
    %587 = vmatpush.msra.mxu0 0.0
    %588 = vmatpush.msra.mxu0 0.0
    %589 = vmatpush.msra.mxu0 0.0
    %590 = vmatpush.msra.mxu0 0.0
    %591 = vmatpush.msra.mxu0 0.0
    %592 = vmatpush.msra.mxu0 0.0
    %593 = vmatpush.msra.mxu0 0.0
    %594 = vmatpush.msra.mxu0 0.0
    %595 = vmatpush.msra.mxu0 0.0
    %596 = vmatpush.msra.mxu0 0.0
    %597 = vmatpush.msra.mxu0 %v103
    %598 = vmatpush.msra.mxu0 %v102
    %599 = vmatpush.msra.mxu0 %v101
    %600 = vmatpush.msra.mxu0 %v100
    %601 = vmatmul.f32.gmra.mxu0 %v519
    %v602 = vpop.f32.mrf.mxu0
    %v603 = vadd.f32 0.0, %v602
    %604 = vdwg.mxu0
    %v605 = vadd.f32 %v337, %v603
    %v606 = vxor.u32 %v605, 2147483648
    %v607 = vmul.f32 %v606, 1.442695
    %v608 = vpow.pop %v607
    %v609 = vadd.f32 %v608, 1.0
    %v610 = vrcp.pop %v609
    %v611 = vmul.f32 %v609, %v610
    %v612 = vsub.f32 1.0, %v611
    %v613 = vmul.f32 %v610, %v612
    %v614 = vadd.f32 %v610, %v613
    %vm615 = vweird.f32 %v609
    %vm616 = vweird.f32 %v610
    %vm617 = vmor %vm615, %vm616
    %v618 = vsel %vm617, %v610, %v614
    %v619 = vand.u32 2147483647, %v609
    %vm620 = vcmp.eq.f32.partialorder %v619, 8.507059e+37
    %v621 = vand.u32 %v609, 2147483648
    %v622 = vor.u32 1.1754944e-38, %v621
    %v623 = vsel %vm620, %v622, %v618
    %v624 = vmul.f32 1.0, %v623
    %v625 = vtanh.pop %v605
    %v626 = vmul.f32 %v624, 0.0
    %628 = vrot.lane.b32.xlu0 %v625, 64
    %v629 = vpop.permute.xlu0 %628
    %v631 = vmul.f32 %v624, %v629
    %633 = vrot.lane.b32.xlu0 %v631, 32
    %v634 = vpop.permute.xlu0 %633
    %v636 = vadd.f32 %v626, %v634
    %v637 = vtanh.pop %v636
    %639 = vrot.lane.b32.xlu0 %v637, 64
    %v640 = vpop.permute.xlu0 %639
    %v642 = vmul.f32 %v624, %v640
    %644 = vrot.lane.b32.xlu0 %v642, 32
    %v645 = vpop.permute.xlu0 %644
    %s647 = scalar_lea.vmem [#allocation10], 8
    %648 = vst.msk [vmem:[%s647] sm:$0x3] %vm583, %v645
    %v649 = vsel %vm110, %v581, 0
    %651 = vmatpush.msra.mxu0 0.0
    %652 = vmatpush.msra.mxu0 0.0
    %653 = vmatpush.msra.mxu0 0.0
    %654 = vmatpush.msra.mxu0 0.0
    %655 = vmatpush.msra.mxu0 0.0
    %656 = vmatpush.msra.mxu0 0.0
    %657 = vmatpush.msra.mxu0 0.0
    %658 = vmatpush.msra.mxu0 0.0
    %659 = vmatpush.msra.mxu0 0.0
    %660 = vmatpush.msra.mxu0 0.0
    %661 = vmatpush.msra.mxu0 0.0
    %662 = vmatpush.msra.mxu0 0.0
    %663 = vmatpush.msra.mxu0 %v98
    %664 = vmatpush.msra.mxu0 %v97
    %665 = vmatpush.msra.mxu0 %v96
    %666 = vmatpush.msra.mxu0 %v95
    %667 = vmatmul.f32.gmra.mxu0 %v649
    %v668 = vpop.f32.mrf.mxu0
    %v669 = vadd.f32 0.0, %v668
    %670 = vdwg.mxu0
    %v671 = vadd.f32 %v158, %v669
    %v672 = vxor.u32 %v671, 2147483648
    %v673 = vmul.f32 %v672, 1.442695
    %v674 = vpow.pop %v673
    %v675 = vadd.f32 %v674, 1.0
    %v676 = vrcp.pop %v675
    %v677 = vmul.f32 %v675, %v676
    %v678 = vsub.f32 1.0, %v677
    %v679 = vmul.f32 %v676, %v678
    %v680 = vadd.f32 %v676, %v679
    %vm681 = vweird.f32 %v675
    %vm682 = vweird.f32 %v676
    %vm683 = vmor %vm681, %vm682
    %v684 = vsel %vm683, %v676, %v680
    %v685 = vand.u32 2147483647, %v675
    %vm686 = vcmp.eq.f32.partialorder %v685, 8.507059e+37
    %v687 = vand.u32 %v675, 2147483648
    %v688 = vor.u32 1.1754944e-38, %v687
    %v689 = vsel %vm686, %v688, %v684
    %v690 = vmul.f32 1.0, %v689
    %v691 = vtanh.pop %v671
    %v692 = vmul.f32 %v690, %v572
    %694 = vrot.lane.b32.xlu0 %v691, 64
    %v695 = vpop.permute.xlu0 %694
    %v697 = vmul.f32 %v690, %v695
    %699 = vrot.lane.b32.xlu0 %v697, 32
    %v700 = vpop.permute.xlu0 %699
    %v702 = vadd.f32 %v692, %v700
    %v703 = vtanh.pop %v702
    %705 = vrot.lane.b32.xlu0 %v703, 64
    %v706 = vpop.permute.xlu0 %705
    %v708 = vmul.f32 %v690, %v706
    %710 = vrot.lane.b32.xlu0 %v708, 64
    %v711 = vpop.permute.xlu0 %710
    %vm713 = vcmask 517376
    %714 = vst.msk [vmem:[#allocation10] sm:$0x3] %vm713, %v711
    %v715 = vsel %vm110, %v645, 0
    %717 = vmatpush.msra.mxu0 0.0
    %718 = vmatpush.msra.mxu0 0.0
    %719 = vmatpush.msra.mxu0 0.0
    %720 = vmatpush.msra.mxu0 0.0
    %721 = vmatpush.msra.mxu0 0.0
    %722 = vmatpush.msra.mxu0 0.0
    %723 = vmatpush.msra.mxu0 0.0
    %724 = vmatpush.msra.mxu0 0.0
    %725 = vmatpush.msra.mxu0 0.0
    %726 = vmatpush.msra.mxu0 0.0
    %727 = vmatpush.msra.mxu0 0.0
    %728 = vmatpush.msra.mxu0 0.0
    %729 = vmatpush.msra.mxu0 %v103
    %730 = vmatpush.msra.mxu0 %v102
    %731 = vmatpush.msra.mxu0 %v101
    %732 = vmatpush.msra.mxu0 %v100
    %733 = vmatmul.f32.gmra.mxu0 %v715
    %v734 = vpop.f32.mrf.mxu0
    %v735 = vadd.f32 0.0, %v734
    %736 = vdwg.mxu0
    %v737 = vadd.f32 %v363, %v735
    %v738 = vxor.u32 %v737, 2147483648
    %v739 = vmul.f32 %v738, 1.442695
    %v740 = vpow.pop %v739
    %v741 = vadd.f32 %v740, 1.0
    %v742 = vrcp.pop %v741
    %v743 = vmul.f32 %v741, %v742
    %v744 = vsub.f32 1.0, %v743
    %v745 = vmul.f32 %v742, %v744
    %v746 = vadd.f32 %v742, %v745
    %vm747 = vweird.f32 %v741
    %vm748 = vweird.f32 %v742
    %vm749 = vmor %vm747, %vm748
    %v750 = vsel %vm749, %v742, %v746
    %v751 = vand.u32 2147483647, %v741
    %vm752 = vcmp.eq.f32.partialorder %v751, 8.507059e+37
    %v753 = vand.u32 %v741, 2147483648
    %v754 = vor.u32 1.1754944e-38, %v753
    %v755 = vsel %vm752, %v754, %v750
    %v756 = vmul.f32 1.0, %v755
    %v757 = vtanh.pop %v737
    %v758 = vmul.f32 %v756, %v636
    %760 = vrot.lane.b32.xlu0 %v757, 64
    %v761 = vpop.permute.xlu0 %760
    %v763 = vmul.f32 %v756, %v761
    %765 = vrot.lane.b32.xlu0 %v763, 32
    %v766 = vpop.permute.xlu0 %765
    %v768 = vadd.f32 %v758, %v766
    %v769 = vtanh.pop %v768
    %771 = vrot.lane.b32.xlu0 %v769, 64
    %v772 = vpop.permute.xlu0 %771
    %v774 = vmul.f32 %v756, %v772
    %776 = vrot.lane.b32.xlu0 %v774, 64
    %v777 = vpop.permute.xlu0 %776
    %779 = vst.msk [vmem:[%s647] sm:$0x3] %vm713, %v777
    %780 = vrot.lane.b32.xlu0 %v708, 32
    %v781 = vpop.permute.xlu0 %780
    %v782 = vsel %vm110, %v781, 0
    %784 = vmatpush.msra.mxu0 0.0
    %785 = vmatpush.msra.mxu0 0.0
    %786 = vmatpush.msra.mxu0 0.0
    %787 = vmatpush.msra.mxu0 0.0
    %788 = vmatpush.msra.mxu0 0.0
    %789 = vmatpush.msra.mxu0 0.0
    %790 = vmatpush.msra.mxu0 0.0
    %791 = vmatpush.msra.mxu0 0.0
    %792 = vmatpush.msra.mxu0 0.0
    %793 = vmatpush.msra.mxu0 0.0
    %794 = vmatpush.msra.mxu0 0.0
    %795 = vmatpush.msra.mxu0 0.0
    %796 = vmatpush.msra.mxu0 %v98
    %797 = vmatpush.msra.mxu0 %v97
    %798 = vmatpush.msra.mxu0 %v96
    %799 = vmatpush.msra.mxu0 %v95
    %800 = vmatmul.f32.gmra.mxu0 %v782
    %v801 = vpop.f32.mrf.mxu0
    %v802 = vadd.f32 0.0, %v801
    %803 = vdwg.mxu0
    %v804 = vadd.f32 %v184, %v802
    %v805 = vxor.u32 %v804, 2147483648
    %v806 = vmul.f32 %v805, 1.442695
    %v807 = vpow.pop %v806
    %v808 = vadd.f32 %v807, 1.0
    %v809 = vrcp.pop %v808
    %v810 = vmul.f32 %v808, %v809
    %v811 = vsub.f32 1.0, %v810
    %v812 = vmul.f32 %v809, %v811
    %v813 = vadd.f32 %v809, %v812
    %vm814 = vweird.f32 %v808
    %vm815 = vweird.f32 %v809
    %vm816 = vmor %vm814, %vm815
    %v817 = vsel %vm816, %v809, %v813
    %v818 = vand.u32 2147483647, %v808
    %vm819 = vcmp.eq.f32.partialorder %v818, 8.507059e+37
    %v820 = vand.u32 %v808, 2147483648
    %v821 = vor.u32 1.1754944e-38, %v820
    %v822 = vsel %vm819, %v821, %v817
    %v823 = vmul.f32 1.0, %v822
    %v824 = vtanh.pop %v804
    %v825 = vmul.f32 %v823, %v702
    %827 = vrot.lane.b32.xlu0 %v824, 64
    %v828 = vpop.permute.xlu0 %827
    %v830 = vmul.f32 %v823, %v828
    %832 = vrot.lane.b32.xlu0 %v830, 32
    %v833 = vpop.permute.xlu0 %832
    %v835 = vadd.f32 %v825, %v833
    %v836 = vtanh.pop %v835
    %838 = vrot.lane.b32.xlu0 %v836, 64
    %v839 = vpop.permute.xlu0 %838
    %v841 = vmul.f32 %v823, %v839
    %843 = vrot.lane.b32.xlu0 %v841, 96
    %v844 = vpop.permute.xlu0 %843
    %vm846 = vcmask 779776
    %847 = vst.msk [vmem:[#allocation10] sm:$0x3] %vm846, %v844
    %848 = vrot.lane.b32.xlu0 %v774, 32
    %v849 = vpop.permute.xlu0 %848
    %v850 = vsel %vm110, %v849, 0
    %852 = vmatpush.msra.mxu0 0.0
    %853 = vmatpush.msra.mxu0 0.0
    %854 = vmatpush.msra.mxu0 0.0
    %855 = vmatpush.msra.mxu0 0.0
    %856 = vmatpush.msra.mxu0 0.0
    %857 = vmatpush.msra.mxu0 0.0
    %858 = vmatpush.msra.mxu0 0.0
    %859 = vmatpush.msra.mxu0 0.0
    %860 = vmatpush.msra.mxu0 0.0
    %861 = vmatpush.msra.mxu0 0.0
    %862 = vmatpush.msra.mxu0 0.0
    %863 = vmatpush.msra.mxu0 0.0
    %864 = vmatpush.msra.mxu0 %v103
    %865 = vmatpush.msra.mxu0 %v102
    %866 = vmatpush.msra.mxu0 %v101
    %867 = vmatpush.msra.mxu0 %v100
    %868 = vmatmul.f32.gmra.mxu0 %v850
    %v869 = vpop.f32.mrf.mxu0
    %v870 = vadd.f32 0.0, %v869
    %871 = vdwg.mxu0
    %v872 = vadd.f32 %v389, %v870
    %v873 = vxor.u32 %v872, 2147483648
    %v874 = vmul.f32 %v873, 1.442695
    %v875 = vpow.pop %v874
    %v876 = vadd.f32 %v875, 1.0
    %v877 = vrcp.pop %v876
    %v878 = vmul.f32 %v876, %v877
    %v879 = vsub.f32 1.0, %v878
    %v880 = vmul.f32 %v877, %v879
    %v881 = vadd.f32 %v877, %v880
    %vm882 = vweird.f32 %v876
    %vm883 = vweird.f32 %v877
    %vm884 = vmor %vm882, %vm883
    %v885 = vsel %vm884, %v877, %v881
    %v886 = vand.u32 2147483647, %v876
    %vm887 = vcmp.eq.f32.partialorder %v886, 8.507059e+37
    %v888 = vand.u32 %v876, 2147483648
    %v889 = vor.u32 1.1754944e-38, %v888
    %v890 = vsel %vm887, %v889, %v885
    %v891 = vmul.f32 1.0, %v890
    %v892 = vtanh.pop %v872
    %v893 = vmul.f32 %v891, %v768
    %895 = vrot.lane.b32.xlu0 %v892, 64
    %v896 = vpop.permute.xlu0 %895
    %v898 = vmul.f32 %v891, %v896
    %900 = vrot.lane.b32.xlu0 %v898, 32
    %v901 = vpop.permute.xlu0 %900
    %v903 = vadd.f32 %v893, %v901
    %v904 = vtanh.pop %v903
    %906 = vrot.lane.b32.xlu0 %v904, 64
    %v907 = vpop.permute.xlu0 %906
    %v909 = vmul.f32 %v891, %v907
    %911 = vrot.lane.b32.xlu0 %v909, 96
    %v912 = vpop.permute.xlu0 %911
    %914 = vst.msk [vmem:[%s647] sm:$0x3] %vm846, %v912
    %915 = vrot.lane.b32.xlu0 %v841, 32
    %v916 = vpop.permute.xlu0 %915
    %v917 = vsel %vm110, %v916, 0
    %919 = vmatpush.msra.mxu0 0.0
    %920 = vmatpush.msra.mxu0 0.0
    %921 = vmatpush.msra.mxu0 0.0
    %922 = vmatpush.msra.mxu0 0.0
    %923 = vmatpush.msra.mxu0 0.0
    %924 = vmatpush.msra.mxu0 0.0
    %925 = vmatpush.msra.mxu0 0.0
    %926 = vmatpush.msra.mxu0 0.0
    %927 = vmatpush.msra.mxu0 0.0
    %928 = vmatpush.msra.mxu0 0.0
    %929 = vmatpush.msra.mxu0 0.0
    %930 = vmatpush.msra.mxu0 0.0
    %931 = vmatpush.msra.mxu0 %v98
    %932 = vmatpush.msra.mxu0 %v97
    %933 = vmatpush.msra.mxu0 %v96
    %934 = vmatpush.msra.mxu0 %v95
    %935 = vmatmul.f32.gmra.mxu0 %v917
    %v936 = vpop.f32.mrf.mxu0
    %v937 = vadd.f32 0.0, %v936
    %938 = vdwg.mxu0
    %v939 = vadd.f32 %v210, %v937
    %v940 = vxor.u32 %v939, 2147483648
    %v941 = vmul.f32 %v940, 1.442695
    %v942 = vpow.pop %v941
    %v943 = vadd.f32 %v942, 1.0
    %v944 = vrcp.pop %v943
    %v945 = vmul.f32 %v943, %v944
    %v946 = vsub.f32 1.0, %v945
    %v947 = vmul.f32 %v944, %v946
    %v948 = vadd.f32 %v944, %v947
    %vm949 = vweird.f32 %v943
    %vm950 = vweird.f32 %v944
    %vm951 = vmor %vm949, %vm950
    %v952 = vsel %vm951, %v944, %v948
    %v953 = vand.u32 2147483647, %v943
    %vm954 = vcmp.eq.f32.partialorder %v953, 8.507059e+37
    %v955 = vand.u32 %v943, 2147483648
    %v956 = vor.u32 1.1754944e-38, %v955
    %v957 = vsel %vm954, %v956, %v952
    %v958 = vmul.f32 1.0, %v957
    %v959 = vtanh.pop %v939
    %v960 = vmul.f32 %v958, %v835
    %962 = vrot.lane.b32.xlu0 %v959, 64
    %v963 = vpop.permute.xlu0 %962
    %v965 = vmul.f32 %v958, %v963
    %967 = vrot.lane.b32.xlu0 %v965, 32
    %v968 = vpop.permute.xlu0 %967
    %v970 = vadd.f32 %v960, %v968
    %v971 = vtanh.pop %v970
    %973 = vrot.lane.b32.xlu0 %v971, 64
    %v974 = vpop.permute.xlu0 %973
    %v976 = vmul.f32 %v958, %v974
    %vm977 = vcmask 1042176
    %978 = vst.msk [vmem:[#allocation10] sm:$0x3] %vm977, %v976
    %979 = vrot.lane.b32.xlu0 %v909, 32
    %v980 = vpop.permute.xlu0 %979
    %v981 = vsel %vm110, %v980, 0
    %983 = vmatpush.msra.mxu0 0.0
    %984 = vmatpush.msra.mxu0 0.0
    %985 = vmatpush.msra.mxu0 0.0
    %986 = vmatpush.msra.mxu0 0.0
    %987 = vmatpush.msra.mxu0 0.0
    %988 = vmatpush.msra.mxu0 0.0
    %989 = vmatpush.msra.mxu0 0.0
    %990 = vmatpush.msra.mxu0 0.0
    %991 = vmatpush.msra.mxu0 0.0
    %992 = vmatpush.msra.mxu0 0.0
    %993 = vmatpush.msra.mxu0 0.0
    %994 = vmatpush.msra.mxu0 0.0
    %995 = vmatpush.msra.mxu0 %v103
    %996 = vmatpush.msra.mxu0 %v102
    %997 = vmatpush.msra.mxu0 %v101
    %998 = vmatpush.msra.mxu0 %v100
    %999 = vmatmul.f32.gmra.mxu0 %v981
    %v1000 = vpop.f32.mrf.mxu0
    %v1001 = vadd.f32 0.0, %v1000
    %1002 = vdwg.mxu0
    %v1003 = vadd.f32 %v415, %v1001
    %v1004 = vxor.u32 %v1003, 2147483648
    %v1005 = vmul.f32 %v1004, 1.442695
    %v1006 = vpow.pop %v1005
    %v1007 = vadd.f32 %v1006, 1.0
    %v1008 = vrcp.pop %v1007
    %v1009 = vmul.f32 %v1007, %v1008
    %v1010 = vsub.f32 1.0, %v1009
    %v1011 = vmul.f32 %v1008, %v1010
    %v1012 = vadd.f32 %v1008, %v1011
    %vm1013 = vweird.f32 %v1007
    %vm1014 = vweird.f32 %v1008
    %vm1015 = vmor %vm1013, %vm1014
    %v1016 = vsel %vm1015, %v1008, %v1012
    %v1017 = vand.u32 2147483647, %v1007
    %vm1018 = vcmp.eq.f32.partialorder %v1017, 8.507059e+37
    %v1019 = vand.u32 %v1007, 2147483648
    %v1020 = vor.u32 1.1754944e-38, %v1019
    %v1021 = vsel %vm1018, %v1020, %v1016
    %v1022 = vmul.f32 1.0, %v1021
    %v1023 = vtanh.pop %v1003
    %v1024 = vmul.f32 %v1022, %v903
    %1026 = vrot.lane.b32.xlu0 %v1023, 64
    %v1027 = vpop.permute.xlu0 %1026
    %v1029 = vmul.f32 %v1022, %v1027
    %1031 = vrot.lane.b32.xlu0 %v1029, 32
    %v1032 = vpop.permute.xlu0 %1031
    %v1034 = vadd.f32 %v1024, %v1032
    %v1035 = vtanh.pop %v1034
    %1037 = vrot.lane.b32.xlu0 %v1035, 64
    %v1038 = vpop.permute.xlu0 %1037
    %v1040 = vmul.f32 %v1022, %v1038
    %1041 = vst.msk [vmem:[%s647] sm:$0x3] %vm977, %v1040
    %1043 = vrot.lane.b32.xlu0 %v976, 32
    %v1044 = vpop.permute.xlu0 %1043
    %v1045 = vsel %vm110, %v1044, 0
    %1047 = vmatpush.msra.mxu0 0.0
    %1048 = vmatpush.msra.mxu0 0.0
    %1049 = vmatpush.msra.mxu0 0.0
    %1050 = vmatpush.msra.mxu0 0.0
    %1051 = vmatpush.msra.mxu0 0.0
    %1052 = vmatpush.msra.mxu0 0.0
    %1053 = vmatpush.msra.mxu0 0.0
    %1054 = vmatpush.msra.mxu0 0.0
    %1055 = vmatpush.msra.mxu0 0.0
    %1056 = vmatpush.msra.mxu0 0.0
    %1057 = vmatpush.msra.mxu0 0.0
    %1058 = vmatpush.msra.mxu0 0.0
    %1059 = vmatpush.msra.mxu0 %v98
    %1060 = vmatpush.msra.mxu0 %v97
    %1061 = vmatpush.msra.mxu0 %v96
    %1062 = vmatpush.msra.mxu0 %v95
    %1063 = vmatmul.f32.gmra.mxu0 %v1045
    %v1064 = vpop.f32.mrf.mxu0
    %v1065 = vadd.f32 0.0, %v1064
    %1066 = vdwg.mxu0
    %v1067 = vadd.f32 %v233, %v1065
    %v1068 = vxor.u32 %v1067, 2147483648
    %v1069 = vmul.f32 %v1068, 1.442695
    %v1070 = vpow.pop %v1069
    %v1071 = vadd.f32 %v1070, 1.0
    %v1072 = vrcp.pop %v1071
    %v1073 = vmul.f32 %v1071, %v1072
    %v1074 = vsub.f32 1.0, %v1073
    %v1075 = vmul.f32 %v1072, %v1074
    %v1076 = vadd.f32 %v1072, %v1075
    %vm1077 = vweird.f32 %v1071
    %vm1078 = vweird.f32 %v1072
    %vm1079 = vmor %vm1077, %vm1078
    %v1080 = vsel %vm1079, %v1072, %v1076
    %v1081 = vand.u32 2147483647, %v1071
    %vm1082 = vcmp.eq.f32.partialorder %v1081, 8.507059e+37
    %v1083 = vand.u32 %v1071, 2147483648
    %v1084 = vor.u32 1.1754944e-38, %v1083
    %v1085 = vsel %vm1082, %v1084, %v1080
    %v1086 = vmul.f32 1.0, %v1085
    %v1087 = vtanh.pop %v1067
    %v1088 = vmul.f32 %v1086, %v970
    %1090 = vrot.lane.b32.xlu0 %v1087, 64
    %v1091 = vpop.permute.xlu0 %1090
    %v1093 = vmul.f32 %v1086, %v1091
    %1095 = vrot.lane.b32.xlu0 %v1093, 32
    %v1096 = vpop.permute.xlu0 %1095
    %v1098 = vadd.f32 %v1088, %v1096
    %v1099 = vtanh.pop %v1098
    %1101 = vrot.lane.b32.xlu0 %v1099, 64
    %v1102 = vpop.permute.xlu0 %1101
    %v1104 = vmul.f32 %v1086, %v1102
    %1106 = vrot.lane.b32.xlu0 %v1104, 32
    %v1107 = vpop.permute.xlu0 %1106
    %1109 = vst.msk [vmem:[#allocation10 + $0x2] sm:$0x3] %vm583, %v1107
    %1111 = vrot.lane.b32.xlu0 %v1040, 32
    %v1112 = vpop.permute.xlu0 %1111
    %v1113 = vsel %vm110, %v1112, 0
    %1115 = vmatpush.msra.mxu0 0.0
    %1116 = vmatpush.msra.mxu0 0.0
    %1117 = vmatpush.msra.mxu0 0.0
    %1118 = vmatpush.msra.mxu0 0.0
    %1119 = vmatpush.msra.mxu0 0.0
    %1120 = vmatpush.msra.mxu0 0.0
    %1121 = vmatpush.msra.mxu0 0.0
    %1122 = vmatpush.msra.mxu0 0.0
    %1123 = vmatpush.msra.mxu0 0.0
    %1124 = vmatpush.msra.mxu0 0.0
    %1125 = vmatpush.msra.mxu0 0.0
    %1126 = vmatpush.msra.mxu0 0.0
    %1127 = vmatpush.msra.mxu0 %v103
    %1128 = vmatpush.msra.mxu0 %v102
    %1129 = vmatpush.msra.mxu0 %v101
    %1130 = vmatpush.msra.mxu0 %v100
    %1131 = vmatmul.f32.gmra.mxu0 %v1113
    %v1132 = vpop.f32.mrf.mxu0
    %v1133 = vadd.f32 0.0, %v1132
    %1134 = vdwg.mxu0
    %v1135 = vadd.f32 %v438, %v1133
    %v1136 = vxor.u32 %v1135, 2147483648
    %v1137 = vmul.f32 %v1136, 1.442695
    %v1138 = vpow.pop %v1137
    %v1139 = vadd.f32 %v1138, 1.0
    %v1140 = vrcp.pop %v1139
    %v1141 = vmul.f32 %v1139, %v1140
    %v1142 = vsub.f32 1.0, %v1141
    %v1143 = vmul.f32 %v1140, %v1142
    %v1144 = vadd.f32 %v1140, %v1143
    %vm1145 = vweird.f32 %v1139
    %vm1146 = vweird.f32 %v1140
    %vm1147 = vmor %vm1145, %vm1146
    %v1148 = vsel %vm1147, %v1140, %v1144
    %v1149 = vand.u32 2147483647, %v1139
    %vm1150 = vcmp.eq.f32.partialorder %v1149, 8.507059e+37
    %v1151 = vand.u32 %v1139, 2147483648
    %v1152 = vor.u32 1.1754944e-38, %v1151
    %v1153 = vsel %vm1150, %v1152, %v1148
    %v1154 = vmul.f32 1.0, %v1153
    %v1155 = vtanh.pop %v1135
    %v1156 = vmul.f32 %v1154, %v1034
    %1158 = vrot.lane.b32.xlu0 %v1155, 64
    %v1159 = vpop.permute.xlu0 %1158
    %v1161 = vmul.f32 %v1154, %v1159
    %1163 = vrot.lane.b32.xlu0 %v1161, 32
    %v1164 = vpop.permute.xlu0 %1163
    %v1166 = vadd.f32 %v1156, %v1164
    %v1167 = vtanh.pop %v1166
    %1169 = vrot.lane.b32.xlu0 %v1167, 64
    %v1170 = vpop.permute.xlu0 %1169
    %v1172 = vmul.f32 %v1154, %v1170
    %1174 = vrot.lane.b32.xlu0 %v1172, 32
    %v1175 = vpop.permute.xlu0 %1174
    %1177 = vst.msk [vmem:[%s647 + $0x2] sm:$0x3] %vm583, %v1175
    %v1178 = vsel %vm110, %v1107, 0
    %1180 = vmatpush.msra.mxu0 0.0
    %1181 = vmatpush.msra.mxu0 0.0
    %1182 = vmatpush.msra.mxu0 0.0
    %1183 = vmatpush.msra.mxu0 0.0
    %1184 = vmatpush.msra.mxu0 0.0
    %1185 = vmatpush.msra.mxu0 0.0
    %1186 = vmatpush.msra.mxu0 0.0
    %1187 = vmatpush.msra.mxu0 0.0
    %1188 = vmatpush.msra.mxu0 0.0
    %1189 = vmatpush.msra.mxu0 0.0
    %1190 = vmatpush.msra.mxu0 0.0
    %1191 = vmatpush.msra.mxu0 0.0
    %1192 = vmatpush.msra.mxu0 %v98
    %1193 = vmatpush.msra.mxu0 %v97
    %1194 = vmatpush.msra.mxu0 %v96
    %1195 = vmatpush.msra.mxu0 %v95
    %1196 = vmatmul.f32.gmra.mxu0 %v1178
    %v1197 = vpop.f32.mrf.mxu0
    %v1198 = vadd.f32 0.0, %v1197
    %1199 = vdwg.mxu0
    %v1200 = vadd.f32 %v259, %v1198
    %v1201 = vxor.u32 %v1200, 2147483648
    %v1202 = vmul.f32 %v1201, 1.442695
    %v1203 = vpow.pop %v1202
    %v1204 = vadd.f32 %v1203, 1.0
    %v1205 = vrcp.pop %v1204
    %v1206 = vmul.f32 %v1204, %v1205
    %v1207 = vsub.f32 1.0, %v1206
    %v1208 = vmul.f32 %v1205, %v1207
    %v1209 = vadd.f32 %v1205, %v1208
    %vm1210 = vweird.f32 %v1204
    %vm1211 = vweird.f32 %v1205
    %vm1212 = vmor %vm1210, %vm1211
    %v1213 = vsel %vm1212, %v1205, %v1209
    %v1214 = vand.u32 2147483647, %v1204
    %vm1215 = vcmp.eq.f32.partialorder %v1214, 8.507059e+37
    %v1216 = vand.u32 %v1204, 2147483648
    %v1217 = vor.u32 1.1754944e-38, %v1216
    %v1218 = vsel %vm1215, %v1217, %v1213
    %v1219 = vmul.f32 1.0, %v1218
    %v1220 = vtanh.pop %v1200
    %v1221 = vmul.f32 %v1219, %v1098
    %1223 = vrot.lane.b32.xlu0 %v1220, 64
    %v1224 = vpop.permute.xlu0 %1223
    %v1226 = vmul.f32 %v1219, %v1224
    %1228 = vrot.lane.b32.xlu0 %v1226, 32
    %v1229 = vpop.permute.xlu0 %1228
    %v1231 = vadd.f32 %v1221, %v1229
    %v1232 = vtanh.pop %v1231
    %1234 = vrot.lane.b32.xlu0 %v1232, 64
    %v1235 = vpop.permute.xlu0 %1234
    %v1237 = vmul.f32 %v1219, %v1235
    %1239 = vrot.lane.b32.xlu0 %v1237, 64
    %v1240 = vpop.permute.xlu0 %1239
    %1242 = vst.msk [vmem:[#allocation10 + $0x2] sm:$0x3] %vm713, %v1240
    %v1243 = vsel %vm110, %v1175, 0
    %1245 = vmatpush.msra.mxu0 0.0
    %1246 = vmatpush.msra.mxu0 0.0
    %1247 = vmatpush.msra.mxu0 0.0
    %1248 = vmatpush.msra.mxu0 0.0
    %1249 = vmatpush.msra.mxu0 0.0
    %1250 = vmatpush.msra.mxu0 0.0
    %1251 = vmatpush.msra.mxu0 0.0
    %1252 = vmatpush.msra.mxu0 0.0
    %1253 = vmatpush.msra.mxu0 0.0
    %1254 = vmatpush.msra.mxu0 0.0
    %1255 = vmatpush.msra.mxu0 0.0
    %1256 = vmatpush.msra.mxu0 0.0
    %1257 = vmatpush.msra.mxu0 %v103
    %1258 = vmatpush.msra.mxu0 %v102
    %1259 = vmatpush.msra.mxu0 %v101
    %1260 = vmatpush.msra.mxu0 %v100
    %1261 = vmatmul.f32.gmra.mxu0 %v1243
    %v1262 = vpop.f32.mrf.mxu0
    %v1263 = vadd.f32 0.0, %v1262
    %1264 = vdwg.mxu0
    %v1265 = vadd.f32 %v464, %v1263
    %v1266 = vxor.u32 %v1265, 2147483648
    %v1267 = vmul.f32 %v1266, 1.442695
    %v1268 = vpow.pop %v1267
    %v1269 = vadd.f32 %v1268, 1.0
    %v1270 = vrcp.pop %v1269
    %v1271 = vmul.f32 %v1269, %v1270
    %v1272 = vsub.f32 1.0, %v1271
    %v1273 = vmul.f32 %v1270, %v1272
    %v1274 = vadd.f32 %v1270, %v1273
    %vm1275 = vweird.f32 %v1269
    %vm1276 = vweird.f32 %v1270
    %vm1277 = vmor %vm1275, %vm1276
    %v1278 = vsel %vm1277, %v1270, %v1274
    %v1279 = vand.u32 2147483647, %v1269
    %vm1280 = vcmp.eq.f32.partialorder %v1279, 8.507059e+37
    %v1281 = vand.u32 %v1269, 2147483648
    %v1282 = vor.u32 1.1754944e-38, %v1281
    %v1283 = vsel %vm1280, %v1282, %v1278
    %v1284 = vmul.f32 1.0, %v1283
    %v1285 = vtanh.pop %v1265
    %v1286 = vmul.f32 %v1284, %v1166
    %1288 = vrot.lane.b32.xlu0 %v1285, 64
    %v1289 = vpop.permute.xlu0 %1288
    %v1291 = vmul.f32 %v1284, %v1289
    %1293 = vrot.lane.b32.xlu0 %v1291, 32
    %v1294 = vpop.permute.xlu0 %1293
    %v1296 = vadd.f32 %v1286, %v1294
    %v1297 = vtanh.pop %v1296
    %1299 = vrot.lane.b32.xlu0 %v1297, 64
    %v1300 = vpop.permute.xlu0 %1299
    %v1302 = vmul.f32 %v1284, %v1300
    %1304 = vrot.lane.b32.xlu0 %v1302, 64
    %v1305 = vpop.permute.xlu0 %1304
    %1307 = vst.msk [vmem:[%s647 + $0x2] sm:$0x3] %vm713, %v1305
    %1308 = vrot.lane.b32.xlu0 %v1237, 32
    %v1309 = vpop.permute.xlu0 %1308
    %v1310 = vsel %vm110, %v1309, 0
    %1312 = vmatpush.msra.mxu0 0.0
    %1313 = vmatpush.msra.mxu0 0.0
    %1314 = vmatpush.msra.mxu0 0.0
    %1315 = vmatpush.msra.mxu0 0.0
    %1316 = vmatpush.msra.mxu0 0.0
    %1317 = vmatpush.msra.mxu0 0.0
    %1318 = vmatpush.msra.mxu0 0.0
    %1319 = vmatpush.msra.mxu0 0.0
    %1320 = vmatpush.msra.mxu0 0.0
    %1321 = vmatpush.msra.mxu0 0.0
    %1322 = vmatpush.msra.mxu0 0.0
    %1323 = vmatpush.msra.mxu0 0.0
    %1324 = vmatpush.msra.mxu0 %v98
    %1325 = vmatpush.msra.mxu0 %v97
    %1326 = vmatpush.msra.mxu0 %v96
    %1327 = vmatpush.msra.mxu0 %v95
    %1328 = vmatmul.f32.gmra.mxu0 %v1310
    %v1329 = vpop.f32.mrf.mxu0
    %v1330 = vadd.f32 0.0, %v1329
    %1331 = vdwg.mxu0
    %v1332 = vadd.f32 %v285, %v1330
    %v1333 = vxor.u32 %v1332, 2147483648
    %v1334 = vmul.f32 %v1333, 1.442695
    %v1335 = vpow.pop %v1334
    %v1336 = vadd.f32 %v1335, 1.0
    %v1337 = vrcp.pop %v1336
    %v1338 = vmul.f32 %v1336, %v1337
    %v1339 = vsub.f32 1.0, %v1338
    %v1340 = vmul.f32 %v1337, %v1339
    %v1341 = vadd.f32 %v1337, %v1340
    %vm1342 = vweird.f32 %v1336
    %vm1343 = vweird.f32 %v1337
    %vm1344 = vmor %vm1342, %vm1343
    %v1345 = vsel %vm1344, %v1337, %v1341
    %v1346 = vand.u32 2147483647, %v1336
    %vm1347 = vcmp.eq.f32.partialorder %v1346, 8.507059e+37
    %v1348 = vand.u32 %v1336, 2147483648
    %v1349 = vor.u32 1.1754944e-38, %v1348
    %v1350 = vsel %vm1347, %v1349, %v1345
    %v1351 = vmul.f32 1.0, %v1350
    %v1352 = vtanh.pop %v1332
    %v1353 = vmul.f32 %v1351, %v1231
    %1355 = vrot.lane.b32.xlu0 %v1352, 64
    %v1356 = vpop.permute.xlu0 %1355
    %v1358 = vmul.f32 %v1351, %v1356
    %1360 = vrot.lane.b32.xlu0 %v1358, 32
    %v1361 = vpop.permute.xlu0 %1360
    %v1363 = vadd.f32 %v1353, %v1361
    %v1364 = vtanh.pop %v1363
    %1366 = vrot.lane.b32.xlu0 %v1364, 64
    %v1367 = vpop.permute.xlu0 %1366
    %v1369 = vmul.f32 %v1351, %v1367
    %1371 = vrot.lane.b32.xlu0 %v1369, 96
    %v1372 = vpop.permute.xlu0 %1371
    %1374 = vst.msk [vmem:[#allocation10 + $0x2] sm:$0x3] %vm846, %v1372
    %1375 = vrot.lane.b32.xlu0 %v1302, 32
    %v1376 = vpop.permute.xlu0 %1375
    %v1377 = vsel %vm110, %v1376, 0
    %1379 = vmatpush.msra.mxu0 0.0
    %1380 = vmatpush.msra.mxu0 0.0
    %1381 = vmatpush.msra.mxu0 0.0
    %1382 = vmatpush.msra.mxu0 0.0
    %1383 = vmatpush.msra.mxu0 0.0
    %1384 = vmatpush.msra.mxu0 0.0
    %1385 = vmatpush.msra.mxu0 0.0
    %1386 = vmatpush.msra.mxu0 0.0
    %1387 = vmatpush.msra.mxu0 0.0
    %1388 = vmatpush.msra.mxu0 0.0
    %1389 = vmatpush.msra.mxu0 0.0
    %1390 = vmatpush.msra.mxu0 0.0
    %1391 = vmatpush.msra.mxu0 %v103
    %1392 = vmatpush.msra.mxu0 %v102
    %1393 = vmatpush.msra.mxu0 %v101
    %1394 = vmatpush.msra.mxu0 %v100
    %1395 = vmatmul.f32.gmra.mxu0 %v1377
    %v1396 = vpop.f32.mrf.mxu0
    %v1397 = vadd.f32 0.0, %v1396
    %1398 = vdwg.mxu0
    %v1399 = vadd.f32 %v490, %v1397
    %v1400 = vxor.u32 %v1399, 2147483648
    %v1401 = vmul.f32 %v1400, 1.442695
    %v1402 = vpow.pop %v1401
    %v1403 = vadd.f32 %v1402, 1.0
    %v1404 = vrcp.pop %v1403
    %v1405 = vmul.f32 %v1403, %v1404
    %v1406 = vsub.f32 1.0, %v1405
    %v1407 = vmul.f32 %v1404, %v1406
    %v1408 = vadd.f32 %v1404, %v1407
    %vm1409 = vweird.f32 %v1403
    %vm1410 = vweird.f32 %v1404
    %vm1411 = vmor %vm1409, %vm1410
    %v1412 = vsel %vm1411, %v1404, %v1408
    %v1413 = vand.u32 2147483647, %v1403
    %vm1414 = vcmp.eq.f32.partialorder %v1413, 8.507059e+37
    %v1415 = vand.u32 %v1403, 2147483648
    %v1416 = vor.u32 1.1754944e-38, %v1415
    %v1417 = vsel %vm1414, %v1416, %v1412
    %v1418 = vmul.f32 1.0, %v1417
    %v1419 = vtanh.pop %v1399
    %v1420 = vmul.f32 %v1418, %v1296
    %1422 = vrot.lane.b32.xlu0 %v1419, 64
    %v1423 = vpop.permute.xlu0 %1422
    %v1425 = vmul.f32 %v1418, %v1423
    %1427 = vrot.lane.b32.xlu0 %v1425, 32
    %v1428 = vpop.permute.xlu0 %1427
    %v1430 = vadd.f32 %v1420, %v1428
    %v1431 = vtanh.pop %v1430
    %1433 = vrot.lane.b32.xlu0 %v1431, 64
    %v1434 = vpop.permute.xlu0 %1433
    %v1436 = vmul.f32 %v1418, %v1434
    %1438 = vrot.lane.b32.xlu0 %v1436, 96
    %v1439 = vpop.permute.xlu0 %1438
    %1441 = vst.msk [vmem:[%s647 + $0x2] sm:$0x3] %vm846, %v1439
    %1442 = vrot.lane.b32.xlu0 %v1369, 32
    %v1443 = vpop.permute.xlu0 %1442
    %v1444 = vsel %vm110, %v1443, 0
    %1446 = vmatpush.msra.mxu0 0.0
    %1447 = vmatpush.msra.mxu0 0.0
    %1448 = vmatpush.msra.mxu0 0.0
    %1449 = vmatpush.msra.mxu0 0.0
    %1450 = vmatpush.msra.mxu0 0.0
    %1451 = vmatpush.msra.mxu0 0.0
    %1452 = vmatpush.msra.mxu0 0.0
    %1453 = vmatpush.msra.mxu0 0.0
    %1454 = vmatpush.msra.mxu0 0.0
    %1455 = vmatpush.msra.mxu0 0.0
    %1456 = vmatpush.msra.mxu0 0.0
    %1457 = vmatpush.msra.mxu0 0.0
    %1458 = vmatpush.msra.mxu0 %v98
    %1459 = vmatpush.msra.mxu0 %v97
    %1460 = vmatpush.msra.mxu0 %v96
    %1461 = vmatpush.msra.mxu0 %v95
    %1462 = vmatmul.f32.gmra.mxu0 %v1444
    %v1463 = vpop.f32.mrf.mxu0
    %v1464 = vadd.f32 0.0, %v1463
    %1465 = vdwg.mxu0
    %v1466 = vadd.f32 %v311, %v1464
    %v1467 = vxor.u32 %v1466, 2147483648
    %v1468 = vmul.f32 %v1467, 1.442695
    %v1469 = vpow.pop %v1468
    %v1470 = vadd.f32 %v1469, 1.0
    %v1471 = vrcp.pop %v1470
    %v1472 = vmul.f32 %v1470, %v1471
    %v1473 = vsub.f32 1.0, %v1472
    %v1474 = vmul.f32 %v1471, %v1473
    %v1475 = vadd.f32 %v1471, %v1474
    %vm1476 = vweird.f32 %v1470
    %vm1477 = vweird.f32 %v1471
    %vm1478 = vmor %vm1476, %vm1477
    %v1479 = vsel %vm1478, %v1471, %v1475
    %v1480 = vand.u32 2147483647, %v1470
    %vm1481 = vcmp.eq.f32.partialorder %v1480, 8.507059e+37
    %v1482 = vand.u32 %v1470, 2147483648
    %v1483 = vor.u32 1.1754944e-38, %v1482
    %v1484 = vsel %vm1481, %v1483, %v1479
    %v1485 = vmul.f32 1.0, %v1484
    %v1486 = vtanh.pop %v1466
    %v1487 = vmul.f32 %v1485, %v1363
    %1489 = vrot.lane.b32.xlu0 %v1486, 64
    %v1490 = vpop.permute.xlu0 %1489
    %v1492 = vmul.f32 %v1485, %v1490
    %1494 = vrot.lane.b32.xlu0 %v1492, 32
    %v1495 = vpop.permute.xlu0 %1494
    %v1497 = vadd.f32 %v1487, %v1495
    %v1498 = vtanh.pop %v1497
    %1500 = vrot.lane.b32.xlu0 %v1498, 64
    %v1501 = vpop.permute.xlu0 %1500
    %v1503 = vmul.f32 %v1485, %v1501
    %1504 = vst.msk [vmem:[#allocation10 + $0x2] sm:$0x3] %vm977, %v1503
    %1505 = vrot.lane.b32.xlu0 %v1436, 32
    %v1506 = vpop.permute.xlu0 %1505
    %v1507 = vsel %vm110, %v1506, 0
    %1509 = vmatpush.msra.mxu0 0.0
    %1510 = vmatpush.msra.mxu0 0.0
    %1511 = vmatpush.msra.mxu0 0.0
    %1512 = vmatpush.msra.mxu0 0.0
    %1513 = vmatpush.msra.mxu0 0.0
    %1514 = vmatpush.msra.mxu0 0.0
    %1515 = vmatpush.msra.mxu0 0.0
    %1516 = vmatpush.msra.mxu0 0.0
    %1517 = vmatpush.msra.mxu0 0.0
    %1518 = vmatpush.msra.mxu0 0.0
    %1519 = vmatpush.msra.mxu0 0.0
    %1520 = vmatpush.msra.mxu0 0.0
    %1521 = vmatpush.msra.mxu0 %v103
    %1522 = vmatpush.msra.mxu0 %v102
    %1523 = vmatpush.msra.mxu0 %v101
    %1524 = vmatpush.msra.mxu0 %v100
    %1525 = vmatmul.f32.gmra.mxu0 %v1507
    %v1526 = vpop.f32.mrf.mxu0
    %v1527 = vadd.f32 0.0, %v1526
    %1528 = vdwg.mxu0
    %v1529 = vadd.f32 %v516, %v1527
    %v1530 = vxor.u32 %v1529, 2147483648
    %v1531 = vmul.f32 %v1530, 1.442695
    %v1532 = vpow.pop %v1531
    %v1533 = vadd.f32 %v1532, 1.0
    %v1534 = vrcp.pop %v1533
    %v1535 = vmul.f32 %v1533, %v1534
    %v1536 = vsub.f32 1.0, %v1535
    %v1537 = vmul.f32 %v1534, %v1536
    %v1538 = vadd.f32 %v1534, %v1537
    %vm1539 = vweird.f32 %v1533
    %vm1540 = vweird.f32 %v1534
    %vm1541 = vmor %vm1539, %vm1540
    %v1542 = vsel %vm1541, %v1534, %v1538
    %v1543 = vand.u32 2147483647, %v1533
    %vm1544 = vcmp.eq.f32.partialorder %v1543, 8.507059e+37
    %v1545 = vand.u32 %v1533, 2147483648
    %v1546 = vor.u32 1.1754944e-38, %v1545
    %v1547 = vsel %vm1544, %v1546, %v1542
    %v1548 = vmul.f32 1.0, %v1547
    %v1549 = vtanh.pop %v1529
    %v1550 = vmul.f32 %v1548, %v1430
    %1552 = vrot.lane.b32.xlu0 %v1549, 64
    %v1553 = vpop.permute.xlu0 %1552
    %v1555 = vmul.f32 %v1548, %v1553
    %1557 = vrot.lane.b32.xlu0 %v1555, 32
    %v1558 = vpop.permute.xlu0 %1557
    %v1560 = vadd.f32 %v1550, %v1558
    %v1561 = vtanh.pop %v1560
    %1563 = vrot.lane.b32.xlu0 %v1561, 64
    %v1564 = vpop.permute.xlu0 %1563
    %v1566 = vmul.f32 %v1548, %v1564
    %1567 = vst.msk [vmem:[%s647 + $0x2] sm:$0x3] %vm977, %v1566
    %s1568 = scalar_lea.vmem [#allocation5], 32
    %v1569 = vld [vmem:[%s1568] sm:$0xff]
    %v1570 = vld [vmem:[%s1568 + $0x8] sm:$0xff]
    %v1571 = vld [vmem:[%s1568 + $0x10] sm:$0xff]
    %v1572 = vld [vmem:[%s1568 + $0x18] sm:$0xff]
    %s1573 = scalar_lea.vmem [#allocation5], 96
    %v1574 = vld [vmem:[%s1573] sm:$0xff]
    %v1575 = vld [vmem:[%s1573 + $0x8] sm:$0xff]
    %v1576 = vld [vmem:[%s1573 + $0x10] sm:$0xff]
    %v1577 = vld [vmem:[%s1573 + $0x18] sm:$0xff]
    %s1578 = scalar_lea.vmem [#allocation7], 32
    %v1579 = vld [vmem:[%s1578] sm:$0xff]
    %v1580 = vld [vmem:[%s1578 + $0x8] sm:$0xff]
    %v1581 = vld [vmem:[%s1578 + $0x10] sm:$0xff]
    %v1582 = vld [vmem:[%s1578 + $0x18] sm:$0xff]
    %s1583 = scalar_lea.vmem [#allocation7], 96
    %v1584 = vld [vmem:[%s1583] sm:$0xff]
    %v1585 = vld [vmem:[%s1583 + $0x8] sm:$0xff]
    %v1586 = vld [vmem:[%s1583 + $0x10] sm:$0xff]
    %v1587 = vld [vmem:[%s1583 + $0x18] sm:$0xff]
    %s1588 = scalar_lea.vmem [#allocation8], 1
    %v1589 = vld [vmem:[%s1588] sm:$0x1]
    %s1590 = scalar_lea.vmem [#allocation8], 3
    %v1591 = vld [vmem:[%s1590] sm:$0x1]
    %v1593 = vperm.slane %v1589, 0
    %1595 = vmatpush.msra.mxu0 0.0
    %1596 = vmatpush.msra.mxu0 0.0
    %1597 = vmatpush.msra.mxu0 0.0
    %1598 = vmatpush.msra.mxu0 0.0
    %1599 = vmatpush.msra.mxu0 0.0
    %1600 = vmatpush.msra.mxu0 0.0
    %1601 = vmatpush.msra.mxu0 0.0
    %1602 = vmatpush.msra.mxu0 0.0
    %1603 = vmatpush.msra.mxu0 0.0
    %1604 = vmatpush.msra.mxu0 0.0
    %1605 = vmatpush.msra.mxu0 0.0
    %1606 = vmatpush.msra.mxu0 0.0
    %1607 = vmatpush.msra.mxu0 %v1572
    %1608 = vmatpush.msra.mxu0 %v1571
    %1609 = vmatpush.msra.mxu0 %v1570
    %1610 = vmatpush.msra.mxu0 %v1569
    %1611 = vmatmul.f32.gmra.mxu0 %v649
    %v1612 = vpop.f32.mrf.mxu0
    %v1613 = vadd.f32 %v1593, %v1612
    %1614 = vdwg.mxu0
    %1615 = vmatpush.msra.mxu0 0.0
    %1616 = vmatpush.msra.mxu0 0.0
    %1617 = vmatpush.msra.mxu0 0.0
    %1618 = vmatpush.msra.mxu0 0.0
    %1619 = vmatpush.msra.mxu0 0.0
    %1620 = vmatpush.msra.mxu0 0.0
    %1621 = vmatpush.msra.mxu0 0.0
    %1622 = vmatpush.msra.mxu0 0.0
    %1623 = vmatpush.msra.mxu0 0.0
    %1624 = vmatpush.msra.mxu0 0.0
    %1625 = vmatpush.msra.mxu0 0.0
    %1626 = vmatpush.msra.mxu0 0.0
    %1627 = vmatpush.msra.mxu0 %v1572
    %1628 = vmatpush.msra.mxu0 %v1571
    %1629 = vmatpush.msra.mxu0 %v1570
    %1630 = vmatpush.msra.mxu0 %v1569
    %1631 = vmatmul.f32.gmra.mxu0 %v782
    %v1632 = vpop.f32.mrf.mxu0
    %v1633 = vadd.f32 %v1593, %v1632
    %1634 = vdwg.mxu0
    %1635 = vmatpush.msra.mxu0 0.0
    %1636 = vmatpush.msra.mxu0 0.0
    %1637 = vmatpush.msra.mxu0 0.0
    %1638 = vmatpush.msra.mxu0 0.0
    %1639 = vmatpush.msra.mxu0 0.0
    %1640 = vmatpush.msra.mxu0 0.0
    %1641 = vmatpush.msra.mxu0 0.0
    %1642 = vmatpush.msra.mxu0 0.0
    %1643 = vmatpush.msra.mxu0 0.0
    %1644 = vmatpush.msra.mxu0 0.0
    %1645 = vmatpush.msra.mxu0 0.0
    %1646 = vmatpush.msra.mxu0 0.0
    %1647 = vmatpush.msra.mxu0 %v1572
    %1648 = vmatpush.msra.mxu0 %v1571
    %1649 = vmatpush.msra.mxu0 %v1570
    %1650 = vmatpush.msra.mxu0 %v1569
    %1651 = vmatmul.f32.gmra.mxu0 %v917
    %v1652 = vpop.f32.mrf.mxu0
    %v1653 = vadd.f32 %v1593, %v1652
    %1654 = vdwg.mxu0
    %1655 = vmatpush.msra.mxu0 0.0
    %1656 = vmatpush.msra.mxu0 0.0
    %1657 = vmatpush.msra.mxu0 0.0
    %1658 = vmatpush.msra.mxu0 0.0
    %1659 = vmatpush.msra.mxu0 0.0
    %1660 = vmatpush.msra.mxu0 0.0
    %1661 = vmatpush.msra.mxu0 0.0
    %1662 = vmatpush.msra.mxu0 0.0
    %1663 = vmatpush.msra.mxu0 0.0
    %1664 = vmatpush.msra.mxu0 0.0
    %1665 = vmatpush.msra.mxu0 0.0
    %1666 = vmatpush.msra.mxu0 0.0
    %1667 = vmatpush.msra.mxu0 %v1572
    %1668 = vmatpush.msra.mxu0 %v1571
    %1669 = vmatpush.msra.mxu0 %v1570
    %1670 = vmatpush.msra.mxu0 %v1569
    %1671 = vmatmul.f32.gmra.mxu0 %v1045
    %v1672 = vpop.f32.mrf.mxu0
    %v1673 = vadd.f32 %v1593, %v1672
    %1674 = vdwg.mxu0
    %1675 = vmatpush.msra.mxu0 0.0
    %1676 = vmatpush.msra.mxu0 0.0
    %1677 = vmatpush.msra.mxu0 0.0
    %1678 = vmatpush.msra.mxu0 0.0
    %1679 = vmatpush.msra.mxu0 0.0
    %1680 = vmatpush.msra.mxu0 0.0
    %1681 = vmatpush.msra.mxu0 0.0
    %1682 = vmatpush.msra.mxu0 0.0
    %1683 = vmatpush.msra.mxu0 0.0
    %1684 = vmatpush.msra.mxu0 0.0
    %1685 = vmatpush.msra.mxu0 0.0
    %1686 = vmatpush.msra.mxu0 0.0
    %1687 = vmatpush.msra.mxu0 %v1572
    %1688 = vmatpush.msra.mxu0 %v1571
    %1689 = vmatpush.msra.mxu0 %v1570
    %1690 = vmatpush.msra.mxu0 %v1569
    %1691 = vmatmul.f32.gmra.mxu0 %v1178
    %v1692 = vpop.f32.mrf.mxu0
    %v1693 = vadd.f32 %v1593, %v1692
    %1694 = vdwg.mxu0
    %1695 = vmatpush.msra.mxu0 0.0
    %1696 = vmatpush.msra.mxu0 0.0
    %1697 = vmatpush.msra.mxu0 0.0
    %1698 = vmatpush.msra.mxu0 0.0
    %1699 = vmatpush.msra.mxu0 0.0
    %1700 = vmatpush.msra.mxu0 0.0
    %1701 = vmatpush.msra.mxu0 0.0
    %1702 = vmatpush.msra.mxu0 0.0
    %1703 = vmatpush.msra.mxu0 0.0
    %1704 = vmatpush.msra.mxu0 0.0
    %1705 = vmatpush.msra.mxu0 0.0
    %1706 = vmatpush.msra.mxu0 0.0
    %1707 = vmatpush.msra.mxu0 %v1572
    %1708 = vmatpush.msra.mxu0 %v1571
    %1709 = vmatpush.msra.mxu0 %v1570
    %1710 = vmatpush.msra.mxu0 %v1569
    %1711 = vmatmul.f32.gmra.mxu0 %v1310
    %v1712 = vpop.f32.mrf.mxu0
    %v1713 = vadd.f32 %v1593, %v1712
    %1714 = vdwg.mxu0
    %1715 = vmatpush.msra.mxu0 0.0
    %1716 = vmatpush.msra.mxu0 0.0
    %1717 = vmatpush.msra.mxu0 0.0
    %1718 = vmatpush.msra.mxu0 0.0
    %1719 = vmatpush.msra.mxu0 0.0
    %1720 = vmatpush.msra.mxu0 0.0
    %1721 = vmatpush.msra.mxu0 0.0
    %1722 = vmatpush.msra.mxu0 0.0
    %1723 = vmatpush.msra.mxu0 0.0
    %1724 = vmatpush.msra.mxu0 0.0
    %1725 = vmatpush.msra.mxu0 0.0
    %1726 = vmatpush.msra.mxu0 0.0
    %1727 = vmatpush.msra.mxu0 %v1572
    %1728 = vmatpush.msra.mxu0 %v1571
    %1729 = vmatpush.msra.mxu0 %v1570
    %1730 = vmatpush.msra.mxu0 %v1569
    %1731 = vmatmul.f32.gmra.mxu0 %v1444
    %v1732 = vpop.f32.mrf.mxu0
    %v1733 = vadd.f32 %v1593, %v1732
    %1734 = vdwg.mxu0
    %1736 = vrot.lane.b32.xlu0 %v1503, 32
    %v1737 = vpop.permute.xlu0 %1736
    %v1738 = vsel %vm110, %v1737, 0
    %1740 = vmatpush.msra.mxu0 0.0
    %1741 = vmatpush.msra.mxu0 0.0
    %1742 = vmatpush.msra.mxu0 0.0
    %1743 = vmatpush.msra.mxu0 0.0
    %1744 = vmatpush.msra.mxu0 0.0
    %1745 = vmatpush.msra.mxu0 0.0
    %1746 = vmatpush.msra.mxu0 0.0
    %1747 = vmatpush.msra.mxu0 0.0
    %1748 = vmatpush.msra.mxu0 0.0
    %1749 = vmatpush.msra.mxu0 0.0
    %1750 = vmatpush.msra.mxu0 0.0
    %1751 = vmatpush.msra.mxu0 0.0
    %1752 = vmatpush.msra.mxu0 %v1572
    %1753 = vmatpush.msra.mxu0 %v1571
    %1754 = vmatpush.msra.mxu0 %v1570
    %1755 = vmatpush.msra.mxu0 %v1569
    %1756 = vmatmul.f32.gmra.mxu0 %v1738
    %v1757 = vpop.f32.mrf.mxu0
    %v1758 = vadd.f32 %v1593, %v1757
    %1759 = vdwg.mxu0
    %v1761 = vperm.slane %v1591, 0
    %1763 = vmatpush.msra.mxu0 0.0
    %1764 = vmatpush.msra.mxu0 0.0
    %1765 = vmatpush.msra.mxu0 0.0
    %1766 = vmatpush.msra.mxu0 0.0
    %1767 = vmatpush.msra.mxu0 0.0
    %1768 = vmatpush.msra.mxu0 0.0
    %1769 = vmatpush.msra.mxu0 0.0
    %1770 = vmatpush.msra.mxu0 0.0
    %1771 = vmatpush.msra.mxu0 0.0
    %1772 = vmatpush.msra.mxu0 0.0
    %1773 = vmatpush.msra.mxu0 0.0
    %1774 = vmatpush.msra.mxu0 0.0
    %1775 = vmatpush.msra.mxu0 %v1577
    %1776 = vmatpush.msra.mxu0 %v1576
    %1777 = vmatpush.msra.mxu0 %v1575
    %1778 = vmatpush.msra.mxu0 %v1574
    %1779 = vmatmul.f32.gmra.mxu0 %v715
    %v1780 = vpop.f32.mrf.mxu0
    %v1781 = vadd.f32 %v1761, %v1780
    %1782 = vdwg.mxu0
    %1783 = vmatpush.msra.mxu0 0.0
    %1784 = vmatpush.msra.mxu0 0.0
    %1785 = vmatpush.msra.mxu0 0.0
    %1786 = vmatpush.msra.mxu0 0.0
    %1787 = vmatpush.msra.mxu0 0.0
    %1788 = vmatpush.msra.mxu0 0.0
    %1789 = vmatpush.msra.mxu0 0.0
    %1790 = vmatpush.msra.mxu0 0.0
    %1791 = vmatpush.msra.mxu0 0.0
    %1792 = vmatpush.msra.mxu0 0.0
    %1793 = vmatpush.msra.mxu0 0.0
    %1794 = vmatpush.msra.mxu0 0.0
    %1795 = vmatpush.msra.mxu0 %v1577
    %1796 = vmatpush.msra.mxu0 %v1576
    %1797 = vmatpush.msra.mxu0 %v1575
    %1798 = vmatpush.msra.mxu0 %v1574
    %1799 = vmatmul.f32.gmra.mxu0 %v850
    %v1800 = vpop.f32.mrf.mxu0
    %v1801 = vadd.f32 %v1761, %v1800
    %1802 = vdwg.mxu0
    %1803 = vmatpush.msra.mxu0 0.0
    %1804 = vmatpush.msra.mxu0 0.0
    %1805 = vmatpush.msra.mxu0 0.0
    %1806 = vmatpush.msra.mxu0 0.0
    %1807 = vmatpush.msra.mxu0 0.0
    %1808 = vmatpush.msra.mxu0 0.0
    %1809 = vmatpush.msra.mxu0 0.0
    %1810 = vmatpush.msra.mxu0 0.0
    %1811 = vmatpush.msra.mxu0 0.0
    %1812 = vmatpush.msra.mxu0 0.0
    %1813 = vmatpush.msra.mxu0 0.0
    %1814 = vmatpush.msra.mxu0 0.0
    %1815 = vmatpush.msra.mxu0 %v1577
    %1816 = vmatpush.msra.mxu0 %v1576
    %1817 = vmatpush.msra.mxu0 %v1575
    %1818 = vmatpush.msra.mxu0 %v1574
    %1819 = vmatmul.f32.gmra.mxu0 %v981
    %v1820 = vpop.f32.mrf.mxu0
    %v1821 = vadd.f32 %v1761, %v1820
    %1822 = vdwg.mxu0
    %1823 = vmatpush.msra.mxu0 0.0
    %1824 = vmatpush.msra.mxu0 0.0
    %1825 = vmatpush.msra.mxu0 0.0
    %1826 = vmatpush.msra.mxu0 0.0
    %1827 = vmatpush.msra.mxu0 0.0
    %1828 = vmatpush.msra.mxu0 0.0
    %1829 = vmatpush.msra.mxu0 0.0
    %1830 = vmatpush.msra.mxu0 0.0
    %1831 = vmatpush.msra.mxu0 0.0
    %1832 = vmatpush.msra.mxu0 0.0
    %1833 = vmatpush.msra.mxu0 0.0
    %1834 = vmatpush.msra.mxu0 0.0
    %1835 = vmatpush.msra.mxu0 %v1577
    %1836 = vmatpush.msra.mxu0 %v1576
    %1837 = vmatpush.msra.mxu0 %v1575
    %1838 = vmatpush.msra.mxu0 %v1574
    %1839 = vmatmul.f32.gmra.mxu0 %v1113
    %v1840 = vpop.f32.mrf.mxu0
    %v1841 = vadd.f32 %v1761, %v1840
    %1842 = vdwg.mxu0
    %1843 = vmatpush.msra.mxu0 0.0
    %1844 = vmatpush.msra.mxu0 0.0
    %1845 = vmatpush.msra.mxu0 0.0
    %1846 = vmatpush.msra.mxu0 0.0
    %1847 = vmatpush.msra.mxu0 0.0
    %1848 = vmatpush.msra.mxu0 0.0
    %1849 = vmatpush.msra.mxu0 0.0
    %1850 = vmatpush.msra.mxu0 0.0
    %1851 = vmatpush.msra.mxu0 0.0
    %1852 = vmatpush.msra.mxu0 0.0
    %1853 = vmatpush.msra.mxu0 0.0
    %1854 = vmatpush.msra.mxu0 0.0
    %1855 = vmatpush.msra.mxu0 %v1577
    %1856 = vmatpush.msra.mxu0 %v1576
    %1857 = vmatpush.msra.mxu0 %v1575
    %1858 = vmatpush.msra.mxu0 %v1574
    %1859 = vmatmul.f32.gmra.mxu0 %v1243
    %v1860 = vpop.f32.mrf.mxu0
    %v1861 = vadd.f32 %v1761, %v1860
    %1862 = vdwg.mxu0
    %1863 = vmatpush.msra.mxu0 0.0
    %1864 = vmatpush.msra.mxu0 0.0
    %1865 = vmatpush.msra.mxu0 0.0
    %1866 = vmatpush.msra.mxu0 0.0
    %1867 = vmatpush.msra.mxu0 0.0
    %1868 = vmatpush.msra.mxu0 0.0
    %1869 = vmatpush.msra.mxu0 0.0
    %1870 = vmatpush.msra.mxu0 0.0
    %1871 = vmatpush.msra.mxu0 0.0
    %1872 = vmatpush.msra.mxu0 0.0
    %1873 = vmatpush.msra.mxu0 0.0
    %1874 = vmatpush.msra.mxu0 0.0
    %1875 = vmatpush.msra.mxu0 %v1577
    %1876 = vmatpush.msra.mxu0 %v1576
    %1877 = vmatpush.msra.mxu0 %v1575
    %1878 = vmatpush.msra.mxu0 %v1574
    %1879 = vmatmul.f32.gmra.mxu0 %v1377
    %v1880 = vpop.f32.mrf.mxu0
    %v1881 = vadd.f32 %v1761, %v1880
    %1882 = vdwg.mxu0
    %1883 = vmatpush.msra.mxu0 0.0
    %1884 = vmatpush.msra.mxu0 0.0
    %1885 = vmatpush.msra.mxu0 0.0
    %1886 = vmatpush.msra.mxu0 0.0
    %1887 = vmatpush.msra.mxu0 0.0
    %1888 = vmatpush.msra.mxu0 0.0
    %1889 = vmatpush.msra.mxu0 0.0
    %1890 = vmatpush.msra.mxu0 0.0
    %1891 = vmatpush.msra.mxu0 0.0
    %1892 = vmatpush.msra.mxu0 0.0
    %1893 = vmatpush.msra.mxu0 0.0
    %1894 = vmatpush.msra.mxu0 0.0
    %1895 = vmatpush.msra.mxu0 %v1577
    %1896 = vmatpush.msra.mxu0 %v1576
    %1897 = vmatpush.msra.mxu0 %v1575
    %1898 = vmatpush.msra.mxu0 %v1574
    %1899 = vmatmul.f32.gmra.mxu0 %v1507
    %v1900 = vpop.f32.mrf.mxu0
    %v1901 = vadd.f32 %v1761, %v1900
    %1902 = vdwg.mxu0
    %1904 = vrot.lane.b32.xlu0 %v1566, 32
    %v1905 = vpop.permute.xlu0 %1904
    %v1906 = vsel %vm110, %v1905, 0
    %1908 = vmatpush.msra.mxu0 0.0
    %1909 = vmatpush.msra.mxu0 0.0
    %1910 = vmatpush.msra.mxu0 0.0
    %1911 = vmatpush.msra.mxu0 0.0
    %1912 = vmatpush.msra.mxu0 0.0
    %1913 = vmatpush.msra.mxu0 0.0
    %1914 = vmatpush.msra.mxu0 0.0
    %1915 = vmatpush.msra.mxu0 0.0
    %1916 = vmatpush.msra.mxu0 0.0
    %1917 = vmatpush.msra.mxu0 0.0
    %1918 = vmatpush.msra.mxu0 0.0
    %1919 = vmatpush.msra.mxu0 0.0
    %1920 = vmatpush.msra.mxu0 %v1577
    %1921 = vmatpush.msra.mxu0 %v1576
    %1922 = vmatpush.msra.mxu0 %v1575
    %1923 = vmatpush.msra.mxu0 %v1574
    %1924 = vmatmul.f32.gmra.mxu0 %v1906
    %v1925 = vpop.f32.mrf.mxu0
    %v1926 = vadd.f32 %v1761, %v1925
    %1927 = vdwg.mxu0
    %1928 = vmatpush.msra.mxu0 0.0
    %1929 = vmatpush.msra.mxu0 0.0
    %1930 = vmatpush.msra.mxu0 0.0
    %1931 = vmatpush.msra.mxu0 0.0
    %1932 = vmatpush.msra.mxu0 0.0
    %1933 = vmatpush.msra.mxu0 0.0
    %1934 = vmatpush.msra.mxu0 0.0
    %1935 = vmatpush.msra.mxu0 0.0
    %1936 = vmatpush.msra.mxu0 0.0
    %1937 = vmatpush.msra.mxu0 0.0
    %1938 = vmatpush.msra.mxu0 0.0
    %1939 = vmatpush.msra.mxu0 0.0
    %1940 = vmatpush.msra.mxu0 %v1582
    %1941 = vmatpush.msra.mxu0 %v1581
    %1942 = vmatpush.msra.mxu0 %v1580
    %1943 = vmatpush.msra.mxu0 %v1579
    %1944 = vmatmul.f32.gmra.mxu0 %v519
    %v1945 = vpop.f32.mrf.mxu0
    %v1946 = vadd.f32 0.0, %v1945
    %1947 = vdwg.mxu0
    %v1948 = vadd.f32 %v1613, %v1946
    %v1949 = vxor.u32 %v1948, 2147483648
    %v1950 = vmul.f32 %v1949, 1.442695
    %v1951 = vpow.pop %v1950
    %v1952 = vadd.f32 %v1951, 1.0
    %v1953 = vrcp.pop %v1952
    %v1954 = vmul.f32 %v1952, %v1953
    %v1955 = vsub.f32 1.0, %v1954
    %v1956 = vmul.f32 %v1953, %v1955
    %v1957 = vadd.f32 %v1953, %v1956
    %vm1958 = vweird.f32 %v1952
    %vm1959 = vweird.f32 %v1953
    %vm1960 = vmor %vm1958, %vm1959
    %v1961 = vsel %vm1960, %v1953, %v1957
    %v1962 = vand.u32 2147483647, %v1952
    %vm1963 = vcmp.eq.f32.partialorder %v1962, 8.507059e+37
    %v1964 = vand.u32 %v1952, 2147483648
    %v1965 = vor.u32 1.1754944e-38, %v1964
    %v1966 = vsel %vm1963, %v1965, %v1961
    %v1967 = vmul.f32 1.0, %v1966
    %v1968 = vtanh.pop %v1948
    %v1969 = vmul.f32 %v1967, 0.0
    %1971 = vrot.lane.b32.xlu0 %v1968, 64
    %v1972 = vpop.permute.xlu0 %1971
    %v1974 = vmul.f32 %v1967, %v1972
    %1976 = vrot.lane.b32.xlu0 %v1974, 32
    %v1977 = vpop.permute.xlu0 %1976
    %v1979 = vadd.f32 %v1969, %v1977
    %v1980 = vtanh.pop %v1979
    %1982 = vrot.lane.b32.xlu0 %v1980, 64
    %v1983 = vpop.permute.xlu0 %1982
    %v1985 = vmul.f32 %v1967, %v1983
    %v1986 = vadd.f32 %v1985, %v578
    %1988 = vrot.lane.b32.xlu0 %v1986, 32
    %v1989 = vpop.permute.xlu0 %1988
    %s1991 = scalar_lea.vmem [#allocation10], 4
    %1992 = vst.msk [vmem:[%s1991] sm:$0x3] %vm583, %v1989
    %1993 = vmatpush.msra.mxu0 0.0
    %1994 = vmatpush.msra.mxu0 0.0
    %1995 = vmatpush.msra.mxu0 0.0
    %1996 = vmatpush.msra.mxu0 0.0
    %1997 = vmatpush.msra.mxu0 0.0
    %1998 = vmatpush.msra.mxu0 0.0
    %1999 = vmatpush.msra.mxu0 0.0
    %2000 = vmatpush.msra.mxu0 0.0
    %2001 = vmatpush.msra.mxu0 0.0
    %2002 = vmatpush.msra.mxu0 0.0
    %2003 = vmatpush.msra.mxu0 0.0
    %2004 = vmatpush.msra.mxu0 0.0
    %2005 = vmatpush.msra.mxu0 %v1587
    %2006 = vmatpush.msra.mxu0 %v1586
    %2007 = vmatpush.msra.mxu0 %v1585
    %2008 = vmatpush.msra.mxu0 %v1584
    %2009 = vmatmul.f32.gmra.mxu0 %v519
    %v2010 = vpop.f32.mrf.mxu0
    %v2011 = vadd.f32 0.0, %v2010
    %2012 = vdwg.mxu0
    %v2013 = vadd.f32 %v1781, %v2011
    %v2014 = vxor.u32 %v2013, 2147483648
    %v2015 = vmul.f32 %v2014, 1.442695
    %v2016 = vpow.pop %v2015
    %v2017 = vadd.f32 %v2016, 1.0
    %v2018 = vrcp.pop %v2017
    %v2019 = vmul.f32 %v2017, %v2018
    %v2020 = vsub.f32 1.0, %v2019
    %v2021 = vmul.f32 %v2018, %v2020
    %v2022 = vadd.f32 %v2018, %v2021
    %vm2023 = vweird.f32 %v2017
    %vm2024 = vweird.f32 %v2018
    %vm2025 = vmor %vm2023, %vm2024
    %v2026 = vsel %vm2025, %v2018, %v2022
    %v2027 = vand.u32 2147483647, %v2017
    %vm2028 = vcmp.eq.f32.partialorder %v2027, 8.507059e+37
    %v2029 = vand.u32 %v2017, 2147483648
    %v2030 = vor.u32 1.1754944e-38, %v2029
    %v2031 = vsel %vm2028, %v2030, %v2026
    %v2032 = vmul.f32 1.0, %v2031
    %v2033 = vtanh.pop %v2013
    %v2034 = vmul.f32 %v2032, 0.0
    %2036 = vrot.lane.b32.xlu0 %v2033, 64
    %v2037 = vpop.permute.xlu0 %2036
    %v2039 = vmul.f32 %v2032, %v2037
    %2041 = vrot.lane.b32.xlu0 %v2039, 32
    %v2042 = vpop.permute.xlu0 %2041
    %v2044 = vadd.f32 %v2034, %v2042
    %v2045 = vtanh.pop %v2044
    %2047 = vrot.lane.b32.xlu0 %v2045, 64
    %v2048 = vpop.permute.xlu0 %2047
    %v2050 = vmul.f32 %v2032, %v2048
    %v2051 = vadd.f32 %v2050, %v642
    %2053 = vrot.lane.b32.xlu0 %v2051, 32
    %v2054 = vpop.permute.xlu0 %2053
    %s2056 = scalar_lea.vmem [#allocation10], 12
    %2057 = vst.msk [vmem:[%s2056] sm:$0x3] %vm583, %v2054
    %2059 = vrot.lane.b32.xlu0 %v1985, 32
    %v2060 = vpop.permute.xlu0 %2059
    %v2061 = vsel %vm110, %v2060, 0
    %2063 = vmatpush.msra.mxu0 0.0
    %2064 = vmatpush.msra.mxu0 0.0
    %2065 = vmatpush.msra.mxu0 0.0
    %2066 = vmatpush.msra.mxu0 0.0
    %2067 = vmatpush.msra.mxu0 0.0
    %2068 = vmatpush.msra.mxu0 0.0
    %2069 = vmatpush.msra.mxu0 0.0
    %2070 = vmatpush.msra.mxu0 0.0
    %2071 = vmatpush.msra.mxu0 0.0
    %2072 = vmatpush.msra.mxu0 0.0
    %2073 = vmatpush.msra.mxu0 0.0
    %2074 = vmatpush.msra.mxu0 0.0
    %2075 = vmatpush.msra.mxu0 %v1582
    %2076 = vmatpush.msra.mxu0 %v1581
    %2077 = vmatpush.msra.mxu0 %v1580
    %2078 = vmatpush.msra.mxu0 %v1579
    %2079 = vmatmul.f32.gmra.mxu0 %v2061
    %v2080 = vpop.f32.mrf.mxu0
    %v2081 = vadd.f32 0.0, %v2080
    %2082 = vdwg.mxu0
    %v2083 = vadd.f32 %v1633, %v2081
    %v2084 = vxor.u32 %v2083, 2147483648
    %v2085 = vmul.f32 %v2084, 1.442695
    %v2086 = vpow.pop %v2085
    %v2087 = vadd.f32 %v2086, 1.0
    %v2088 = vrcp.pop %v2087
    %v2089 = vmul.f32 %v2087, %v2088
    %v2090 = vsub.f32 1.0, %v2089
    %v2091 = vmul.f32 %v2088, %v2090
    %v2092 = vadd.f32 %v2088, %v2091
    %vm2093 = vweird.f32 %v2087
    %vm2094 = vweird.f32 %v2088
    %vm2095 = vmor %vm2093, %vm2094
    %v2096 = vsel %vm2095, %v2088, %v2092
    %v2097 = vand.u32 2147483647, %v2087
    %vm2098 = vcmp.eq.f32.partialorder %v2097, 8.507059e+37
    %v2099 = vand.u32 %v2087, 2147483648
    %v2100 = vor.u32 1.1754944e-38, %v2099
    %v2101 = vsel %vm2098, %v2100, %v2096
    %v2102 = vmul.f32 1.0, %v2101
    %v2103 = vtanh.pop %v2083
    %v2104 = vmul.f32 %v2102, %v1979
    %2106 = vrot.lane.b32.xlu0 %v2103, 64
    %v2107 = vpop.permute.xlu0 %2106
    %v2109 = vmul.f32 %v2102, %v2107
    %2111 = vrot.lane.b32.xlu0 %v2109, 32
    %v2112 = vpop.permute.xlu0 %2111
    %v2114 = vadd.f32 %v2104, %v2112
    %v2115 = vtanh.pop %v2114
    %2117 = vrot.lane.b32.xlu0 %v2115, 64
    %v2118 = vpop.permute.xlu0 %2117
    %v2120 = vmul.f32 %v2102, %v2118
    %v2121 = vadd.f32 %v2120, %v708
    %2123 = vrot.lane.b32.xlu0 %v2121, 64
    %v2124 = vpop.permute.xlu0 %2123
    %2126 = vst.msk [vmem:[%s1991] sm:$0x3] %vm713, %v2124
    %2128 = vrot.lane.b32.xlu0 %v2050, 32
    %v2129 = vpop.permute.xlu0 %2128
    %v2130 = vsel %vm110, %v2129, 0
    %2132 = vmatpush.msra.mxu0 0.0
    %2133 = vmatpush.msra.mxu0 0.0
    %2134 = vmatpush.msra.mxu0 0.0
    %2135 = vmatpush.msra.mxu0 0.0
    %2136 = vmatpush.msra.mxu0 0.0
    %2137 = vmatpush.msra.mxu0 0.0
    %2138 = vmatpush.msra.mxu0 0.0
    %2139 = vmatpush.msra.mxu0 0.0
    %2140 = vmatpush.msra.mxu0 0.0
    %2141 = vmatpush.msra.mxu0 0.0
    %2142 = vmatpush.msra.mxu0 0.0
    %2143 = vmatpush.msra.mxu0 0.0
    %2144 = vmatpush.msra.mxu0 %v1587
    %2145 = vmatpush.msra.mxu0 %v1586
    %2146 = vmatpush.msra.mxu0 %v1585
    %2147 = vmatpush.msra.mxu0 %v1584
    %2148 = vmatmul.f32.gmra.mxu0 %v2130
    %v2149 = vpop.f32.mrf.mxu0
    %v2150 = vadd.f32 0.0, %v2149
    %2151 = vdwg.mxu0
    %v2152 = vadd.f32 %v1801, %v2150
    %v2153 = vxor.u32 %v2152, 2147483648
    %v2154 = vmul.f32 %v2153, 1.442695
    %v2155 = vpow.pop %v2154
    %v2156 = vadd.f32 %v2155, 1.0
    %v2157 = vrcp.pop %v2156
    %v2158 = vmul.f32 %v2156, %v2157
    %v2159 = vsub.f32 1.0, %v2158
    %v2160 = vmul.f32 %v2157, %v2159
    %v2161 = vadd.f32 %v2157, %v2160
    %vm2162 = vweird.f32 %v2156
    %vm2163 = vweird.f32 %v2157
    %vm2164 = vmor %vm2162, %vm2163
    %v2165 = vsel %vm2164, %v2157, %v2161
    %v2166 = vand.u32 2147483647, %v2156
    %vm2167 = vcmp.eq.f32.partialorder %v2166, 8.507059e+37
    %v2168 = vand.u32 %v2156, 2147483648
    %v2169 = vor.u32 1.1754944e-38, %v2168
    %v2170 = vsel %vm2167, %v2169, %v2165
    %v2171 = vmul.f32 1.0, %v2170
    %v2172 = vtanh.pop %v2152
    %v2173 = vmul.f32 %v2171, %v2044
    %2175 = vrot.lane.b32.xlu0 %v2172, 64
    %v2176 = vpop.permute.xlu0 %2175
    %v2178 = vmul.f32 %v2171, %v2176
    %2180 = vrot.lane.b32.xlu0 %v2178, 32
    %v2181 = vpop.permute.xlu0 %2180
    %v2183 = vadd.f32 %v2173, %v2181
    %v2184 = vtanh.pop %v2183
    %2186 = vrot.lane.b32.xlu0 %v2184, 64
    %v2187 = vpop.permute.xlu0 %2186
    %v2189 = vmul.f32 %v2171, %v2187
    %v2190 = vadd.f32 %v2189, %v774
    %2192 = vrot.lane.b32.xlu0 %v2190, 64
    %v2193 = vpop.permute.xlu0 %2192
    %2195 = vst.msk [vmem:[%s2056] sm:$0x3] %vm713, %v2193
    %2197 = vrot.lane.b32.xlu0 %v2120, 32
    %v2198 = vpop.permute.xlu0 %2197
    %v2199 = vsel %vm110, %v2198, 0
    %2201 = vmatpush.msra.mxu0 0.0
    %2202 = vmatpush.msra.mxu0 0.0
    %2203 = vmatpush.msra.mxu0 0.0
    %2204 = vmatpush.msra.mxu0 0.0
    %2205 = vmatpush.msra.mxu0 0.0
    %2206 = vmatpush.msra.mxu0 0.0
    %2207 = vmatpush.msra.mxu0 0.0
    %2208 = vmatpush.msra.mxu0 0.0
    %2209 = vmatpush.msra.mxu0 0.0
    %2210 = vmatpush.msra.mxu0 0.0
    %2211 = vmatpush.msra.mxu0 0.0
    %2212 = vmatpush.msra.mxu0 0.0
    %2213 = vmatpush.msra.mxu0 %v1582
    %2214 = vmatpush.msra.mxu0 %v1581
    %2215 = vmatpush.msra.mxu0 %v1580
    %2216 = vmatpush.msra.mxu0 %v1579
    %2217 = vmatmul.f32.gmra.mxu0 %v2199
    %v2218 = vpop.f32.mrf.mxu0
    %v2219 = vadd.f32 0.0, %v2218
    %2220 = vdwg.mxu0
    %v2221 = vadd.f32 %v1653, %v2219
    %v2222 = vxor.u32 %v2221, 2147483648
    %v2223 = vmul.f32 %v2222, 1.442695
    %v2224 = vpow.pop %v2223
    %v2225 = vadd.f32 %v2224, 1.0
    %v2226 = vrcp.pop %v2225
    %v2227 = vmul.f32 %v2225, %v2226
    %v2228 = vsub.f32 1.0, %v2227
    %v2229 = vmul.f32 %v2226, %v2228
    %v2230 = vadd.f32 %v2226, %v2229
    %vm2231 = vweird.f32 %v2225
    %vm2232 = vweird.f32 %v2226
    %vm2233 = vmor %vm2231, %vm2232
    %v2234 = vsel %vm2233, %v2226, %v2230
    %v2235 = vand.u32 2147483647, %v2225
    %vm2236 = vcmp.eq.f32.partialorder %v2235, 8.507059e+37
    %v2237 = vand.u32 %v2225, 2147483648
    %v2238 = vor.u32 1.1754944e-38, %v2237
    %v2239 = vsel %vm2236, %v2238, %v2234
    %v2240 = vmul.f32 1.0, %v2239
    %v2241 = vtanh.pop %v2221
    %v2242 = vmul.f32 %v2240, %v2114
    %2244 = vrot.lane.b32.xlu0 %v2241, 64
    %v2245 = vpop.permute.xlu0 %2244
    %v2247 = vmul.f32 %v2240, %v2245
    %2249 = vrot.lane.b32.xlu0 %v2247, 32
    %v2250 = vpop.permute.xlu0 %2249
    %v2252 = vadd.f32 %v2242, %v2250
    %v2253 = vtanh.pop %v2252
    %2255 = vrot.lane.b32.xlu0 %v2253, 64
    %v2256 = vpop.permute.xlu0 %2255
    %v2258 = vmul.f32 %v2240, %v2256
    %v2259 = vadd.f32 %v2258, %v841
    %2261 = vrot.lane.b32.xlu0 %v2259, 96
    %v2262 = vpop.permute.xlu0 %2261
    %2264 = vst.msk [vmem:[%s1991] sm:$0x3] %vm846, %v2262
    %2266 = vrot.lane.b32.xlu0 %v2189, 32
    %v2267 = vpop.permute.xlu0 %2266
    %v2268 = vsel %vm110, %v2267, 0
    %2270 = vmatpush.msra.mxu0 0.0
    %2271 = vmatpush.msra.mxu0 0.0
    %2272 = vmatpush.msra.mxu0 0.0
    %2273 = vmatpush.msra.mxu0 0.0
    %2274 = vmatpush.msra.mxu0 0.0
    %2275 = vmatpush.msra.mxu0 0.0
    %2276 = vmatpush.msra.mxu0 0.0
    %2277 = vmatpush.msra.mxu0 0.0
    %2278 = vmatpush.msra.mxu0 0.0
    %2279 = vmatpush.msra.mxu0 0.0
    %2280 = vmatpush.msra.mxu0 0.0
    %2281 = vmatpush.msra.mxu0 0.0
    %2282 = vmatpush.msra.mxu0 %v1587
    %2283 = vmatpush.msra.mxu0 %v1586
    %2284 = vmatpush.msra.mxu0 %v1585
    %2285 = vmatpush.msra.mxu0 %v1584
    %2286 = vmatmul.f32.gmra.mxu0 %v2268
    %v2287 = vpop.f32.mrf.mxu0
    %v2288 = vadd.f32 0.0, %v2287
    %2289 = vdwg.mxu0
    %v2290 = vadd.f32 %v1821, %v2288
    %v2291 = vxor.u32 %v2290, 2147483648
    %v2292 = vmul.f32 %v2291, 1.442695
    %v2293 = vpow.pop %v2292
    %v2294 = vadd.f32 %v2293, 1.0
    %v2295 = vrcp.pop %v2294
    %v2296 = vmul.f32 %v2294, %v2295
    %v2297 = vsub.f32 1.0, %v2296
    %v2298 = vmul.f32 %v2295, %v2297
    %v2299 = vadd.f32 %v2295, %v2298
    %vm2300 = vweird.f32 %v2294
    %vm2301 = vweird.f32 %v2295
    %vm2302 = vmor %vm2300, %vm2301
    %v2303 = vsel %vm2302, %v2295, %v2299
    %v2304 = vand.u32 2147483647, %v2294
    %vm2305 = vcmp.eq.f32.partialorder %v2304, 8.507059e+37
    %v2306 = vand.u32 %v2294, 2147483648
    %v2307 = vor.u32 1.1754944e-38, %v2306
    %v2308 = vsel %vm2305, %v2307, %v2303
    %v2309 = vmul.f32 1.0, %v2308
    %v2310 = vtanh.pop %v2290
    %v2311 = vmul.f32 %v2309, %v2183
    %2313 = vrot.lane.b32.xlu0 %v2310, 64
    %v2314 = vpop.permute.xlu0 %2313
    %v2316 = vmul.f32 %v2309, %v2314
    %2318 = vrot.lane.b32.xlu0 %v2316, 32
    %v2319 = vpop.permute.xlu0 %2318
    %v2321 = vadd.f32 %v2311, %v2319
    %v2322 = vtanh.pop %v2321
    %2324 = vrot.lane.b32.xlu0 %v2322, 64
    %v2325 = vpop.permute.xlu0 %2324
    %v2327 = vmul.f32 %v2309, %v2325
    %v2328 = vadd.f32 %v2327, %v909
    %2330 = vrot.lane.b32.xlu0 %v2328, 96
    %v2331 = vpop.permute.xlu0 %2330
    %2333 = vst.msk [vmem:[%s2056] sm:$0x3] %vm846, %v2331
    %2335 = vrot.lane.b32.xlu0 %v2258, 32
    %v2336 = vpop.permute.xlu0 %2335
    %v2337 = vsel %vm110, %v2336, 0
    %2339 = vmatpush.msra.mxu0 0.0
    %2340 = vmatpush.msra.mxu0 0.0
    %2341 = vmatpush.msra.mxu0 0.0
    %2342 = vmatpush.msra.mxu0 0.0
    %2343 = vmatpush.msra.mxu0 0.0
    %2344 = vmatpush.msra.mxu0 0.0
    %2345 = vmatpush.msra.mxu0 0.0
    %2346 = vmatpush.msra.mxu0 0.0
    %2347 = vmatpush.msra.mxu0 0.0
    %2348 = vmatpush.msra.mxu0 0.0
    %2349 = vmatpush.msra.mxu0 0.0
    %2350 = vmatpush.msra.mxu0 0.0
    %2351 = vmatpush.msra.mxu0 %v1582
    %2352 = vmatpush.msra.mxu0 %v1581
    %2353 = vmatpush.msra.mxu0 %v1580
    %2354 = vmatpush.msra.mxu0 %v1579
    %2355 = vmatmul.f32.gmra.mxu0 %v2337
    %v2356 = vpop.f32.mrf.mxu0
    %v2357 = vadd.f32 0.0, %v2356
    %2358 = vdwg.mxu0
    %v2359 = vadd.f32 %v1673, %v2357
    %v2360 = vxor.u32 %v2359, 2147483648
    %v2361 = vmul.f32 %v2360, 1.442695
    %v2362 = vpow.pop %v2361
    %v2363 = vadd.f32 %v2362, 1.0
    %v2364 = vrcp.pop %v2363
    %v2365 = vmul.f32 %v2363, %v2364
    %v2366 = vsub.f32 1.0, %v2365
    %v2367 = vmul.f32 %v2364, %v2366
    %v2368 = vadd.f32 %v2364, %v2367
    %vm2369 = vweird.f32 %v2363
    %vm2370 = vweird.f32 %v2364
    %vm2371 = vmor %vm2369, %vm2370
    %v2372 = vsel %vm2371, %v2364, %v2368
    %v2373 = vand.u32 2147483647, %v2363
    %vm2374 = vcmp.eq.f32.partialorder %v2373, 8.507059e+37
    %v2375 = vand.u32 %v2363, 2147483648
    %v2376 = vor.u32 1.1754944e-38, %v2375
    %v2377 = vsel %vm2374, %v2376, %v2372
    %v2378 = vmul.f32 1.0, %v2377
    %v2379 = vtanh.pop %v2359
    %v2380 = vmul.f32 %v2378, %v2252
    %2382 = vrot.lane.b32.xlu0 %v2379, 64
    %v2383 = vpop.permute.xlu0 %2382
    %v2385 = vmul.f32 %v2378, %v2383
    %2387 = vrot.lane.b32.xlu0 %v2385, 32
    %v2388 = vpop.permute.xlu0 %2387
    %v2390 = vadd.f32 %v2380, %v2388
    %v2391 = vtanh.pop %v2390
    %2393 = vrot.lane.b32.xlu0 %v2391, 64
    %v2394 = vpop.permute.xlu0 %2393
    %v2396 = vmul.f32 %v2378, %v2394
    %v2397 = vadd.f32 %v2396, %v976
    %2398 = vst.msk [vmem:[%s1991] sm:$0x3] %vm977, %v2397
    %2400 = vrot.lane.b32.xlu0 %v2327, 32
    %v2401 = vpop.permute.xlu0 %2400
    %v2402 = vsel %vm110, %v2401, 0
    %2404 = vmatpush.msra.mxu0 0.0
    %2405 = vmatpush.msra.mxu0 0.0
    %2406 = vmatpush.msra.mxu0 0.0
    %2407 = vmatpush.msra.mxu0 0.0
    %2408 = vmatpush.msra.mxu0 0.0
    %2409 = vmatpush.msra.mxu0 0.0
    %2410 = vmatpush.msra.mxu0 0.0
    %2411 = vmatpush.msra.mxu0 0.0
    %2412 = vmatpush.msra.mxu0 0.0
    %2413 = vmatpush.msra.mxu0 0.0
    %2414 = vmatpush.msra.mxu0 0.0
    %2415 = vmatpush.msra.mxu0 0.0
    %2416 = vmatpush.msra.mxu0 %v1587
    %2417 = vmatpush.msra.mxu0 %v1586
    %2418 = vmatpush.msra.mxu0 %v1585
    %2419 = vmatpush.msra.mxu0 %v1584
    %2420 = vmatmul.f32.gmra.mxu0 %v2402
    %v2421 = vpop.f32.mrf.mxu0
    %v2422 = vadd.f32 0.0, %v2421
    %2423 = vdwg.mxu0
    %v2424 = vadd.f32 %v1841, %v2422
    %v2425 = vxor.u32 %v2424, 2147483648
    %v2426 = vmul.f32 %v2425, 1.442695
    %v2427 = vpow.pop %v2426
    %v2428 = vadd.f32 %v2427, 1.0
    %v2429 = vrcp.pop %v2428
    %v2430 = vmul.f32 %v2428, %v2429
    %v2431 = vsub.f32 1.0, %v2430
    %v2432 = vmul.f32 %v2429, %v2431
    %v2433 = vadd.f32 %v2429, %v2432
    %vm2434 = vweird.f32 %v2428
    %vm2435 = vweird.f32 %v2429
    %vm2436 = vmor %vm2434, %vm2435
    %v2437 = vsel %vm2436, %v2429, %v2433
    %v2438 = vand.u32 2147483647, %v2428
    %vm2439 = vcmp.eq.f32.partialorder %v2438, 8.507059e+37
    %v2440 = vand.u32 %v2428, 2147483648
    %v2441 = vor.u32 1.1754944e-38, %v2440
    %v2442 = vsel %vm2439, %v2441, %v2437
    %v2443 = vmul.f32 1.0, %v2442
    %v2444 = vtanh.pop %v2424
    %v2445 = vmul.f32 %v2443, %v2321
    %2447 = vrot.lane.b32.xlu0 %v2444, 64
    %v2448 = vpop.permute.xlu0 %2447
    %v2450 = vmul.f32 %v2443, %v2448
    %2452 = vrot.lane.b32.xlu0 %v2450, 32
    %v2453 = vpop.permute.xlu0 %2452
    %v2455 = vadd.f32 %v2445, %v2453
    %v2456 = vtanh.pop %v2455
    %2458 = vrot.lane.b32.xlu0 %v2456, 64
    %v2459 = vpop.permute.xlu0 %2458
    %v2461 = vmul.f32 %v2443, %v2459
    %v2462 = vadd.f32 %v2461, %v1040
    %2463 = vst.msk [vmem:[%s2056] sm:$0x3] %vm977, %v2462
    %2465 = vrot.lane.b32.xlu0 %v2396, 32
    %v2466 = vpop.permute.xlu0 %2465
    %v2467 = vsel %vm110, %v2466, 0
    %2469 = vmatpush.msra.mxu0 0.0
    %2470 = vmatpush.msra.mxu0 0.0
    %2471 = vmatpush.msra.mxu0 0.0
    %2472 = vmatpush.msra.mxu0 0.0
    %2473 = vmatpush.msra.mxu0 0.0
    %2474 = vmatpush.msra.mxu0 0.0
    %2475 = vmatpush.msra.mxu0 0.0
    %2476 = vmatpush.msra.mxu0 0.0
    %2477 = vmatpush.msra.mxu0 0.0
    %2478 = vmatpush.msra.mxu0 0.0
    %2479 = vmatpush.msra.mxu0 0.0
    %2480 = vmatpush.msra.mxu0 0.0
    %2481 = vmatpush.msra.mxu0 %v1582
    %2482 = vmatpush.msra.mxu0 %v1581
    %2483 = vmatpush.msra.mxu0 %v1580
    %2484 = vmatpush.msra.mxu0 %v1579
    %2485 = vmatmul.f32.gmra.mxu0 %v2467
    %v2486 = vpop.f32.mrf.mxu0
    %v2487 = vadd.f32 0.0, %v2486
    %2488 = vdwg.mxu0
    %v2489 = vadd.f32 %v1693, %v2487
    %v2490 = vxor.u32 %v2489, 2147483648
    %v2491 = vmul.f32 %v2490, 1.442695
    %v2492 = vpow.pop %v2491
    %v2493 = vadd.f32 %v2492, 1.0
    %v2494 = vrcp.pop %v2493
    %v2495 = vmul.f32 %v2493, %v2494
    %v2496 = vsub.f32 1.0, %v2495
    %v2497 = vmul.f32 %v2494, %v2496
    %v2498 = vadd.f32 %v2494, %v2497
    %vm2499 = vweird.f32 %v2493
    %vm2500 = vweird.f32 %v2494
    %vm2501 = vmor %vm2499, %vm2500
    %v2502 = vsel %vm2501, %v2494, %v2498
    %v2503 = vand.u32 2147483647, %v2493
    %vm2504 = vcmp.eq.f32.partialorder %v2503, 8.507059e+37
    %v2505 = vand.u32 %v2493, 2147483648
    %v2506 = vor.u32 1.1754944e-38, %v2505
    %v2507 = vsel %vm2504, %v2506, %v2502
    %v2508 = vmul.f32 1.0, %v2507
    %v2509 = vtanh.pop %v2489
    %v2510 = vmul.f32 %v2508, %v2390
    %2512 = vrot.lane.b32.xlu0 %v2509, 64
    %v2513 = vpop.permute.xlu0 %2512
    %v2515 = vmul.f32 %v2508, %v2513
    %2517 = vrot.lane.b32.xlu0 %v2515, 32
    %v2518 = vpop.permute.xlu0 %2517
    %v2520 = vadd.f32 %v2510, %v2518
    %v2521 = vtanh.pop %v2520
    %2523 = vrot.lane.b32.xlu0 %v2521, 64
    %v2524 = vpop.permute.xlu0 %2523
    %v2526 = vmul.f32 %v2508, %v2524
    %v2527 = vadd.f32 %v2526, %v1104
    %2529 = vrot.lane.b32.xlu0 %v2527, 32
    %v2530 = vpop.permute.xlu0 %2529
    %2532 = vst.msk [vmem:[%s1991 + $0x2] sm:$0x3] %vm583, %v2530
    %2534 = vrot.lane.b32.xlu0 %v2461, 32
    %v2535 = vpop.permute.xlu0 %2534
    %v2536 = vsel %vm110, %v2535, 0
    %2538 = vmatpush.msra.mxu0 0.0
    %2539 = vmatpush.msra.mxu0 0.0
    %2540 = vmatpush.msra.mxu0 0.0
    %2541 = vmatpush.msra.mxu0 0.0
    %2542 = vmatpush.msra.mxu0 0.0
    %2543 = vmatpush.msra.mxu0 0.0
    %2544 = vmatpush.msra.mxu0 0.0
    %2545 = vmatpush.msra.mxu0 0.0
    %2546 = vmatpush.msra.mxu0 0.0
    %2547 = vmatpush.msra.mxu0 0.0
    %2548 = vmatpush.msra.mxu0 0.0
    %2549 = vmatpush.msra.mxu0 0.0
    %2550 = vmatpush.msra.mxu0 %v1587
    %2551 = vmatpush.msra.mxu0 %v1586
    %2552 = vmatpush.msra.mxu0 %v1585
    %2553 = vmatpush.msra.mxu0 %v1584
    %2554 = vmatmul.f32.gmra.mxu0 %v2536
    %v2555 = vpop.f32.mrf.mxu0
    %v2556 = vadd.f32 0.0, %v2555
    %2557 = vdwg.mxu0
    %v2558 = vadd.f32 %v1861, %v2556
    %v2559 = vxor.u32 %v2558, 2147483648
    %v2560 = vmul.f32 %v2559, 1.442695
    %v2561 = vpow.pop %v2560
    %v2562 = vadd.f32 %v2561, 1.0
    %v2563 = vrcp.pop %v2562
    %v2564 = vmul.f32 %v2562, %v2563
    %v2565 = vsub.f32 1.0, %v2564
    %v2566 = vmul.f32 %v2563, %v2565
    %v2567 = vadd.f32 %v2563, %v2566
    %vm2568 = vweird.f32 %v2562
    %vm2569 = vweird.f32 %v2563
    %vm2570 = vmor %vm2568, %vm2569
    %v2571 = vsel %vm2570, %v2563, %v2567
    %v2572 = vand.u32 2147483647, %v2562
    %vm2573 = vcmp.eq.f32.partialorder %v2572, 8.507059e+37
    %v2574 = vand.u32 %v2562, 2147483648
    %v2575 = vor.u32 1.1754944e-38, %v2574
    %v2576 = vsel %vm2573, %v2575, %v2571
    %v2577 = vmul.f32 1.0, %v2576
    %v2578 = vtanh.pop %v2558
    %v2579 = vmul.f32 %v2577, %v2455
    %2581 = vrot.lane.b32.xlu0 %v2578, 64
    %v2582 = vpop.permute.xlu0 %2581
    %v2584 = vmul.f32 %v2577, %v2582
    %2586 = vrot.lane.b32.xlu0 %v2584, 32
    %v2587 = vpop.permute.xlu0 %2586
    %v2589 = vadd.f32 %v2579, %v2587
    %v2590 = vtanh.pop %v2589
    %2592 = vrot.lane.b32.xlu0 %v2590, 64
    %v2593 = vpop.permute.xlu0 %2592
    %v2595 = vmul.f32 %v2577, %v2593
    %v2596 = vadd.f32 %v2595, %v1172
    %2598 = vrot.lane.b32.xlu0 %v2596, 32
    %v2599 = vpop.permute.xlu0 %2598
    %2601 = vst.msk [vmem:[%s2056 + $0x2] sm:$0x3] %vm583, %v2599
    %2603 = vrot.lane.b32.xlu0 %v2526, 32
    %v2604 = vpop.permute.xlu0 %2603
    %v2605 = vsel %vm110, %v2604, 0
    %2607 = vmatpush.msra.mxu0 0.0
    %2608 = vmatpush.msra.mxu0 0.0
    %2609 = vmatpush.msra.mxu0 0.0
    %2610 = vmatpush.msra.mxu0 0.0
    %2611 = vmatpush.msra.mxu0 0.0
    %2612 = vmatpush.msra.mxu0 0.0
    %2613 = vmatpush.msra.mxu0 0.0
    %2614 = vmatpush.msra.mxu0 0.0
    %2615 = vmatpush.msra.mxu0 0.0
    %2616 = vmatpush.msra.mxu0 0.0
    %2617 = vmatpush.msra.mxu0 0.0
    %2618 = vmatpush.msra.mxu0 0.0
    %2619 = vmatpush.msra.mxu0 %v1582
    %2620 = vmatpush.msra.mxu0 %v1581
    %2621 = vmatpush.msra.mxu0 %v1580
    %2622 = vmatpush.msra.mxu0 %v1579
    %2623 = vmatmul.f32.gmra.mxu0 %v2605
    %v2624 = vpop.f32.mrf.mxu0
    %v2625 = vadd.f32 0.0, %v2624
    %2626 = vdwg.mxu0
    %v2627 = vadd.f32 %v1713, %v2625
    %v2628 = vxor.u32 %v2627, 2147483648
    %v2629 = vmul.f32 %v2628, 1.442695
    %v2630 = vpow.pop %v2629
    %v2631 = vadd.f32 %v2630, 1.0
    %v2632 = vrcp.pop %v2631
    %v2633 = vmul.f32 %v2631, %v2632
    %v2634 = vsub.f32 1.0, %v2633
    %v2635 = vmul.f32 %v2632, %v2634
    %v2636 = vadd.f32 %v2632, %v2635
    %vm2637 = vweird.f32 %v2631
    %vm2638 = vweird.f32 %v2632
    %vm2639 = vmor %vm2637, %vm2638
    %v2640 = vsel %vm2639, %v2632, %v2636
    %v2641 = vand.u32 2147483647, %v2631
    %vm2642 = vcmp.eq.f32.partialorder %v2641, 8.507059e+37
    %v2643 = vand.u32 %v2631, 2147483648
    %v2644 = vor.u32 1.1754944e-38, %v2643
    %v2645 = vsel %vm2642, %v2644, %v2640
    %v2646 = vmul.f32 1.0, %v2645
    %v2647 = vtanh.pop %v2627
    %v2648 = vmul.f32 %v2646, %v2520
    %2650 = vrot.lane.b32.xlu0 %v2647, 64
    %v2651 = vpop.permute.xlu0 %2650
    %v2653 = vmul.f32 %v2646, %v2651
    %2655 = vrot.lane.b32.xlu0 %v2653, 32
    %v2656 = vpop.permute.xlu0 %2655
    %v2658 = vadd.f32 %v2648, %v2656
    %v2659 = vtanh.pop %v2658
    %2661 = vrot.lane.b32.xlu0 %v2659, 64
    %v2662 = vpop.permute.xlu0 %2661
    %v2664 = vmul.f32 %v2646, %v2662
    %v2665 = vadd.f32 %v2664, %v1237
    %2667 = vrot.lane.b32.xlu0 %v2665, 64
    %v2668 = vpop.permute.xlu0 %2667
    %2670 = vst.msk [vmem:[%s1991 + $0x2] sm:$0x3] %vm713, %v2668
    %2672 = vrot.lane.b32.xlu0 %v2595, 32
    %v2673 = vpop.permute.xlu0 %2672
    %v2674 = vsel %vm110, %v2673, 0
    %2676 = vmatpush.msra.mxu0 0.0
    %2677 = vmatpush.msra.mxu0 0.0
    %2678 = vmatpush.msra.mxu0 0.0
    %2679 = vmatpush.msra.mxu0 0.0
    %2680 = vmatpush.msra.mxu0 0.0
    %2681 = vmatpush.msra.mxu0 0.0
    %2682 = vmatpush.msra.mxu0 0.0
    %2683 = vmatpush.msra.mxu0 0.0
    %2684 = vmatpush.msra.mxu0 0.0
    %2685 = vmatpush.msra.mxu0 0.0
    %2686 = vmatpush.msra.mxu0 0.0
    %2687 = vmatpush.msra.mxu0 0.0
    %2688 = vmatpush.msra.mxu0 %v1587
    %2689 = vmatpush.msra.mxu0 %v1586
    %2690 = vmatpush.msra.mxu0 %v1585
    %2691 = vmatpush.msra.mxu0 %v1584
    %2692 = vmatmul.f32.gmra.mxu0 %v2674
    %v2693 = vpop.f32.mrf.mxu0
    %v2694 = vadd.f32 0.0, %v2693
    %2695 = vdwg.mxu0
    %v2696 = vadd.f32 %v1881, %v2694
    %v2697 = vxor.u32 %v2696, 2147483648
    %v2698 = vmul.f32 %v2697, 1.442695
    %v2699 = vpow.pop %v2698
    %v2700 = vadd.f32 %v2699, 1.0
    %v2701 = vrcp.pop %v2700
    %v2702 = vmul.f32 %v2700, %v2701
    %v2703 = vsub.f32 1.0, %v2702
    %v2704 = vmul.f32 %v2701, %v2703
    %v2705 = vadd.f32 %v2701, %v2704
    %vm2706 = vweird.f32 %v2700
    %vm2707 = vweird.f32 %v2701
    %vm2708 = vmor %vm2706, %vm2707
    %v2709 = vsel %vm2708, %v2701, %v2705
    %v2710 = vand.u32 2147483647, %v2700
    %vm2711 = vcmp.eq.f32.partialorder %v2710, 8.507059e+37
    %v2712 = vand.u32 %v2700, 2147483648
    %v2713 = vor.u32 1.1754944e-38, %v2712
    %v2714 = vsel %vm2711, %v2713, %v2709
    %v2715 = vmul.f32 1.0, %v2714
    %v2716 = vtanh.pop %v2696
    %v2717 = vmul.f32 %v2715, %v2589
    %2719 = vrot.lane.b32.xlu0 %v2716, 64
    %v2720 = vpop.permute.xlu0 %2719
    %v2722 = vmul.f32 %v2715, %v2720
    %2724 = vrot.lane.b32.xlu0 %v2722, 32
    %v2725 = vpop.permute.xlu0 %2724
    %v2727 = vadd.f32 %v2717, %v2725
    %v2728 = vtanh.pop %v2727
    %2730 = vrot.lane.b32.xlu0 %v2728, 64
    %v2731 = vpop.permute.xlu0 %2730
    %v2733 = vmul.f32 %v2715, %v2731
    %v2734 = vadd.f32 %v2733, %v1302
    %2736 = vrot.lane.b32.xlu0 %v2734, 64
    %v2737 = vpop.permute.xlu0 %2736
    %2739 = vst.msk [vmem:[%s2056 + $0x2] sm:$0x3] %vm713, %v2737
    %2741 = vrot.lane.b32.xlu0 %v2664, 32
    %v2742 = vpop.permute.xlu0 %2741
    %v2743 = vsel %vm110, %v2742, 0
    %2745 = vmatpush.msra.mxu0 0.0
    %2746 = vmatpush.msra.mxu0 0.0
    %2747 = vmatpush.msra.mxu0 0.0
    %2748 = vmatpush.msra.mxu0 0.0
    %2749 = vmatpush.msra.mxu0 0.0
    %2750 = vmatpush.msra.mxu0 0.0
    %2751 = vmatpush.msra.mxu0 0.0
    %2752 = vmatpush.msra.mxu0 0.0
    %2753 = vmatpush.msra.mxu0 0.0
    %2754 = vmatpush.msra.mxu0 0.0
    %2755 = vmatpush.msra.mxu0 0.0
    %2756 = vmatpush.msra.mxu0 0.0
    %2757 = vmatpush.msra.mxu0 %v1582
    %2758 = vmatpush.msra.mxu0 %v1581
    %2759 = vmatpush.msra.mxu0 %v1580
    %2760 = vmatpush.msra.mxu0 %v1579
    %2761 = vmatmul.f32.gmra.mxu0 %v2743
    %v2762 = vpop.f32.mrf.mxu0
    %v2763 = vadd.f32 0.0, %v2762
    %2764 = vdwg.mxu0
    %v2765 = vadd.f32 %v1733, %v2763
    %v2766 = vxor.u32 %v2765, 2147483648
    %v2767 = vmul.f32 %v2766, 1.442695
    %v2768 = vpow.pop %v2767
    %v2769 = vadd.f32 %v2768, 1.0
    %v2770 = vrcp.pop %v2769
    %v2771 = vmul.f32 %v2769, %v2770
    %v2772 = vsub.f32 1.0, %v2771
    %v2773 = vmul.f32 %v2770, %v2772
    %v2774 = vadd.f32 %v2770, %v2773
    %vm2775 = vweird.f32 %v2769
    %vm2776 = vweird.f32 %v2770
    %vm2777 = vmor %vm2775, %vm2776
    %v2778 = vsel %vm2777, %v2770, %v2774
    %v2779 = vand.u32 2147483647, %v2769
    %vm2780 = vcmp.eq.f32.partialorder %v2779, 8.507059e+37
    %v2781 = vand.u32 %v2769, 2147483648
    %v2782 = vor.u32 1.1754944e-38, %v2781
    %v2783 = vsel %vm2780, %v2782, %v2778
    %v2784 = vmul.f32 1.0, %v2783
    %v2785 = vtanh.pop %v2765
    %v2786 = vmul.f32 %v2784, %v2658
    %2788 = vrot.lane.b32.xlu0 %v2785, 64
    %v2789 = vpop.permute.xlu0 %2788
    %v2791 = vmul.f32 %v2784, %v2789
    %2793 = vrot.lane.b32.xlu0 %v2791, 32
    %v2794 = vpop.permute.xlu0 %2793
    %v2796 = vadd.f32 %v2786, %v2794
    %v2797 = vtanh.pop %v2796
    %2799 = vrot.lane.b32.xlu0 %v2797, 64
    %v2800 = vpop.permute.xlu0 %2799
    %v2802 = vmul.f32 %v2784, %v2800
    %v2803 = vadd.f32 %v2802, %v1369
    %2805 = vrot.lane.b32.xlu0 %v2803, 96
    %v2806 = vpop.permute.xlu0 %2805
    %2808 = vst.msk [vmem:[%s1991 + $0x2] sm:$0x3] %vm846, %v2806
    %2810 = vrot.lane.b32.xlu0 %v2733, 32
    %v2811 = vpop.permute.xlu0 %2810
    %v2812 = vsel %vm110, %v2811, 0
    %2814 = vmatpush.msra.mxu0 0.0
    %2815 = vmatpush.msra.mxu0 0.0
    %2816 = vmatpush.msra.mxu0 0.0
    %2817 = vmatpush.msra.mxu0 0.0
    %2818 = vmatpush.msra.mxu0 0.0
    %2819 = vmatpush.msra.mxu0 0.0
    %2820 = vmatpush.msra.mxu0 0.0
    %2821 = vmatpush.msra.mxu0 0.0
    %2822 = vmatpush.msra.mxu0 0.0
    %2823 = vmatpush.msra.mxu0 0.0
    %2824 = vmatpush.msra.mxu0 0.0
    %2825 = vmatpush.msra.mxu0 0.0
    %2826 = vmatpush.msra.mxu0 %v1587
    %2827 = vmatpush.msra.mxu0 %v1586
    %2828 = vmatpush.msra.mxu0 %v1585
    %2829 = vmatpush.msra.mxu0 %v1584
    %2830 = vmatmul.f32.gmra.mxu0 %v2812
    %v2831 = vpop.f32.mrf.mxu0
    %v2832 = vadd.f32 0.0, %v2831
    %2833 = vdwg.mxu0
    %v2834 = vadd.f32 %v1901, %v2832
    %v2835 = vxor.u32 %v2834, 2147483648
    %v2836 = vmul.f32 %v2835, 1.442695
    %v2837 = vpow.pop %v2836
    %v2838 = vadd.f32 %v2837, 1.0
    %v2839 = vrcp.pop %v2838
    %v2840 = vmul.f32 %v2838, %v2839
    %v2841 = vsub.f32 1.0, %v2840
    %v2842 = vmul.f32 %v2839, %v2841
    %v2843 = vadd.f32 %v2839, %v2842
    %vm2844 = vweird.f32 %v2838
    %vm2845 = vweird.f32 %v2839
    %vm2846 = vmor %vm2844, %vm2845
    %v2847 = vsel %vm2846, %v2839, %v2843
    %v2848 = vand.u32 2147483647, %v2838
    %vm2849 = vcmp.eq.f32.partialorder %v2848, 8.507059e+37
    %v2850 = vand.u32 %v2838, 2147483648
    %v2851 = vor.u32 1.1754944e-38, %v2850
    %v2852 = vsel %vm2849, %v2851, %v2847
    %v2853 = vmul.f32 1.0, %v2852
    %v2854 = vtanh.pop %v2834
    %v2855 = vmul.f32 %v2853, %v2727
    %2857 = vrot.lane.b32.xlu0 %v2854, 64
    %v2858 = vpop.permute.xlu0 %2857
    %v2860 = vmul.f32 %v2853, %v2858
    %2862 = vrot.lane.b32.xlu0 %v2860, 32
    %v2863 = vpop.permute.xlu0 %2862
    %v2865 = vadd.f32 %v2855, %v2863
    %v2866 = vtanh.pop %v2865
    %2868 = vrot.lane.b32.xlu0 %v2866, 64
    %v2869 = vpop.permute.xlu0 %2868
    %v2871 = vmul.f32 %v2853, %v2869
    %v2872 = vadd.f32 %v2871, %v1436
    %2874 = vrot.lane.b32.xlu0 %v2872, 96
    %v2875 = vpop.permute.xlu0 %2874
    %2877 = vst.msk [vmem:[%s2056 + $0x2] sm:$0x3] %vm846, %v2875
    %2879 = vrot.lane.b32.xlu0 %v2802, 32
    %v2880 = vpop.permute.xlu0 %2879
    %v2881 = vsel %vm110, %v2880, 0
    %2883 = vmatpush.msra.mxu0 0.0
    %2884 = vmatpush.msra.mxu0 0.0
    %2885 = vmatpush.msra.mxu0 0.0
    %2886 = vmatpush.msra.mxu0 0.0
    %2887 = vmatpush.msra.mxu0 0.0
    %2888 = vmatpush.msra.mxu0 0.0
    %2889 = vmatpush.msra.mxu0 0.0
    %2890 = vmatpush.msra.mxu0 0.0
    %2891 = vmatpush.msra.mxu0 0.0
    %2892 = vmatpush.msra.mxu0 0.0
    %2893 = vmatpush.msra.mxu0 0.0
    %2894 = vmatpush.msra.mxu0 0.0
    %2895 = vmatpush.msra.mxu0 %v1582
    %2896 = vmatpush.msra.mxu0 %v1581
    %2897 = vmatpush.msra.mxu0 %v1580
    %2898 = vmatpush.msra.mxu0 %v1579
    %2899 = vmatmul.f32.gmra.mxu0 %v2881
    %v2900 = vpop.f32.mrf.mxu0
    %v2901 = vadd.f32 0.0, %v2900
    %2902 = vdwg.mxu0
    %v2903 = vadd.f32 %v1758, %v2901
    %v2904 = vxor.u32 %v2903, 2147483648
    %v2905 = vmul.f32 %v2904, 1.442695
    %v2906 = vpow.pop %v2905
    %v2907 = vadd.f32 %v2906, 1.0
    %v2908 = vrcp.pop %v2907
    %v2909 = vmul.f32 %v2907, %v2908
    %v2910 = vsub.f32 1.0, %v2909
    %v2911 = vmul.f32 %v2908, %v2910
    %v2912 = vadd.f32 %v2908, %v2911
    %vm2913 = vweird.f32 %v2907
    %vm2914 = vweird.f32 %v2908
    %vm2915 = vmor %vm2913, %vm2914
    %v2916 = vsel %vm2915, %v2908, %v2912
    %v2917 = vand.u32 2147483647, %v2907
    %vm2918 = vcmp.eq.f32.partialorder %v2917, 8.507059e+37
    %v2919 = vand.u32 %v2907, 2147483648
    %v2920 = vor.u32 1.1754944e-38, %v2919
    %v2921 = vsel %vm2918, %v2920, %v2916
    %v2922 = vmul.f32 1.0, %v2921
    %v2923 = vtanh.pop %v2903
    %v2924 = vmul.f32 %v2922, %v2796
    %2926 = vrot.lane.b32.xlu0 %v2923, 64
    %v2927 = vpop.permute.xlu0 %2926
    %v2929 = vmul.f32 %v2922, %v2927
    %2931 = vrot.lane.b32.xlu0 %v2929, 32
    %v2932 = vpop.permute.xlu0 %2931
    %v2934 = vadd.f32 %v2924, %v2932
    %v2935 = vtanh.pop %v2934
    %2937 = vrot.lane.b32.xlu0 %v2935, 64
    %v2938 = vpop.permute.xlu0 %2937
    %v2940 = vmul.f32 %v2922, %v2938
    %v2941 = vadd.f32 %v2940, %v1503
    %2942 = vst.msk [vmem:[%s1991 + $0x2] sm:$0x3] %vm977, %v2941
    %2944 = vrot.lane.b32.xlu0 %v2871, 32
    %v2945 = vpop.permute.xlu0 %2944
    %v2946 = vsel %vm110, %v2945, 0
    %2948 = vmatpush.msra.mxu0 0.0
    %2949 = vmatpush.msra.mxu0 0.0
    %2950 = vmatpush.msra.mxu0 0.0
    %2951 = vmatpush.msra.mxu0 0.0
    %2952 = vmatpush.msra.mxu0 0.0
    %2953 = vmatpush.msra.mxu0 0.0
    %2954 = vmatpush.msra.mxu0 0.0
    %2955 = vmatpush.msra.mxu0 0.0
    %2956 = vmatpush.msra.mxu0 0.0
    %2957 = vmatpush.msra.mxu0 0.0
    %2958 = vmatpush.msra.mxu0 0.0
    %2959 = vmatpush.msra.mxu0 0.0
    %2960 = vmatpush.msra.mxu0 %v1587
    %2961 = vmatpush.msra.mxu0 %v1586
    %2962 = vmatpush.msra.mxu0 %v1585
    %2963 = vmatpush.msra.mxu0 %v1584
    %2964 = vmatmul.f32.gmra.mxu0 %v2946
    %v2965 = vpop.f32.mrf.mxu0
    %v2966 = vadd.f32 0.0, %v2965
    %2967 = vdwg.mxu0
    %v2968 = vadd.f32 %v1926, %v2966
    %v2969 = vxor.u32 %v2968, 2147483648
    %v2970 = vmul.f32 %v2969, 1.442695
    %v2971 = vpow.pop %v2970
    %v2972 = vadd.f32 %v2971, 1.0
    %v2973 = vrcp.pop %v2972
    %v2974 = vmul.f32 %v2972, %v2973
    %v2975 = vsub.f32 1.0, %v2974
    %v2976 = vmul.f32 %v2973, %v2975
    %v2977 = vadd.f32 %v2973, %v2976
    %vm2978 = vweird.f32 %v2972
    %vm2979 = vweird.f32 %v2973
    %vm2980 = vmor %vm2978, %vm2979
    %v2981 = vsel %vm2980, %v2973, %v2977
    %v2982 = vand.u32 2147483647, %v2972
    %vm2983 = vcmp.eq.f32.partialorder %v2982, 8.507059e+37
    %v2984 = vand.u32 %v2972, 2147483648
    %v2985 = vor.u32 1.1754944e-38, %v2984
    %v2986 = vsel %vm2983, %v2985, %v2981
    %v2987 = vmul.f32 1.0, %v2986
    %v2988 = vtanh.pop %v2968
    %v2989 = vmul.f32 %v2987, %v2865
    %2991 = vrot.lane.b32.xlu0 %v2988, 64
    %v2992 = vpop.permute.xlu0 %2991
    %v2994 = vmul.f32 %v2987, %v2992
    %2996 = vrot.lane.b32.xlu0 %v2994, 32
    %v2997 = vpop.permute.xlu0 %2996
    %v2999 = vadd.f32 %v2989, %v2997
    %v3000 = vtanh.pop %v2999
    %3002 = vrot.lane.b32.xlu0 %v3000, 64
    %v3003 = vpop.permute.xlu0 %3002
    %v3005 = vmul.f32 %v2987, %v3003
    %v3006 = vadd.f32 %v3005, %v1566
    %3007 = vst.msk [vmem:[%s2056 + $0x2] sm:$0x3] %vm977, %v3006
    // Predicated region
    $region34: #{tpu_custom_call.1} parent=1 // pred_check
      _
    $region35: #{tpu_custom_call.1} parent=1 // pred_check_branch
      %3009 = sbr.rel (0) target = $region37
    $region36: #{tpu_custom_call.1} parent=1 // pred_region
      %3011 = vsyncadd [#allocation4], 0
      %s3012 = sshll.u32 [#allocation10], 4
      %s3013 = int_to_ptr.vmem [resolvable:$true] %s3012
      %s3014 = sshll.u32 %s4, 4
      %s3015 = int_to_ptr.hbm [resolvable:$true] %s3014
      %3020 = dma.vmem_to_hbm [thread:$0]  %s3013, 256, %s3015, [#allocation4], 64, 64, 4
    $region37: #{tpu_custom_call.1} parent=1 // pred_fallthru
      _
    // Predicated region
    $region38: #{tpu_custom_call.1} parent=1 // pred_check
      _
    $region39: #{tpu_custom_call.1} parent=1 // pred_check_branch
      %3022 = sbr.rel (0) target = $region41
    $region40: #{tpu_custom_call.1} parent=1 // pred_region
      %3024 = dma.done [#allocation4], 256
    $region41: #{tpu_custom_call.1} parent=1 // pred_fallthru
      _
    %3025 = vsyncpa [#allocation3], 1
    %3026 = vsyncpa [#allocation6], 1
    %3027 = vsyncpa [#allocation9], 1
    %3028 = vsyncpa [#allocation4], 1

</llo_original>
